<compile_context>
chip_gen: v6e
topology: v6e:2x2x1
jax: 0.10.0
libtpu: 0.0.40
codegen_flags: <defaults>
</compile_context>

<pallas_src>
import functools

import jax
import jax.numpy as jnp
from jax.experimental import pallas as pl
from jax.experimental.pallas import tpu as pltpu

EPS = 1e-6  # ConvNeXt uses LayerNorm eps=1e-6


def _full_spec(shape):
    nd = len(shape)
    return pl.BlockSpec(shape, lambda *_: (0,) * nd)


def _layernorm(x, g, b):
    mu = jnp.mean(x, axis=-1, keepdims=True)
    var = jnp.mean((x - mu) ** 2, axis=-1, keepdims=True)
    return (x - mu) * jax.lax.rsqrt(var + EPS) * g + b


def _row_tile(r, max_rows=256):
    """Largest multiple-of-8 divisor of r that is <= max_rows (else r)."""
    if r % 8 != 0:
        return r
    best = 8
    t = 8
    while t <= min(r, max_rows):
        if r % t == 0:
            best = t
        t += 8
    return best


# ---------------------------------------------------------------------------
# Kernels
# ---------------------------------------------------------------------------
def stem_kernel(p_ref, w_ref, b_ref, g_ref, beta_ref, o_ref):
    """Patchify conv as matmul (rows = N*Ho*Wo tile, K = 4*4*Cin) + bias + LayerNorm."""
    y = jnp.dot(p_ref[...].astype(jnp.bfloat16), w_ref[...],
                preferred_element_type=jnp.float32) + b_ref[...]
    o_ref[...] = _layernorm(y, g_ref[...], beta_ref[...])


def convnext_block_kernel(x_ref, dww_ref, dwb_ref, g_ref, b_ref,
                          w1_ref, b1_ref, w2_ref, b2_ref, gamma_ref,
                          o_ref, xpad_ref):
    """Fused ConvNeXt block for one batch element (all intermediates stay in VMEM).

    dwconv7x7 (zero pad via VMEM scratch) -> LN -> Linear(C,4C) -> GELU
    -> Linear(4C,C) -> layer-scale gamma -> + residual.
    """
    H, W, C = x_ref.shape

    # --- depthwise 7x7 conv; padding realized in a zero-initialized VMEM scratch ---
    xpad_ref[...] = jnp.zeros_like(xpad_ref)
    xpad_ref[pl.ds(3, H), pl.ds(3, W), :] = x_ref[...]
    acc = jnp.zeros((H, W, C), jnp.float32)
    for kh in range(7):
        for kw in range(7):
            w_tap = dww_ref[pl.ds(kh * 7 + kw, 1), :]            # (1, C)
            acc = acc + xpad_ref[pl.ds(kh, H), pl.ds(kw, W), :] * w_tap
    dw = acc + dwb_ref[...]                                       # (H, W, C)

    # --- LN -> MLP -> layer scale -> residual (rows = H*W, lane dim = C) ---
    dwf = dw.reshape(H * W, C)                                    # layout no-op: W % 8 == 0
    y = _layernorm(dwf, g_ref[...], b_ref[...])
    h = jnp.dot(y.astype(jnp.bfloat16), w1_ref[...],
                preferred_element_type=jnp.float32) + b1_ref[...]
    # TODO(synk): PyTorch nn.GELU() is exact erf-GELU; tanh approximation used
    # here for robust Mosaic lowering (~1e-3 difference).
    h = jax.nn.gelu(h, approximate=True)
    y2 = jnp.dot(h.astype(jnp.bfloat16), w2_ref[...],
                 preferred_element_type=jnp.float32) + b2_ref[...]
    o_ref[...] = x_ref[...] + gamma_ref[...] * y2.reshape(H, W, C)


def head_kernel(x_ref, g_ref, b_ref, fw_ref, fb_ref, o_ref):
    """Global average pool over spatial -> LayerNorm -> fc Linear (the new head.fc)."""
    pooled = jnp.mean(x_ref[...], axis=1)                         # (N, C)
    y = _layernorm(pooled, g_ref[...], b_ref[...])
    o_ref[...] = jnp.dot(y, fw_ref[...],
                         preferred_element_type=jnp.float32) + fb_ref[...]


# ---------------------------------------------------------------------------
# Pallas wrappers
# ---------------------------------------------------------------------------
def stem_apply(patches, w, b, g, beta):
    R, K = patches.shape
    C = w.shape[1]
    tr = _row_tile(R)
    return pl.pallas_call(
        stem_kernel,
        out_shape=jax.ShapeDtypeStruct((R, C), jnp.float32),
        grid=(R // tr,),
        in_specs=[pl.BlockSpec((tr, K), lambda i: (i, 0)),
                  pl.BlockSpec((K, C), lambda i: (0, 0)),
                  pl.BlockSpec((1, C), lambda i: (0, 0)),
                  pl.BlockSpec((1, C), lambda i: (0, 0)),
                  pl.BlockSpec((1, C), lambda i: (0, 0))],
        out_specs=pl.BlockSpec((tr, C), lambda i: (i, 0)),
        compiler_params=pltpu.CompilerParams(
            dimension_semantics=("parallel",)),
    )(patches, w.astype(jnp.bfloat16), b, g, beta)


def convnext_block_apply(x, dw_w, dw_b, ln_g, ln_b, w1, b1, w2, b2, gamma,
                         *, vmem_limit_bytes=32 * 1024 * 1024):
    """One fused ConvNeXt block; grid over batch (parallel -> 2-TC shardable).

    VMEM budget per grid step (double-buffered x/out + scratch + (R,4C) hidden)
    is sized against v7x's 64 MiB physical / 32 MiB scoped VMEM; for real
    ConvNeXt stage-0 dims (dim=96, 56x56) this is ~14 MiB and fits.
    """
    N, H, W, C = x.shape
    Hd = w1.shape[1]
    dww = dw_w.reshape(7 * 7, C)  # taps-major (49, C) for per-tap row indexing
    return pl.pallas_call(
        convnext_block_kernel,
        out_shape=jax.ShapeDtypeStruct((N, H, W, C), jnp.float32),
        grid=(N,),
        in_specs=[pl.BlockSpec((None, H, W, C), lambda n: (n, 0, 0, 0)),
                  pl.BlockSpec((49, C), lambda n: (0, 0)),
                  pl.BlockSpec((1, C), lambda n: (0, 0)),
                  pl.BlockSpec((1, C), lambda n: (0, 0)),
                  pl.BlockSpec((1, C), lambda n: (0, 0)),
                  pl.BlockSpec((C, Hd), lambda n: (0, 0)),
                  pl.BlockSpec((1, Hd), lambda n: (0, 0)),
                  pl.BlockSpec((Hd, C), lambda n: (0, 0)),
                  pl.BlockSpec((1, C), lambda n: (0, 0)),
                  pl.BlockSpec((1, C), lambda n: (0, 0))],
        out_specs=pl.BlockSpec((None, H, W, C), lambda n: (n, 0, 0, 0)),
        scratch_shapes=[pltpu.VMEM((H + 6, W + 6, C), jnp.float32)],
        input_output_aliases={0: 0},  # residual write reuses the input HBM buffer
        compiler_params=pltpu.CompilerParams(
            dimension_semantics=("parallel",),
            vmem_limit_bytes=vmem_limit_bytes),
    )(x, dww, dw_b, ln_g, ln_b,
      w1.astype(jnp.bfloat16), b1, w2.astype(jnp.bfloat16), b2, gamma)


def head_apply(x, ln_g, ln_b, fc_w, fc_b):
    # Tiny tensors (N x C and C x num_classes); a single full block is fine.
    N, S, C = x.shape
    K = fc_w.shape[1]
    return pl.pallas_call(
        head_kernel,
        out_shape=jax.ShapeDtypeStruct((N, K), jnp.float32),
        grid=(1,),
        in_specs=[_full_spec((N, S, C)), _full_spec((1, C)), _full_spec((1, C)),
                  _full_spec((C, K)), _full_spec((1, K))],
        out_specs=_full_spec((N, K)),
    )(x, ln_g, ln_b, fc_w, fc_b)


# ---------------------------------------------------------------------------
# Model: parameters + forward
# ---------------------------------------------------------------------------
def init_params(key, *, in_ch=3, dim=128, hidden=512, depth=2,
                num_classes=10, patch=4):
    keys = jax.random.split(key, 4 + 4 * depth)
    it = iter(keys)
    scale = 0.02
    # NOTE: stem_w rows are flattened in (ph, pw, Cin) order; real PyTorch
    # Conv2d weights (Cout, Cin, kh, kw) must be permuted to match.
    p = {
        "stem_w": scale * jax.random.normal(next(it), (patch * patch * in_ch, dim), jnp.float32),
        "stem_b": jnp.zeros((1, dim), jnp.float32),
        "stem_ln_g": jnp.ones((1, dim), jnp.float32),
        "stem_ln_b": jnp.zeros((1, dim), jnp.float32),
        "blocks": [],
        "head_ln_g": jnp.ones((1, dim), jnp.float32),
        "head_ln_b": jnp.zeros((1, dim), jnp.float32),
        "fc_w": scale * jax.random.normal(next(it), (dim, num_classes), jnp.float32),
        "fc_b": jnp.zeros((1, num_classes), jnp.float32),
    }
    for _ in range(depth):
        blk = {
            "dw_w": scale * jax.random.normal(next(it), (7, 7, dim), jnp.float32),
            "dw_b": jnp.zeros((1, dim), jnp.float32),
            "ln_g": jnp.ones((1, dim), jnp.float32),
            "ln_b": jnp.zeros((1, dim), jnp.float32),
            "w1": scale * jax.random.normal(next(it), (dim, hidden), jnp.float32),
            "b1": jnp.zeros((1, hidden), jnp.float32),
            "w2": scale * jax.random.normal(next(it), (hidden, dim), jnp.float32),
            "b2": jnp.zeros((1, dim), jnp.float32),
            "gamma": jnp.full((1, dim), 1e-6, jnp.float32),  # ConvNeXt layer-scale init
        }
        p["blocks"].append(blk)
    return p


@functools.partial(jax.jit, static_argnames=("patch",))
def convnext_forward(x_nchw, params, patch=4):
    # NCHW (PyTorch) -> NHWC (kernel layout)
    x = jnp.transpose(x_nchw, (0, 2, 3, 1)).astype(jnp.float32)
    N, H, W, C_in = x.shape
    Ho, Wo = H // patch, W // patch

    # stem: 4x4 stride-4 conv == non-overlapping patchify + matmul, then LN.
    # TODO(synk): patch extraction still materializes one (R, p*p*Cin) copy in
    # HBM; folding it into the stem kernel's index_map would remove that trip.
    patches = (x.reshape(N, Ho, patch, Wo, patch, C_in)
                 .transpose(0, 1, 3, 2, 4, 5)
                 .reshape(N * Ho * Wo, patch * patch * C_in))
    y = stem_apply(patches, params["stem_w"], params["stem_b"],
                   params["stem_ln_g"], params["stem_ln_b"])
    dim = y.shape[-1]
    y = y.reshape(N, Ho, Wo, dim)

    # ConvNeXt blocks: one fused kernel per block (dwconv + LN + MLP + residual).
    for blk in params["blocks"]:
        y = convnext_block_apply(y, blk["dw_w"], blk["dw_b"],
                                 blk["ln_g"], blk["ln_b"],
                                 blk["w1"], blk["b1"],
                                 blk["w2"], blk["b2"], blk["gamma"])

    # head: global pool -> LN -> fc (the nn.Linear that Convnext.__init__ swaps in)
    logits = head_apply(y.reshape(N, Ho * Wo, dim),
                        params["head_ln_g"], params["head_ln_b"],
                        params["fc_w"], params["fc_b"])
    return logits


if __name__ == "__main__":
    key = jax.random.PRNGKey(0)
    k_params, k_x = jax.random.split(key)

    num_classes = 10
    # dim=128 keeps the channel axis lane-dense (full 128-lane vregs, unmasked
    # stores); 32x32 input with patch=4 gives an 8x8 feature map so in-kernel
    # (H, W, C) <-> (H*W, C) reshapes are layout no-ops.
    params = init_params(k_params, in_ch=3, dim=128, hidden=512, depth=2,
                         num_classes=num_classes, patch=4)

    # NCHW input, matching PyTorch conv convention.
    x = jax.random.normal(k_x, (2, 3, 32, 32), jnp.float32)

    logits = convnext_forward(x, params)
    logits = jax.block_until_ready(logits)

    assert logits.shape == (2, num_classes), logits.shape
    assert jnp.all(jnp.isfinite(logits))
    print("KERNEL_OK")
</pallas_src>

<mosaic_0001>
module attributes {stable_mosaic.version = 11 : i64} {
  func.func @stem_kernel(%arg0: i32, %arg1: memref<128x48xf32, #tpu.memory_space<vmem>>, %arg2: memref<48x128xbf16, #tpu.memory_space<vmem>>, %arg3: memref<1x128xf32, #tpu.memory_space<vmem>>, %arg4: memref<1x128xf32, #tpu.memory_space<vmem>>, %arg5: memref<1x128xf32, #tpu.memory_space<vmem>>, %arg6: memref<128x128xf32, #tpu.memory_space<vmem>>) attributes {dimension_semantics = [#tpu.dimension_semantics<parallel>], iteration_bounds = array<i64: 1>, scalar_prefetch = 0 : i64, scratch_operands = 0 : i64, tpu.core_type = #tpu.core_type<tc>, window_params = [{transform_indices = @transform_0, window_bounds = array<i64: 128, 48>}, {pipeline_mode = #tpu.pipeline_mode<synchronous>, transform_indices = @transform_1, window_bounds = array<i64: 48, 128>}, {pipeline_mode = #tpu.pipeline_mode<synchronous>, transform_indices = @transform_2, window_bounds = array<i64: 1, 128>}, {pipeline_mode = #tpu.pipeline_mode<synchronous>, transform_indices = @transform_3, window_bounds = array<i64: 1, 128>}, {pipeline_mode = #tpu.pipeline_mode<synchronous>, transform_indices = @transform_4, window_bounds = array<i64: 1, 128>}, {transform_indices = @transform_5, window_bounds = array<i64: 128, 128>}]} {
    %c0 = arith.constant 0 : index
    %c0_0 = arith.constant 0 : index
    %0 = vector.load %arg1[%c0, %c0_0] : memref<128x48xf32, #tpu.memory_space<vmem>>, vector<128x48xf32>
    %1 = arith.truncf %0 : vector<128x48xf32> to vector<128x48xbf16>
    %c0_1 = arith.constant 0 : index
    %c0_2 = arith.constant 0 : index
    %2 = vector.load %arg2[%c0_1, %c0_2] : memref<48x128xbf16, #tpu.memory_space<vmem>>, vector<48x128xbf16>
    %cst = arith.constant dense<0.000000e+00> : vector<128x128xf32>
    %3 = tpu.matmul %1, %2, %cst {dimension_numbers = #tpu.dot_dimension_numbers<[1], [0], [0], [1], [0, 0, 1, 1], [], []>} : vector<128x48xbf16>, vector<48x128xbf16>, vector<128x128xf32> -> vector<128x128xf32>
    %c0_3 = arith.constant 0 : index
    %c0_4 = arith.constant 0 : index
    %4 = vector.load %arg3[%c0_3, %c0_4] : memref<1x128xf32, #tpu.memory_space<vmem>>, vector<1x128xf32>
    %5 = vector.broadcast %4 : vector<1x128xf32> to vector<128x128xf32>
    %6 = arith.addf %3, %5 : vector<128x128xf32>
    %c0_5 = arith.constant 0 : index
    %c0_6 = arith.constant 0 : index
    %7 = vector.load %arg4[%c0_5, %c0_6] : memref<1x128xf32, #tpu.memory_space<vmem>>, vector<1x128xf32>
    %c0_7 = arith.constant 0 : index
    %c0_8 = arith.constant 0 : index
    %8 = vector.load %arg5[%c0_7, %c0_8] : memref<1x128xf32, #tpu.memory_space<vmem>>, vector<1x128xf32>
    %cst_9 = arith.constant dense<0.000000e+00> : vector<128xf32>
    %9 = vector.multi_reduction <add>, %6, %cst_9 [1] : vector<128x128xf32> to vector<128xf32>
    %10 = vector.shape_cast %9 : vector<128xf32> to vector<128x1xf32>
    %cst_10 = arith.constant 1.280000e+02 : f32
    %11 = vector.broadcast %cst_10 : f32 to vector<128x1xf32>
    %12 = arith.divf %10, %11 : vector<128x1xf32>
    %13 = vector.broadcast %12 : vector<128x1xf32> to vector<128x128xf32>
    %14 = arith.subf %6, %13 : vector<128x128xf32>
    %15 = arith.mulf %14, %14 : vector<128x128xf32>
    %cst_11 = arith.constant dense<0.000000e+00> : vector<128xf32>
    %16 = vector.multi_reduction <add>, %15, %cst_11 [1] : vector<128x128xf32> to vector<128xf32>
    %17 = vector.shape_cast %16 : vector<128xf32> to vector<128x1xf32>
    %cst_12 = arith.constant 1.280000e+02 : f32
    %18 = vector.broadcast %cst_12 : f32 to vector<128x1xf32>
    %19 = arith.divf %17, %18 : vector<128x1xf32>
    %20 = vector.broadcast %12 : vector<128x1xf32> to vector<128x128xf32>
    %21 = arith.subf %6, %20 : vector<128x128xf32>
    %cst_13 = arith.constant 9.99999997E-7 : f32
    %22 = vector.broadcast %cst_13 : f32 to vector<128x1xf32>
    %23 = arith.addf %19, %22 : vector<128x1xf32>
    %24 = math.rsqrt %23 : vector<128x1xf32>
    %25 = vector.broadcast %24 : vector<128x1xf32> to vector<128x128xf32>
    %26 = arith.mulf %21, %25 : vector<128x128xf32>
    %27 = vector.broadcast %7 : vector<1x128xf32> to vector<128x128xf32>
    %28 = arith.mulf %26, %27 : vector<128x128xf32>
    %29 = vector.broadcast %8 : vector<1x128xf32> to vector<128x128xf32>
    %30 = arith.addf %28, %29 : vector<128x128xf32>
    %c0_14 = arith.constant 0 : index
    %c0_15 = arith.constant 0 : index
    %31 = vector.load %arg6[%c0_14, %c0_15] : memref<128x128xf32, #tpu.memory_space<vmem>>, vector<128x128xf32>
    tpu.vector_store %arg6[%c0_14, %c0_15], %30 {strides = array<i32>} : memref<128x128xf32, #tpu.memory_space<vmem>>, vector<128x128xf32>,
    return
  }
  func.func @transform_0(%arg0: i32) -> (i32, i32) {
    %c0_i32 = arith.constant 0 : i32
    %c0_i32_0 = arith.constant 0 : i32
    return %arg0, %c0_i32 : i32, i32
  }
  func.func @transform_1(%arg0: i32) -> (i32, i32) {
    %c0_i32 = arith.constant 0 : i32
    %c0_i32_0 = arith.constant 0 : i32
    %c0_i32_1 = arith.constant 0 : i32
    return %c0_i32, %c0_i32_0 : i32, i32
  }
  func.func @transform_2(%arg0: i32) -> (i32, i32) {
    %c0_i32 = arith.constant 0 : i32
    %c0_i32_0 = arith.constant 0 : i32
    %c0_i32_1 = arith.constant 0 : i32
    return %c0_i32, %c0_i32_0 : i32, i32
  }
  func.func @transform_3(%arg0: i32) -> (i32, i32) {
    %c0_i32 = arith.constant 0 : i32
    %c0_i32_0 = arith.constant 0 : i32
    %c0_i32_1 = arith.constant 0 : i32
    return %c0_i32, %c0_i32_0 : i32, i32
  }
  func.func @transform_4(%arg0: i32) -> (i32, i32) {
    %c0_i32 = arith.constant 0 : i32
    %c0_i32_0 = arith.constant 0 : i32
    %c0_i32_1 = arith.constant 0 : i32
    return %c0_i32, %c0_i32_0 : i32, i32
  }
  func.func @transform_5(%arg0: i32) -> (i32, i32) {
    %c0_i32 = arith.constant 0 : i32
    %c0_i32_0 = arith.constant 0 : i32
    return %arg0, %c0_i32 : i32, i32
  }
}

module attributes {stable_mosaic.version = 11 : i64} {
  func.func @convnext_block_kernel(%arg0: i32, %arg1: memref<1x8x8x128xf32, #tpu.memory_space<vmem>>, %arg2: memref<49x128xf32, #tpu.memory_space<vmem>>, %arg3: memref<1x128xf32, #tpu.memory_space<vmem>>, %arg4: memref<1x128xf32, #tpu.memory_space<vmem>>, %arg5: memref<1x128xf32, #tpu.memory_space<vmem>>, %arg6: memref<128x512xbf16, #tpu.memory_space<vmem>>, %arg7: memref<1x512xf32, #tpu.memory_space<vmem>>, %arg8: memref<512x128xbf16, #tpu.memory_space<vmem>>, %arg9: memref<1x128xf32, #tpu.memory_space<vmem>>, %arg10: memref<1x128xf32, #tpu.memory_space<vmem>>, %arg11: memref<1x8x8x128xf32, #tpu.memory_space<vmem>>, %arg12: memref<14x14x128xf32, #tpu.memory_space<vmem>>) attributes {dimension_semantics = [#tpu.dimension_semantics<parallel>], iteration_bounds = array<i64: 2>, scalar_prefetch = 0 : i64, scratch_operands = 1 : i64, tpu.core_type = #tpu.core_type<tc>, window_params = [{transform_indices = @transform_0, window_bounds = array<i64: 1, 8, 8, 128>}, {pipeline_mode = #tpu.pipeline_mode<synchronous>, transform_indices = @transform_1, window_bounds = array<i64: 49, 128>}, {pipeline_mode = #tpu.pipeline_mode<synchronous>, transform_indices = @transform_2, window_bounds = array<i64: 1, 128>}, {pipeline_mode = #tpu.pipeline_mode<synchronous>, transform_indices = @transform_3, window_bounds = array<i64: 1, 128>}, {pipeline_mode = #tpu.pipeline_mode<synchronous>, transform_indices = @transform_4, window_bounds = array<i64: 1, 128>}, {pipeline_mode = #tpu.pipeline_mode<synchronous>, transform_indices = @transform_5, window_bounds = array<i64: 128, 512>}, {pipeline_mode = #tpu.pipeline_mode<synchronous>, transform_indices = @transform_6, window_bounds = array<i64: 1, 512>}, {pipeline_mode = #tpu.pipeline_mode<synchronous>, transform_indices = @transform_7, window_bounds = array<i64: 512, 128>}, {pipeline_mode = #tpu.pipeline_mode<synchronous>, transform_indices = @transform_8, window_bounds = array<i64: 1, 128>}, {pipeline_mode = #tpu.pipeline_mode<synchronous>, transform_indices = @transform_9, window_bounds = array<i64: 1, 128>}, {transform_indices = @transform_10, window_bounds = array<i64: 1, 8, 8, 128>}]} {
    %cst = arith.constant 0.000000e+00 : f32
    %0 = vector.broadcast %cst : f32 to vector<14x14x128xf32>
    %c0 = arith.constant 0 : index
    %c0_0 = arith.constant 0 : index
    %c0_1 = arith.constant 0 : index
    %1 = vector.load %arg12[%c0, %c0_0, %c0_1] : memref<14x14x128xf32, #tpu.memory_space<vmem>>, vector<14x14x128xf32>
    tpu.vector_store %arg12[%c0, %c0_0, %c0_1], %0 {strides = array<i32>} : memref<14x14x128xf32, #tpu.memory_space<vmem>>, vector<14x14x128xf32>,
    %c0_2 = arith.constant 0 : index
    %c0_3 = arith.constant 0 : index
    %c0_4 = arith.constant 0 : index
    %c0_5 = arith.constant 0 : index
    %2 = vector.load %arg1[%c0_2, %c0_3, %c0_4, %c0_5] : memref<1x8x8x128xf32, #tpu.memory_space<vmem>>, vector<1x8x8x128xf32>
    %3 = vector.shape_cast %2 : vector<1x8x8x128xf32> to vector<8x8x128xf32>
    %c3 = arith.constant 3 : index
    %c3_6 = arith.constant 3 : index
    %c0_7 = arith.constant 0 : index
    %4 = vector.load %arg12[%c3, %c3_6, %c0_7] : memref<14x14x128xf32, #tpu.memory_space<vmem>>, vector<8x8x128xf32>
    tpu.vector_store %arg12[%c3, %c3_6, %c0_7], %3 {strides = array<i32>} : memref<14x14x128xf32, #tpu.memory_space<vmem>>, vector<8x8x128xf32>,
    %cst_8 = arith.constant 0.000000e+00 : f32
    %5 = vector.broadcast %cst_8 : f32 to vector<8x8x128xf32>
    %c0_9 = arith.constant 0 : index
    %c0_10 = arith.constant 0 : index
    %6 = vector.load %arg2[%c0_9, %c0_10] : memref<49x128xf32, #tpu.memory_space<vmem>>, vector<1x128xf32>
    %c0_11 = arith.constant 0 : index
    %c0_12 = arith.constant 0 : index
    %c0_13 = arith.constant 0 : index
    %7 = vector.load %arg12[%c0_11, %c0_12, %c0_13] : memref<14x14x128xf32, #tpu.memory_space<vmem>>, vector<8x8x128xf32>
    %8 = vector.shape_cast %6 : vector<1x128xf32> to vector<1x1x128xf32>
    %9 = vector.broadcast %8 : vector<1x1x128xf32> to vector<8x8x128xf32>
    %10 = arith.mulf %7, %9 : vector<8x8x128xf32>
    %11 = arith.addf %5, %10 : vector<8x8x128xf32>
    %c1 = arith.constant 1 : index
    %c0_14 = arith.constant 0 : index
    %12 = vector.load %arg2[%c1, %c0_14] : memref<49x128xf32, #tpu.memory_space<vmem>>, vector<1x128xf32>
    %c0_15 = arith.constant 0 : index
    %c1_16 = arith.constant 1 : index
    %c0_17 = arith.constant 0 : index
    %13 = vector.load %arg12[%c0_15, %c1_16, %c0_17] : memref<14x14x128xf32, #tpu.memory_space<vmem>>, vector<8x8x128xf32>
    %14 = vector.shape_cast %12 : vector<1x128xf32> to vector<1x1x128xf32>
    %15 = vector.broadcast %14 : vector<1x1x128xf32> to vector<8x8x128xf32>
    %16 = arith.mulf %13, %15 : vector<8x8x128xf32>
    %17 = arith.addf %11, %16 : vector<8x8x128xf32>
    %c2 = arith.constant 2 : index
    %c0_18 = arith.constant 0 : index
    %18 = vector.load %arg2[%c2, %c0_18] : memref<49x128xf32, #tpu.memory_space<vmem>>, vector<1x128xf32>
    %c0_19 = arith.constant 0 : index
    %c2_20 = arith.constant 2 : index
    %c0_21 = arith.constant 0 : index
    %19 = vector.load %arg12[%c0_19, %c2_20, %c0_21] : memref<14x14x128xf32, #tpu.memory_space<vmem>>, vector<8x8x128xf32>
    %20 = vector.shape_cast %18 : vector<1x128xf32> to vector<1x1x128xf32>
    %21 = vector.broadcast %20 : vector<1x1x128xf32> to vector<8x8x128xf32>
    %22 = arith.mulf %19, %21 : vector<8x8x128xf32>
    %23 = arith.addf %17, %22 : vector<8x8x128xf32>
    %c3_22 = arith.constant 3 : index
    %c0_23 = arith.constant 0 : index
    %24 = vector.load %arg2[%c3_22, %c0_23] : memref<49x128xf32, #tpu.memory_space<vmem>>, vector<1x128xf32>
    %c0_24 = arith.constant 0 : index
    %c3_25 = arith.constant 3 : index
    %c0_26 = arith.constant 0 : index
    %25 = vector.load %arg12[%c0_24, %c3_25, %c0_26] : memref<14x14x128xf32, #tpu.memory_space<vmem>>, vector<8x8x128xf32>
    %26 = vector.shape_cast %24 : vector<1x128xf32> to vector<1x1x128xf32>
    %27 = vector.broadcast %26 : vector<1x1x128xf32> to vector<8x8x128xf32>
    %28 = arith.mulf %25, %27 : vector<8x8x128xf32>
    %29 = arith.addf %23, %28 : vector<8x8x128xf32>
    %c4 = arith.constant 4 : index
    %c0_27 = arith.constant 0 : index
    %30 = vector.load %arg2[%c4, %c0_27] : memref<49x128xf32, #tpu.memory_space<vmem>>, vector<1x128xf32>
    %c0_28 = arith.constant 0 : index
    %c4_29 = arith.constant 4 : index
    %c0_30 = arith.constant 0 : index
    %31 = vector.load %arg12[%c0_28, %c4_29, %c0_30] : memref<14x14x128xf32, #tpu.memory_space<vmem>>, vector<8x8x128xf32>
    %32 = vector.shape_cast %30 : vector<1x128xf32> to vector<1x1x128xf32>
    %33 = vector.broadcast %32 : vector<1x1x128xf32> to vector<8x8x128xf32>
    %34 = arith.mulf %31, %33 : vector<8x8x128xf32>
    %35 = arith.addf %29, %34 : vector<8x8x128xf32>
    %c5 = arith.constant 5 : index
    %c0_31 = arith.constant 0 : index
    %36 = vector.load %arg2[%c5, %c0_31] : memref<49x128xf32, #tpu.memory_space<vmem>>, vector<1x128xf32>
    %c0_32 = arith.constant 0 : index
    %c5_33 = arith.constant 5 : index
    %c0_34 = arith.constant 0 : index
    %37 = vector.load %arg12[%c0_32, %c5_33, %c0_34] : memref<14x14x128xf32, #tpu.memory_space<vmem>>, vector<8x8x128xf32>
    %38 = vector.shape_cast %36 : vector<1x128xf32> to vector<1x1x128xf32>
    %39 = vector.broadcast %38 : vector<1x1x128xf32> to vector<8x8x128xf32>
    %40 = arith.mulf %37, %39 : vector<8x8x128xf32>
    %41 = arith.addf %35, %40 : vector<8x8x128xf32>
    %c6 = arith.constant 6 : index
    %c0_35 = arith.constant 0 : index
    %42 = vector.load %arg2[%c6, %c0_35] : memref<49x128xf32, #tpu.memory_space<vmem>>, vector<1x128xf32>
    %c0_36 = arith.constant 0 : index
    %c6_37 = arith.constant 6 : index
    %c0_38 = arith.constant 0 : index
    %43 = vector.load %arg12[%c0_36, %c6_37, %c0_38] : memref<14x14x128xf32, #tpu.memory_space<vmem>>, vector<8x8x128xf32>
    %44 = vector.shape_cast %42 : vector<1x128xf32> to vector<1x1x128xf32>
    %45 = vector.broadcast %44 : vector<1x1x128xf32> to vector<8x8x128xf32>
    %46 = arith.mulf %43, %45 : vector<8x8x128xf32>
    %47 = arith.addf %41, %46 : vector<8x8x128xf32>
    %c7 = arith.constant 7 : index
    %c0_39 = arith.constant 0 : index
    %48 = vector.load %arg2[%c7, %c0_39] : memref<49x128xf32, #tpu.memory_space<vmem>>, vector<1x128xf32>
    %c1_40 = arith.constant 1 : index
    %c0_41 = arith.constant 0 : index
    %c0_42 = arith.constant 0 : index
    %49 = vector.load %arg12[%c1_40, %c0_41, %c0_42] : memref<14x14x128xf32, #tpu.memory_space<vmem>>, vector<8x8x128xf32>
    %50 = vector.shape_cast %48 : vector<1x128xf32> to vector<1x1x128xf32>
    %51 = vector.broadcast %50 : vector<1x1x128xf32> to vector<8x8x128xf32>
    %52 = arith.mulf %49, %51 : vector<8x8x128xf32>
    %53 = arith.addf %47, %52 : vector<8x8x128xf32>
    %c8 = arith.constant 8 : index
    %c0_43 = arith.constant 0 : index
    %54 = vector.load %arg2[%c8, %c0_43] : memref<49x128xf32, #tpu.memory_space<vmem>>, vector<1x128xf32>
    %c1_44 = arith.constant 1 : index
    %c1_45 = arith.constant 1 : index
    %c0_46 = arith.constant 0 : index
    %55 = vector.load %arg12[%c1_44, %c1_45, %c0_46] : memref<14x14x128xf32, #tpu.memory_space<vmem>>, vector<8x8x128xf32>
    %56 = vector.shape_cast %54 : vector<1x128xf32> to vector<1x1x128xf32>
    %57 = vector.broadcast %56 : vector<1x1x128xf32> to vector<8x8x128xf32>
    %58 = arith.mulf %55, %57 : vector<8x8x128xf32>
    %59 = arith.addf %53, %58 : vector<8x8x128xf32>
    %c9 = arith.constant 9 : index
    %c0_47 = arith.constant 0 : index
    %60 = vector.load %arg2[%c9, %c0_47] : memref<49x128xf32, #tpu.memory_space<vmem>>, vector<1x128xf32>
    %c1_48 = arith.constant 1 : index
    %c2_49 = arith.constant 2 : index
    %c0_50 = arith.constant 0 : index
    %61 = vector.load %arg12[%c1_48, %c2_49, %c0_50] : memref<14x14x128xf32, #tpu.memory_space<vmem>>, vector<8x8x128xf32>
    %62 = vector.shape_cast %60 : vector<1x128xf32> to vector<1x1x128xf32>
    %63 = vector.broadcast %62 : vector<1x1x128xf32> to vector<8x8x128xf32>
    %64 = arith.mulf %61, %63 : vector<8x8x128xf32>
    %65 = arith.addf %59, %64 : vector<8x8x128xf32>
    %c10 = arith.constant 10 : index
    %c0_51 = arith.constant 0 : index
    %66 = vector.load %arg2[%c10, %c0_51] : memref<49x128xf32, #tpu.memory_space<vmem>>, vector<1x128xf32>
    %c1_52 = arith.constant 1 : index
    %c3_53 = arith.constant 3 : index
    %c0_54 = arith.constant 0 : index
    %67 = vector.load %arg12[%c1_52, %c3_53, %c0_54] : memref<14x14x128xf32, #tpu.memory_space<vmem>>, vector<8x8x128xf32>
    %68 = vector.shape_cast %66 : vector<1x128xf32> to vector<1x1x128xf32>
    %69 = vector.broadcast %68 : vector<1x1x128xf32> to vector<8x8x128xf32>
    %70 = arith.mulf %67, %69 : vector<8x8x128xf32>
    %71 = arith.addf %65, %70 : vector<8x8x128xf32>
    %c11 = arith.constant 11 : index
    %c0_55 = arith.constant 0 : index
    %72 = vector.load %arg2[%c11, %c0_55] : memref<49x128xf32, #tpu.memory_space<vmem>>, vector<1x128xf32>
    %c1_56 = arith.constant 1 : index
    %c4_57 = arith.constant 4 : index
    %c0_58 = arith.constant 0 : index
    %73 = vector.load %arg12[%c1_56, %c4_57, %c0_58] : memref<14x14x128xf32, #tpu.memory_space<vmem>>, vector<8x8x128xf32>
    %74 = vector.shape_cast %72 : vector<1x128xf32> to vector<1x1x128xf32>
    %75 = vector.broadcast %74 : vector<1x1x128xf32> to vector<8x8x128xf32>
    %76 = arith.mulf %73, %75 : vector<8x8x128xf32>
    %77 = arith.addf %71, %76 : vector<8x8x128xf32>
    %c12 = arith.constant 12 : index
    %c0_59 = arith.constant 0 : index
    %78 = vector.load %arg2[%c12, %c0_59] : memref<49x128xf32, #tpu.memory_space<vmem>>, vector<1x128xf32>
    %c1_60 = arith.constant 1 : index
    %c5_61 = arith.constant 5 : index
    %c0_62 = arith.constant 0 : index
    %79 = vector.load %arg12[%c1_60, %c5_61, %c0_62] : memref<14x14x128xf32, #tpu.memory_space<vmem>>, vector<8x8x128xf32>
    %80 = vector.shape_cast %78 : vector<1x128xf32> to vector<1x1x128xf32>
    %81 = vector.broadcast %80 : vector<1x1x128xf32> to vector<8x8x128xf32>
    %82 = arith.mulf %79, %81 : vector<8x8x128xf32>
    %83 = arith.addf %77, %82 : vector<8x8x128xf32>
    %c13 = arith.constant 13 : index
    %c0_63 = arith.constant 0 : index
    %84 = vector.load %arg2[%c13, %c0_63] : memref<49x128xf32, #tpu.memory_space<vmem>>, vector<1x128xf32>
    %c1_64 = arith.constant 1 : index
    %c6_65 = arith.constant 6 : index
    %c0_66 = arith.constant 0 : index
    %85 = vector.load %arg12[%c1_64, %c6_65, %c0_66] : memref<14x14x128xf32, #tpu.memory_space<vmem>>, vector<8x8x128xf32>
    %86 = vector.shape_cast %84 : vector<1x128xf32> to vector<1x1x128xf32>
    %87 = vector.broadcast %86 : vector<1x1x128xf32> to vector<8x8x128xf32>
    %88 = arith.mulf %85, %87 : vector<8x8x128xf32>
    %89 = arith.addf %83, %88 : vector<8x8x128xf32>
    %c14 = arith.constant 14 : index
    %c0_67 = arith.constant 0 : index
    %90 = vector.load %arg2[%c14, %c0_67] : memref<49x128xf32, #tpu.memory_space<vmem>>, vector<1x128xf32>
    %c2_68 = arith.constant 2 : index
    %c0_69 = arith.constant 0 : index
    %c0_70 = arith.constant 0 : index
    %91 = vector.load %arg12[%c2_68, %c0_69, %c0_70] : memref<14x14x128xf32, #tpu.memory_space<vmem>>, vector<8x8x128xf32>
    %92 = vector.shape_cast %90 : vector<1x128xf32> to vector<1x1x128xf32>
    %93 = vector.broadcast %92 : vector<1x1x128xf32> to vector<8x8x128xf32>
    %94 = arith.mulf %91, %93 : vector<8x8x128xf32>
    %95 = arith.addf %89, %94 : vector<8x8x128xf32>
    %c15 = arith.constant 15 : index
    %c0_71 = arith.constant 0 : index
    %96 = vector.load %arg2[%c15, %c0_71] : memref<49x128xf32, #tpu.memory_space<vmem>>, vector<1x128xf32>
    %c2_72 = arith.constant 2 : index
    %c1_73 = arith.constant 1 : index
    %c0_74 = arith.constant 0 : index
    %97 = vector.load %arg12[%c2_72, %c1_73, %c0_74] : memref<14x14x128xf32, #tpu.memory_space<vmem>>, vector<8x8x128xf32>
    %98 = vector.shape_cast %96 : vector<1x128xf32> to vector<1x1x128xf32>
    %99 = vector.broadcast %98 : vector<1x1x128xf32> to vector<8x8x128xf32>
    %100 = arith.mulf %97, %99 : vector<8x8x128xf32>
    %101 = arith.addf %95, %100 : vector<8x8x128xf32>
    %c16 = arith.constant 16 : index
    %c0_75 = arith.constant 0 : index
    %102 = vector.load %arg2[%c16, %c0_75] : memref<49x128xf32, #tpu.memory_space<vmem>>, vector<1x128xf32>
    %c2_76 = arith.constant 2 : index
    %c2_77 = arith.constant 2 : index
    %c0_78 = arith.constant 0 : index
    %103 = vector.load %arg12[%c2_76, %c2_77, %c0_78] : memref<14x14x128xf32, #tpu.memory_space<vmem>>, vector<8x8x128xf32>
    %104 = vector.shape_cast %102 : vector<1x128xf32> to vector<1x1x128xf32>
    %105 = vector.broadcast %104 : vector<1x1x128xf32> to vector<8x8x128xf32>
    %106 = arith.mulf %103, %105 : vector<8x8x128xf32>
    %107 = arith.addf %101, %106 : vector<8x8x128xf32>
    %c17 = arith.constant 17 : index
    %c0_79 = arith.constant 0 : index
    %108 = vector.load %arg2[%c17, %c0_79] : memref<49x128xf32, #tpu.memory_space<vmem>>, vector<1x128xf32>
    %c2_80 = arith.constant 2 : index
    %c3_81 = arith.constant 3 : index
    %c0_82 = arith.constant 0 : index
    %109 = vector.load %arg12[%c2_80, %c3_81, %c0_82] : memref<14x14x128xf32, #tpu.memory_space<vmem>>, vector<8x8x128xf32>
    %110 = vector.shape_cast %108 : vector<1x128xf32> to vector<1x1x128xf32>
    %111 = vector.broadcast %110 : vector<1x1x128xf32> to vector<8x8x128xf32>
    %112 = arith.mulf %109, %111 : vector<8x8x128xf32>
    %113 = arith.addf %107, %112 : vector<8x8x128xf32>
    %c18 = arith.constant 18 : index
    %c0_83 = arith.constant 0 : index
    %114 = vector.load %arg2[%c18, %c0_83] : memref<49x128xf32, #tpu.memory_space<vmem>>, vector<1x128xf32>
    %c2_84 = arith.constant 2 : index
    %c4_85 = arith.constant 4 : index
    %c0_86 = arith.constant 0 : index
    %115 = vector.load %arg12[%c2_84, %c4_85, %c0_86] : memref<14x14x128xf32, #tpu.memory_space<vmem>>, vector<8x8x128xf32>
    %116 = vector.shape_cast %114 : vector<1x128xf32> to vector<1x1x128xf32>
    %117 = vector.broadcast %116 : vector<1x1x128xf32> to vector<8x8x128xf32>
    %118 = arith.mulf %115, %117 : vector<8x8x128xf32>
    %119 = arith.addf %113, %118 : vector<8x8x128xf32>
    %c19 = arith.constant 19 : index
    %c0_87 = arith.constant 0 : index
    %120 = vector.load %arg2[%c19, %c0_87] : memref<49x128xf32, #tpu.memory_space<vmem>>, vector<1x128xf32>
    %c2_88 = arith.constant 2 : index
    %c5_89 = arith.constant 5 : index
    %c0_90 = arith.constant 0 : index
    %121 = vector.load %arg12[%c2_88, %c5_89, %c0_90] : memref<14x14x128xf32, #tpu.memory_space<vmem>>, vector<8x8x128xf32>
    %122 = vector.shape_cast %120 : vector<1x128xf32> to vector<1x1x128xf32>
    %123 = vector.broadcast %122 : vector<1x1x128xf32> to vector<8x8x128xf32>
    %124 = arith.mulf %121, %123 : vector<8x8x128xf32>
    %125 = arith.addf %119, %124 : vector<8x8x128xf32>
    %c20 = arith.constant 20 : index
    %c0_91 = arith.constant 0 : index
    %126 = vector.load %arg2[%c20, %c0_91] : memref<49x128xf32, #tpu.memory_space<vmem>>, vector<1x128xf32>
    %c2_92 = arith.constant 2 : index
    %c6_93 = arith.constant 6 : index
    %c0_94 = arith.constant 0 : index
    %127 = vector.load %arg12[%c2_92, %c6_93, %c0_94] : memref<14x14x128xf32, #tpu.memory_space<vmem>>, vector<8x8x128xf32>
    %128 = vector.shape_cast %126 : vector<1x128xf32> to vector<1x1x128xf32>
    %129 = vector.broadcast %128 : vector<1x1x128xf32> to vector<8x8x128xf32>
    %130 = arith.mulf %127, %129 : vector<8x8x128xf32>
    %131 = arith.addf %125, %130 : vector<8x8x128xf32>
    %c21 = arith.constant 21 : index
    %c0_95 = arith.constant 0 : index
    %132 = vector.load %arg2[%c21, %c0_95] : memref<49x128xf32, #tpu.memory_space<vmem>>, vector<1x128xf32>
    %c3_96 = arith.constant 3 : index
    %c0_97 = arith.constant 0 : index
    %c0_98 = arith.constant 0 : index
    %133 = vector.load %arg12[%c3_96, %c0_97, %c0_98] : memref<14x14x128xf32, #tpu.memory_space<vmem>>, vector<8x8x128xf32>
    %134 = vector.shape_cast %132 : vector<1x128xf32> to vector<1x1x128xf32>
    %135 = vector.broadcast %134 : vector<1x1x128xf32> to vector<8x8x128xf32>
    %136 = arith.mulf %133, %135 : vector<8x8x128xf32>
    %137 = arith.addf %131, %136 : vector<8x8x128xf32>
    %c22 = arith.constant 22 : index
    %c0_99 = arith.constant 0 : index
    %138 = vector.load %arg2[%c22, %c0_99] : memref<49x128xf32, #tpu.memory_space<vmem>>, vector<1x128xf32>
    %c3_100 = arith.constant 3 : index
    %c1_101 = arith.constant 1 : index
    %c0_102 = arith.constant 0 : index
    %139 = vector.load %arg12[%c3_100, %c1_101, %c0_102] : memref<14x14x128xf32, #tpu.memory_space<vmem>>, vector<8x8x128xf32>
    %140 = vector.shape_cast %138 : vector<1x128xf32> to vector<1x1x128xf32>
    %141 = vector.broadcast %140 : vector<1x1x128xf32> to vector<8x8x128xf32>
    %142 = arith.mulf %139, %141 : vector<8x8x128xf32>
    %143 = arith.addf %137, %142 : vector<8x8x128xf32>
    %c23 = arith.constant 23 : index
    %c0_103 = arith.constant 0 : index
    %144 = vector.load %arg2[%c23, %c0_103] : memref<49x128xf32, #tpu.memory_space<vmem>>, vector<1x128xf32>
    %c3_104 = arith.constant 3 : index
    %c2_105 = arith.constant 2 : index
    %c0_106 = arith.constant 0 : index
    %145 = vector.load %arg12[%c3_104, %c2_105, %c0_106] : memref<14x14x128xf32, #tpu.memory_space<vmem>>, vector<8x8x128xf32>
    %146 = vector.shape_cast %144 : vector<1x128xf32> to vector<1x1x128xf32>
    %147 = vector.broadcast %146 : vector<1x1x128xf32> to vector<8x8x128xf32>
    %148 = arith.mulf %145, %147 : vector<8x8x128xf32>
    %149 = arith.addf %143, %148 : vector<8x8x128xf32>
    %c24 = arith.constant 24 : index
    %c0_107 = arith.constant 0 : index
    %150 = vector.load %arg2[%c24, %c0_107] : memref<49x128xf32, #tpu.memory_space<vmem>>, vector<1x128xf32>
    %c3_108 = arith.constant 3 : index
    %c3_109 = arith.constant 3 : index
    %c0_110 = arith.constant 0 : index
    %151 = vector.load %arg12[%c3_108, %c3_109, %c0_110] : memref<14x14x128xf32, #tpu.memory_space<vmem>>, vector<8x8x128xf32>
    %152 = vector.shape_cast %150 : vector<1x128xf32> to vector<1x1x128xf32>
    %153 = vector.broadcast %152 : vector<1x1x128xf32> to vector<8x8x128xf32>
    %154 = arith.mulf %151, %153 : vector<8x8x128xf32>
    %155 = arith.addf %149, %154 : vector<8x8x128xf32>
    %c25 = arith.constant 25 : index
    %c0_111 = arith.constant 0 : index
    %156 = vector.load %arg2[%c25, %c0_111] : memref<49x128xf32, #tpu.memory_space<vmem>>, vector<1x128xf32>
    %c3_112 = arith.constant 3 : index
    %c4_113 = arith.constant 4 : index
    %c0_114 = arith.constant 0 : index
    %157 = vector.load %arg12[%c3_112, %c4_113, %c0_114] : memref<14x14x128xf32, #tpu.memory_space<vmem>>, vector<8x8x128xf32>
    %158 = vector.shape_cast %156 : vector<1x128xf32> to vector<1x1x128xf32>
    %159 = vector.broadcast %158 : vector<1x1x128xf32> to vector<8x8x128xf32>
    %160 = arith.mulf %157, %159 : vector<8x8x128xf32>
    %161 = arith.addf %155, %160 : vector<8x8x128xf32>
    %c26 = arith.constant 26 : index
    %c0_115 = arith.constant 0 : index
    %162 = vector.load %arg2[%c26, %c0_115] : memref<49x128xf32, #tpu.memory_space<vmem>>, vector<1x128xf32>
    %c3_116 = arith.constant 3 : index
    %c5_117 = arith.constant 5 : index
    %c0_118 = arith.constant 0 : index
    %163 = vector.load %arg12[%c3_116, %c5_117, %c0_118] : memref<14x14x128xf32, #tpu.memory_space<vmem>>, vector<8x8x128xf32>
    %164 = vector.shape_cast %162 : vector<1x128xf32> to vector<1x1x128xf32>
    %165 = vector.broadcast %164 : vector<1x1x128xf32> to vector<8x8x128xf32>
    %166 = arith.mulf %163, %165 : vector<8x8x128xf32>
    %167 = arith.addf %161, %166 : vector<8x8x128xf32>
    %c27 = arith.constant 27 : index
    %c0_119 = arith.constant 0 : index
    %168 = vector.load %arg2[%c27, %c0_119] : memref<49x128xf32, #tpu.memory_space<vmem>>, vector<1x128xf32>
    %c3_120 = arith.constant 3 : index
    %c6_121 = arith.constant 6 : index
    %c0_122 = arith.constant 0 : index
    %169 = vector.load %arg12[%c3_120, %c6_121, %c0_122] : memref<14x14x128xf32, #tpu.memory_space<vmem>>, vector<8x8x128xf32>
    %170 = vector.shape_cast %168 : vector<1x128xf32> to vector<1x1x128xf32>
    %171 = vector.broadcast %170 : vector<1x1x128xf32> to vector<8x8x128xf32>
    %172 = arith.mulf %169, %171 : vector<8x8x128xf32>
    %173 = arith.addf %167, %172 : vector<8x8x128xf32>
    %c28 = arith.constant 28 : index
    %c0_123 = arith.constant 0 : index
    %174 = vector.load %arg2[%c28, %c0_123] : memref<49x128xf32, #tpu.memory_space<vmem>>, vector<1x128xf32>
    %c4_124 = arith.constant 4 : index
    %c0_125 = arith.constant 0 : index
    %c0_126 = arith.constant 0 : index
    %175 = vector.load %arg12[%c4_124, %c0_125, %c0_126] : memref<14x14x128xf32, #tpu.memory_space<vmem>>, vector<8x8x128xf32>
    %176 = vector.shape_cast %174 : vector<1x128xf32> to vector<1x1x128xf32>
    %177 = vector.broadcast %176 : vector<1x1x128xf32> to vector<8x8x128xf32>
    %178 = arith.mulf %175, %177 : vector<8x8x128xf32>
    %179 = arith.addf %173, %178 : vector<8x8x128xf32>
    %c29 = arith.constant 29 : index
    %c0_127 = arith.constant 0 : index
    %180 = vector.load %arg2[%c29, %c0_127] : memref<49x128xf32, #tpu.memory_space<vmem>>, vector<1x128xf32>
    %c4_128 = arith.constant 4 : index
    %c1_129 = arith.constant 1 : index
    %c0_130 = arith.constant 0 : index
    %181 = vector.load %arg12[%c4_128, %c1_129, %c0_130] : memref<14x14x128xf32, #tpu.memory_space<vmem>>, vector<8x8x128xf32>
    %182 = vector.shape_cast %180 : vector<1x128xf32> to vector<1x1x128xf32>
    %183 = vector.broadcast %182 : vector<1x1x128xf32> to vector<8x8x128xf32>
    %184 = arith.mulf %181, %183 : vector<8x8x128xf32>
    %185 = arith.addf %179, %184 : vector<8x8x128xf32>
    %c30 = arith.constant 30 : index
    %c0_131 = arith.constant 0 : index
    %186 = vector.load %arg2[%c30, %c0_131] : memref<49x128xf32, #tpu.memory_space<vmem>>, vector<1x128xf32>
    %c4_132 = arith.constant 4 : index
    %c2_133 = arith.constant 2 : index
    %c0_134 = arith.constant 0 : index
    %187 = vector.load %arg12[%c4_132, %c2_133, %c0_134] : memref<14x14x128xf32, #tpu.memory_space<vmem>>, vector<8x8x128xf32>
    %188 = vector.shape_cast %186 : vector<1x128xf32> to vector<1x1x128xf32>
    %189 = vector.broadcast %188 : vector<1x1x128xf32> to vector<8x8x128xf32>
    %190 = arith.mulf %187, %189 : vector<8x8x128xf32>
    %191 = arith.addf %185, %190 : vector<8x8x128xf32>
    %c31 = arith.constant 31 : index
    %c0_135 = arith.constant 0 : index
    %192 = vector.load %arg2[%c31, %c0_135] : memref<49x128xf32, #tpu.memory_space<vmem>>, vector<1x128xf32>
    %c4_136 = arith.constant 4 : index
    %c3_137 = arith.constant 3 : index
    %c0_138 = arith.constant 0 : index
    %193 = vector.load %arg12[%c4_136, %c3_137, %c0_138] : memref<14x14x128xf32, #tpu.memory_space<vmem>>, vector<8x8x128xf32>
    %194 = vector.shape_cast %192 : vector<1x128xf32> to vector<1x1x128xf32>
    %195 = vector.broadcast %194 : vector<1x1x128xf32> to vector<8x8x128xf32>
    %196 = arith.mulf %193, %195 : vector<8x8x128xf32>
    %197 = arith.addf %191, %196 : vector<8x8x128xf32>
    %c32 = arith.constant 32 : index
    %c0_139 = arith.constant 0 : index
    %198 = vector.load %arg2[%c32, %c0_139] : memref<49x128xf32, #tpu.memory_space<vmem>>, vector<1x128xf32>
    %c4_140 = arith.constant 4 : index
    %c4_141 = arith.constant 4 : index
    %c0_142 = arith.constant 0 : index
    %199 = vector.load %arg12[%c4_140, %c4_141, %c0_142] : memref<14x14x128xf32, #tpu.memory_space<vmem>>, vector<8x8x128xf32>
    %200 = vector.shape_cast %198 : vector<1x128xf32> to vector<1x1x128xf32>
    %201 = vector.broadcast %200 : vector<1x1x128xf32> to vector<8x8x128xf32>
    %202 = arith.mulf %199, %201 : vector<8x8x128xf32>
    %203 = arith.addf %197, %202 : vector<8x8x128xf32>
    %c33 = arith.constant 33 : index
    %c0_143 = arith.constant 0 : index
    %204 = vector.load %arg2[%c33, %c0_143] : memref<49x128xf32, #tpu.memory_space<vmem>>, vector<1x128xf32>
    %c4_144 = arith.constant 4 : index
    %c5_145 = arith.constant 5 : index
    %c0_146 = arith.constant 0 : index
    %205 = vector.load %arg12[%c4_144, %c5_145, %c0_146] : memref<14x14x128xf32, #tpu.memory_space<vmem>>, vector<8x8x128xf32>
    %206 = vector.shape_cast %204 : vector<1x128xf32> to vector<1x1x128xf32>
    %207 = vector.broadcast %206 : vector<1x1x128xf32> to vector<8x8x128xf32>
    %208 = arith.mulf %205, %207 : vector<8x8x128xf32>
    %209 = arith.addf %203, %208 : vector<8x8x128xf32>
    %c34 = arith.constant 34 : index
    %c0_147 = arith.constant 0 : index
    %210 = vector.load %arg2[%c34, %c0_147] : memref<49x128xf32, #tpu.memory_space<vmem>>, vector<1x128xf32>
    %c4_148 = arith.constant 4 : index
    %c6_149 = arith.constant 6 : index
    %c0_150 = arith.constant 0 : index
    %211 = vector.load %arg12[%c4_148, %c6_149, %c0_150] : memref<14x14x128xf32, #tpu.memory_space<vmem>>, vector<8x8x128xf32>
    %212 = vector.shape_cast %210 : vector<1x128xf32> to vector<1x1x128xf32>
    %213 = vector.broadcast %212 : vector<1x1x128xf32> to vector<8x8x128xf32>
    %214 = arith.mulf %211, %213 : vector<8x8x128xf32>
    %215 = arith.addf %209, %214 : vector<8x8x128xf32>
    %c35 = arith.constant 35 : index
    %c0_151 = arith.constant 0 : index
    %216 = vector.load %arg2[%c35, %c0_151] : memref<49x128xf32, #tpu.memory_space<vmem>>, vector<1x128xf32>
    %c5_152 = arith.constant 5 : index
    %c0_153 = arith.constant 0 : index
    %c0_154 = arith.constant 0 : index
    %217 = vector.load %arg12[%c5_152, %c0_153, %c0_154] : memref<14x14x128xf32, #tpu.memory_space<vmem>>, vector<8x8x128xf32>
    %218 = vector.shape_cast %216 : vector<1x128xf32> to vector<1x1x128xf32>
    %219 = vector.broadcast %218 : vector<1x1x128xf32> to vector<8x8x128xf32>
    %220 = arith.mulf %217, %219 : vector<8x8x128xf32>
    %221 = arith.addf %215, %220 : vector<8x8x128xf32>
    %c36 = arith.constant 36 : index
    %c0_155 = arith.constant 0 : index
    %222 = vector.load %arg2[%c36, %c0_155] : memref<49x128xf32, #tpu.memory_space<vmem>>, vector<1x128xf32>
    %c5_156 = arith.constant 5 : index
    %c1_157 = arith.constant 1 : index
    %c0_158 = arith.constant 0 : index
    %223 = vector.load %arg12[%c5_156, %c1_157, %c0_158] : memref<14x14x128xf32, #tpu.memory_space<vmem>>, vector<8x8x128xf32>
    %224 = vector.shape_cast %222 : vector<1x128xf32> to vector<1x1x128xf32>
    %225 = vector.broadcast %224 : vector<1x1x128xf32> to vector<8x8x128xf32>
    %226 = arith.mulf %223, %225 : vector<8x8x128xf32>
    %227 = arith.addf %221, %226 : vector<8x8x128xf32>
    %c37 = arith.constant 37 : index
    %c0_159 = arith.constant 0 : index
    %228 = vector.load %arg2[%c37, %c0_159] : memref<49x128xf32, #tpu.memory_space<vmem>>, vector<1x128xf32>
    %c5_160 = arith.constant 5 : index
    %c2_161 = arith.constant 2 : index
    %c0_162 = arith.constant 0 : index
    %229 = vector.load %arg12[%c5_160, %c2_161, %c0_162] : memref<14x14x128xf32, #tpu.memory_space<vmem>>, vector<8x8x128xf32>
    %230 = vector.shape_cast %228 : vector<1x128xf32> to vector<1x1x128xf32>
    %231 = vector.broadcast %230 : vector<1x1x128xf32> to vector<8x8x128xf32>
    %232 = arith.mulf %229, %231 : vector<8x8x128xf32>
    %233 = arith.addf %227, %232 : vector<8x8x128xf32>
    %c38 = arith.constant 38 : index
    %c0_163 = arith.constant 0 : index
    %234 = vector.load %arg2[%c38, %c0_163] : memref<49x128xf32, #tpu.memory_space<vmem>>, vector<1x128xf32>
    %c5_164 = arith.constant 5 : index
    %c3_165 = arith.constant 3 : index
    %c0_166 = arith.constant 0 : index
    %235 = vector.load %arg12[%c5_164, %c3_165, %c0_166] : memref<14x14x128xf32, #tpu.memory_space<vmem>>, vector<8x8x128xf32>
    %236 = vector.shape_cast %234 : vector<1x128xf32> to vector<1x1x128xf32>
    %237 = vector.broadcast %236 : vector<1x1x128xf32> to vector<8x8x128xf32>
    %238 = arith.mulf %235, %237 : vector<8x8x128xf32>
    %239 = arith.addf %233, %238 : vector<8x8x128xf32>
    %c39 = arith.constant 39 : index
    %c0_167 = arith.constant 0 : index
    %240 = vector.load %arg2[%c39, %c0_167] : memref<49x128xf32, #tpu.memory_space<vmem>>, vector<1x128xf32>
    %c5_168 = arith.constant 5 : index
    %c4_169 = arith.constant 4 : index
    %c0_170 = arith.constant 0 : index
    %241 = vector.load %arg12[%c5_168, %c4_169, %c0_170] : memref<14x14x128xf32, #tpu.memory_space<vmem>>, vector<8x8x128xf32>
    %242 = vector.shape_cast %240 : vector<1x128xf32> to vector<1x1x128xf32>
    %243 = vector.broadcast %242 : vector<1x1x128xf32> to vector<8x8x128xf32>
    %244 = arith.mulf %241, %243 : vector<8x8x128xf32>
    %245 = arith.addf %239, %244 : vector<8x8x128xf32>
    %c40 = arith.constant 40 : index
    %c0_171 = arith.constant 0 : index
    %246 = vector.load %arg2[%c40, %c0_171] : memref<49x128xf32, #tpu.memory_space<vmem>>, vector<1x128xf32>
    %c5_172 = arith.constant 5 : index
    %c5_173 = arith.constant 5 : index
    %c0_174 = arith.constant 0 : index
    %247 = vector.load %arg12[%c5_172, %c5_173, %c0_174] : memref<14x14x128xf32, #tpu.memory_space<vmem>>, vector<8x8x128xf32>
    %248 = vector.shape_cast %246 : vector<1x128xf32> to vector<1x1x128xf32>
    %249 = vector.broadcast %248 : vector<1x1x128xf32> to vector<8x8x128xf32>
    %250 = arith.mulf %247, %249 : vector<8x8x128xf32>
    %251 = arith.addf %245, %250 : vector<8x8x128xf32>
    %c41 = arith.constant 41 : index
    %c0_175 = arith.constant 0 : index
    %252 = vector.load %arg2[%c41, %c0_175] : memref<49x128xf32, #tpu.memory_space<vmem>>, vector<1x128xf32>
    %c5_176 = arith.constant 5 : index
    %c6_177 = arith.constant 6 : index
    %c0_178 = arith.constant 0 : index
    %253 = vector.load %arg12[%c5_176, %c6_177, %c0_178] : memref<14x14x128xf32, #tpu.memory_space<vmem>>, vector<8x8x128xf32>
    %254 = vector.shape_cast %252 : vector<1x128xf32> to vector<1x1x128xf32>
    %255 = vector.broadcast %254 : vector<1x1x128xf32> to vector<8x8x128xf32>
    %256 = arith.mulf %253, %255 : vector<8x8x128xf32>
    %257 = arith.addf %251, %256 : vector<8x8x128xf32>
    %c42 = arith.constant 42 : index
    %c0_179 = arith.constant 0 : index
    %258 = vector.load %arg2[%c42, %c0_179] : memref<49x128xf32, #tpu.memory_space<vmem>>, vector<1x128xf32>
    %c6_180 = arith.constant 6 : index
    %c0_181 = arith.constant 0 : index
    %c0_182 = arith.constant 0 : index
    %259 = vector.load %arg12[%c6_180, %c0_181, %c0_182] : memref<14x14x128xf32, #tpu.memory_space<vmem>>, vector<8x8x128xf32>
    %260 = vector.shape_cast %258 : vector<1x128xf32> to vector<1x1x128xf32>
    %261 = vector.broadcast %260 : vector<1x1x128xf32> to vector<8x8x128xf32>
    %262 = arith.mulf %259, %261 : vector<8x8x128xf32>
    %263 = arith.addf %257, %262 : vector<8x8x128xf32>
    %c43 = arith.constant 43 : index
    %c0_183 = arith.constant 0 : index
    %264 = vector.load %arg2[%c43, %c0_183] : memref<49x128xf32, #tpu.memory_space<vmem>>, vector<1x128xf32>
    %c6_184 = arith.constant 6 : index
    %c1_185 = arith.constant 1 : index
    %c0_186 = arith.constant 0 : index
    %265 = vector.load %arg12[%c6_184, %c1_185, %c0_186] : memref<14x14x128xf32, #tpu.memory_space<vmem>>, vector<8x8x128xf32>
    %266 = vector.shape_cast %264 : vector<1x128xf32> to vector<1x1x128xf32>
    %267 = vector.broadcast %266 : vector<1x1x128xf32> to vector<8x8x128xf32>
    %268 = arith.mulf %265, %267 : vector<8x8x128xf32>
    %269 = arith.addf %263, %268 : vector<8x8x128xf32>
    %c44 = arith.constant 44 : index
    %c0_187 = arith.constant 0 : index
    %270 = vector.load %arg2[%c44, %c0_187] : memref<49x128xf32, #tpu.memory_space<vmem>>, vector<1x128xf32>
    %c6_188 = arith.constant 6 : index
    %c2_189 = arith.constant 2 : index
    %c0_190 = arith.constant 0 : index
    %271 = vector.load %arg12[%c6_188, %c2_189, %c0_190] : memref<14x14x128xf32, #tpu.memory_space<vmem>>, vector<8x8x128xf32>
    %272 = vector.shape_cast %270 : vector<1x128xf32> to vector<1x1x128xf32>
    %273 = vector.broadcast %272 : vector<1x1x128xf32> to vector<8x8x128xf32>
    %274 = arith.mulf %271, %273 : vector<8x8x128xf32>
    %275 = arith.addf %269, %274 : vector<8x8x128xf32>
    %c45 = arith.constant 45 : index
    %c0_191 = arith.constant 0 : index
    %276 = vector.load %arg2[%c45, %c0_191] : memref<49x128xf32, #tpu.memory_space<vmem>>, vector<1x128xf32>
    %c6_192 = arith.constant 6 : index
    %c3_193 = arith.constant 3 : index
    %c0_194 = arith.constant 0 : index
    %277 = vector.load %arg12[%c6_192, %c3_193, %c0_194] : memref<14x14x128xf32, #tpu.memory_space<vmem>>, vector<8x8x128xf32>
    %278 = vector.shape_cast %276 : vector<1x128xf32> to vector<1x1x128xf32>
    %279 = vector.broadcast %278 : vector<1x1x128xf32> to vector<8x8x128xf32>
    %280 = arith.mulf %277, %279 : vector<8x8x128xf32>
    %281 = arith.addf %275, %280 : vector<8x8x128xf32>
    %c46 = arith.constant 46 : index
    %c0_195 = arith.constant 0 : index
    %282 = vector.load %arg2[%c46, %c0_195] : memref<49x128xf32, #tpu.memory_space<vmem>>, vector<1x128xf32>
    %c6_196 = arith.constant 6 : index
    %c4_197 = arith.constant 4 : index
    %c0_198 = arith.constant 0 : index
    %283 = vector.load %arg12[%c6_196, %c4_197, %c0_198] : memref<14x14x128xf32, #tpu.memory_space<vmem>>, vector<8x8x128xf32>
    %284 = vector.shape_cast %282 : vector<1x128xf32> to vector<1x1x128xf32>
    %285 = vector.broadcast %284 : vector<1x1x128xf32> to vector<8x8x128xf32>
    %286 = arith.mulf %283, %285 : vector<8x8x128xf32>
    %287 = arith.addf %281, %286 : vector<8x8x128xf32>
    %c47 = arith.constant 47 : index
    %c0_199 = arith.constant 0 : index
    %288 = vector.load %arg2[%c47, %c0_199] : memref<49x128xf32, #tpu.memory_space<vmem>>, vector<1x128xf32>
    %c6_200 = arith.constant 6 : index
    %c5_201 = arith.constant 5 : index
    %c0_202 = arith.constant 0 : index
    %289 = vector.load %arg12[%c6_200, %c5_201, %c0_202] : memref<14x14x128xf32, #tpu.memory_space<vmem>>, vector<8x8x128xf32>
    %290 = vector.shape_cast %288 : vector<1x128xf32> to vector<1x1x128xf32>
    %291 = vector.broadcast %290 : vector<1x1x128xf32> to vector<8x8x128xf32>
    %292 = arith.mulf %289, %291 : vector<8x8x128xf32>
    %293 = arith.addf %287, %292 : vector<8x8x128xf32>
    %c48 = arith.constant 48 : index
    %c0_203 = arith.constant 0 : index
    %294 = vector.load %arg2[%c48, %c0_203] : memref<49x128xf32, #tpu.memory_space<vmem>>, vector<1x128xf32>
    %c6_204 = arith.constant 6 : index
    %c6_205 = arith.constant 6 : index
    %c0_206 = arith.constant 0 : index
    %295 = vector.load %arg12[%c6_204, %c6_205, %c0_206] : memref<14x14x128xf32, #tpu.memory_space<vmem>>, vector<8x8x128xf32>
    %296 = vector.shape_cast %294 : vector<1x128xf32> to vector<1x1x128xf32>
    %297 = vector.broadcast %296 : vector<1x1x128xf32> to vector<8x8x128xf32>
    %298 = arith.mulf %295, %297 : vector<8x8x128xf32>
    %299 = arith.addf %293, %298 : vector<8x8x128xf32>
    %c0_207 = arith.constant 0 : index
    %c0_208 = arith.constant 0 : index
    %300 = vector.load %arg3[%c0_207, %c0_208] : memref<1x128xf32, #tpu.memory_space<vmem>>, vector<1x128xf32>
    %301 = vector.shape_cast %300 : vector<1x128xf32> to vector<1x1x128xf32>
    %302 = vector.broadcast %301 : vector<1x1x128xf32> to vector<8x8x128xf32>
    %303 = arith.addf %299, %302 : vector<8x8x128xf32>
    %304 = vector.shape_cast %303 : vector<8x8x128xf32> to vector<64x128xf32>
    %c0_209 = arith.constant 0 : index
    %c0_210 = arith.constant 0 : index
    %305 = vector.load %arg4[%c0_209, %c0_210] : memref<1x128xf32, #tpu.memory_space<vmem>>, vector<1x128xf32>
    %c0_211 = arith.constant 0 : index
    %c0_212 = arith.constant 0 : index
    %306 = vector.load %arg5[%c0_211, %c0_212] : memref<1x128xf32, #tpu.memory_space<vmem>>, vector<1x128xf32>
    %cst_213 = arith.constant dense<0.000000e+00> : vector<64xf32>
    %307 = vector.multi_reduction <add>, %304, %cst_213 [1] : vector<64x128xf32> to vector<64xf32>
    %308 = vector.shape_cast %307 : vector<64xf32> to vector<64x1xf32>
    %cst_214 = arith.constant 1.280000e+02 : f32
    %309 = vector.broadcast %cst_214 : f32 to vector<64x1xf32>
    %310 = arith.divf %308, %309 : vector<64x1xf32>
    %311 = vector.broadcast %310 : vector<64x1xf32> to vector<64x128xf32>
    %312 = arith.subf %304, %311 : vector<64x128xf32>
    %313 = arith.mulf %312, %312 : vector<64x128xf32>
    %cst_215 = arith.constant dense<0.000000e+00> : vector<64xf32>
    %314 = vector.multi_reduction <add>, %313, %cst_215 [1] : vector<64x128xf32> to vector<64xf32>
    %315 = vector.shape_cast %314 : vector<64xf32> to vector<64x1xf32>
    %cst_216 = arith.constant 1.280000e+02 : f32
    %316 = vector.broadcast %cst_216 : f32 to vector<64x1xf32>
    %317 = arith.divf %315, %316 : vector<64x1xf32>
    %318 = vector.broadcast %310 : vector<64x1xf32> to vector<64x128xf32>
    %319 = arith.subf %304, %318 : vector<64x128xf32>
    %cst_217 = arith.constant 9.99999997E-7 : f32
    %320 = vector.broadcast %cst_217 : f32 to vector<64x1xf32>
    %321 = arith.addf %317, %320 : vector<64x1xf32>
    %322 = math.rsqrt %321 : vector<64x1xf32>
    %323 = vector.broadcast %322 : vector<64x1xf32> to vector<64x128xf32>
    %324 = arith.mulf %319, %323 : vector<64x128xf32>
    %325 = vector.broadcast %305 : vector<1x128xf32> to vector<64x128xf32>
    %326 = arith.mulf %324, %325 : vector<64x128xf32>
    %327 = vector.broadcast %306 : vector<1x128xf32> to vector<64x128xf32>
    %328 = arith.addf %326, %327 : vector<64x128xf32>
    %329 = arith.truncf %328 : vector<64x128xf32> to vector<64x128xbf16>
    %c0_218 = arith.constant 0 : index
    %c0_219 = arith.constant 0 : index
    %330 = vector.load %arg6[%c0_218, %c0_219] : memref<128x512xbf16, #tpu.memory_space<vmem>>, vector<128x512xbf16>
    %cst_220 = arith.constant dense<0.000000e+00> : vector<64x512xf32>
    %331 = tpu.matmul %329, %330, %cst_220 {dimension_numbers = #tpu.dot_dimension_numbers<[1], [0], [0], [1], [0, 0, 1, 1], [], []>} : vector<64x128xbf16>, vector<128x512xbf16>, vector<64x512xf32> -> vector<64x512xf32>
    %c0_221 = arith.constant 0 : index
    %c0_222 = arith.constant 0 : index
    %332 = vector.load %arg7[%c0_221, %c0_222] : memref<1x512xf32, #tpu.memory_space<vmem>>, vector<1x512xf32>
    %333 = vector.broadcast %332 : vector<1x512xf32> to vector<64x512xf32>
    %334 = arith.addf %331, %333 : vector<64x512xf32>
    %335 = arith.mulf %334, %334 : vector<64x512xf32>
    %336 = arith.mulf %334, %335 : vector<64x512xf32>
    %cst_223 = arith.constant 4.471500e-02 : f32
    %337 = vector.broadcast %cst_223 : f32 to vector<64x512xf32>
    %338 = arith.mulf %337, %336 : vector<64x512xf32>
    %339 = arith.addf %334, %338 : vector<64x512xf32>
    %cst_224 = arith.constant 0.797884583 : f32
    %340 = vector.broadcast %cst_224 : f32 to vector<64x512xf32>
    %341 = arith.mulf %340, %339 : vector<64x512xf32>
    %342 = math.tanh %341 : vector<64x512xf32>
    %cst_225 = arith.constant 1.000000e+00 : f32
    %343 = vector.broadcast %cst_225 : f32 to vector<64x512xf32>
    %344 = arith.addf %343, %342 : vector<64x512xf32>
    %cst_226 = arith.constant 5.000000e-01 : f32
    %345 = vector.broadcast %cst_226 : f32 to vector<64x512xf32>
    %346 = arith.mulf %345, %344 : vector<64x512xf32>
    %347 = arith.mulf %334, %346 : vector<64x512xf32>
    %348 = arith.truncf %347 : vector<64x512xf32> to vector<64x512xbf16>
    %c0_227 = arith.constant 0 : index
    %c0_228 = arith.constant 0 : index
    %349 = vector.load %arg8[%c0_227, %c0_228] : memref<512x128xbf16, #tpu.memory_space<vmem>>, vector<512x128xbf16>
    %cst_229 = arith.constant dense<0.000000e+00> : vector<64x128xf32>
    %350 = tpu.matmul %348, %349, %cst_229 {dimension_numbers = #tpu.dot_dimension_numbers<[1], [0], [0], [1], [0, 0, 1, 1], [], []>} : vector<64x512xbf16>, vector<512x128xbf16>, vector<64x128xf32> -> vector<64x128xf32>
    %c0_230 = arith.constant 0 : index
    %c0_231 = arith.constant 0 : index
    %351 = vector.load %arg9[%c0_230, %c0_231] : memref<1x128xf32, #tpu.memory_space<vmem>>, vector<1x128xf32>
    %352 = vector.broadcast %351 : vector<1x128xf32> to vector<64x128xf32>
    %353 = arith.addf %350, %352 : vector<64x128xf32>
    %c0_232 = arith.constant 0 : index
    %c0_233 = arith.constant 0 : index
    %c0_234 = arith.constant 0 : index
    %c0_235 = arith.constant 0 : index
    %354 = vector.load %arg1[%c0_232, %c0_233, %c0_234, %c0_235] : memref<1x8x8x128xf32, #tpu.memory_space<vmem>>, vector<1x8x8x128xf32>
    %355 = vector.shape_cast %354 : vector<1x8x8x128xf32> to vector<8x8x128xf32>
    %c0_236 = arith.constant 0 : index
    %c0_237 = arith.constant 0 : index
    %356 = vector.load %arg10[%c0_236, %c0_237] : memref<1x128xf32, #tpu.memory_space<vmem>>, vector<1x128xf32>
    %357 = vector.shape_cast %353 : vector<64x128xf32> to vector<8x8x128xf32>
    %358 = vector.shape_cast %356 : vector<1x128xf32> to vector<1x1x128xf32>
    %359 = vector.broadcast %358 : vector<1x1x128xf32> to vector<8x8x128xf32>
    %360 = arith.mulf %359, %357 : vector<8x8x128xf32>
    %361 = arith.addf %355, %360 : vector<8x8x128xf32>
    %c0_238 = arith.constant 0 : index
    %c0_239 = arith.constant 0 : index
    %c0_240 = arith.constant 0 : index
    %c0_241 = arith.constant 0 : index
    %362 = vector.load %arg11[%c0_238, %c0_239, %c0_240, %c0_241] : memref<1x8x8x128xf32, #tpu.memory_space<vmem>>, vector<1x8x8x128xf32>
    %363 = vector.shape_cast %362 : vector<1x8x8x128xf32> to vector<8x8x128xf32>
    %364 = vector.shape_cast %361 : vector<8x8x128xf32> to vector<1x8x8x128xf32>
    tpu.vector_store %arg11[%c0_238, %c0_239, %c0_240, %c0_241], %364 {strides = array<i32>} : memref<1x8x8x128xf32, #tpu.memory_space<vmem>>, vector<1x8x8x128xf32>,
    return
  }
  func.func @transform_0(%arg0: i32) -> (i32, i32, i32, i32) {
    %c0_i32 = arith.constant 0 : i32
    %c0_i32_0 = arith.constant 0 : i32
    %c0_i32_1 = arith.constant 0 : i32
    %c0_i32_2 = arith.constant 0 : i32
    return %arg0, %c0_i32, %c0_i32_0, %c0_i32_1 : i32, i32, i32, i32
  }
  func.func @transform_1(%arg0: i32) -> (i32, i32) {
    %c0_i32 = arith.constant 0 : i32
    %c0_i32_0 = arith.constant 0 : i32
    %c0_i32_1 = arith.constant 0 : i32
    return %c0_i32, %c0_i32_0 : i32, i32
  }
  func.func @transform_2(%arg0: i32) -> (i32, i32) {
    %c0_i32 = arith.constant 0 : i32
    %c0_i32_0 = arith.constant 0 : i32
    %c0_i32_1 = arith.constant 0 : i32
    return %c0_i32, %c0_i32_0 : i32, i32
  }
  func.func @transform_3(%arg0: i32) -> (i32, i32) {
    %c0_i32 = arith.constant 0 : i32
    %c0_i32_0 = arith.constant 0 : i32
    %c0_i32_1 = arith.constant 0 : i32
    return %c0_i32, %c0_i32_0 : i32, i32
  }
  func.func @transform_4(%arg0: i32) -> (i32, i32) {
    %c0_i32 = arith.constant 0 : i32
    %c0_i32_0 = arith.constant 0 : i32
    %c0_i32_1 = arith.constant 0 : i32
    return %c0_i32, %c0_i32_0 : i32, i32
  }
  func.func @transform_5(%arg0: i32) -> (i32, i32) {
    %c0_i32 = arith.constant 0 : i32
    %c0_i32_0 = arith.constant 0 : i32
    %c0_i32_1 = arith.constant 0 : i32
    return %c0_i32, %c0_i32_0 : i32, i32
  }
  func.func @transform_6(%arg0: i32) -> (i32, i32) {
    %c0_i32 = arith.constant 0 : i32
    %c0_i32_0 = arith.constant 0 : i32
    %c0_i32_1 = arith.constant 0 : i32
    return %c0_i32, %c0_i32_0 : i32, i32
  }
  func.func @transform_7(%arg0: i32) -> (i32, i32) {
    %c0_i32 = arith.constant 0 : i32
    %c0_i32_0 = arith.constant 0 : i32
    %c0_i32_1 = arith.constant 0 : i32
    return %c0_i32, %c0_i32_0 : i32, i32
  }
  func.func @transform_8(%arg0: i32) -> (i32, i32) {
    %c0_i32 = arith.constant 0 : i32
    %c0_i32_0 = arith.constant 0 : i32
    %c0_i32_1 = arith.constant 0 : i32
    return %c0_i32, %c0_i32_0 : i32, i32
  }
  func.func @transform_9(%arg0: i32) -> (i32, i32) {
    %c0_i32 = arith.constant 0 : i32
    %c0_i32_0 = arith.constant 0 : i32
    %c0_i32_1 = arith.constant 0 : i32
    return %c0_i32, %c0_i32_0 : i32, i32
  }
  func.func @transform_10(%arg0: i32) -> (i32, i32, i32, i32) {
    %c0_i32 = arith.constant 0 : i32
    %c0_i32_0 = arith.constant 0 : i32
    %c0_i32_1 = arith.constant 0 : i32
    %c0_i32_2 = arith.constant 0 : i32
    return %arg0, %c0_i32, %c0_i32_0, %c0_i32_1 : i32, i32, i32, i32
  }
}

module attributes {stable_mosaic.version = 11 : i64} {
  func.func @head_kernel(%arg0: i32, %arg1: memref<2x64x128xf32, #tpu.memory_space<vmem>>, %arg2: memref<1x128xf32, #tpu.memory_space<vmem>>, %arg3: memref<1x128xf32, #tpu.memory_space<vmem>>, %arg4: memref<128x10xf32, #tpu.memory_space<vmem>>, %arg5: memref<1x10xf32, #tpu.memory_space<vmem>>, %arg6: memref<2x10xf32, #tpu.memory_space<vmem>>) attributes {dimension_semantics = [#tpu.dimension_semantics<arbitrary>], iteration_bounds = array<i64: 1>, scalar_prefetch = 0 : i64, scratch_operands = 0 : i64, tpu.core_type = #tpu.core_type<tc>, window_params = [{pipeline_mode = #tpu.pipeline_mode<synchronous>, transform_indices = @transform_0, window_bounds = array<i64: 2, 64, 128>}, {pipeline_mode = #tpu.pipeline_mode<synchronous>, transform_indices = @transform_1, window_bounds = array<i64: 1, 128>}, {pipeline_mode = #tpu.pipeline_mode<synchronous>, transform_indices = @transform_2, window_bounds = array<i64: 1, 128>}, {pipeline_mode = #tpu.pipeline_mode<synchronous>, transform_indices = @transform_3, window_bounds = array<i64: 128, 10>}, {pipeline_mode = #tpu.pipeline_mode<synchronous>, transform_indices = @transform_4, window_bounds = array<i64: 1, 10>}, {pipeline_mode = #tpu.pipeline_mode<synchronous>, transform_indices = @transform_5, window_bounds = array<i64: 2, 10>}]} {
    %c0 = arith.constant 0 : index
    %c0_0 = arith.constant 0 : index
    %c0_1 = arith.constant 0 : index
    %0 = vector.load %arg1[%c0, %c0_0, %c0_1] : memref<2x64x128xf32, #tpu.memory_space<vmem>>, vector<2x64x128xf32>
    %cst = arith.constant dense<0.000000e+00> : vector<2x128xf32>
    %1 = vector.multi_reduction <add>, %0, %cst [1] : vector<2x64x128xf32> to vector<2x128xf32>
    %cst_2 = arith.constant 6.400000e+01 : f32
    %2 = vector.broadcast %cst_2 : f32 to vector<2x128xf32>
    %3 = arith.divf %1, %2 : vector<2x128xf32>
    %c0_3 = arith.constant 0 : index
    %c0_4 = arith.constant 0 : index
    %4 = vector.load %arg2[%c0_3, %c0_4] : memref<1x128xf32, #tpu.memory_space<vmem>>, vector<1x128xf32>
    %c0_5 = arith.constant 0 : index
    %c0_6 = arith.constant 0 : index
    %5 = vector.load %arg3[%c0_5, %c0_6] : memref<1x128xf32, #tpu.memory_space<vmem>>, vector<1x128xf32>
    %cst_7 = arith.constant dense<0.000000e+00> : vector<2xf32>
    %6 = vector.multi_reduction <add>, %3, %cst_7 [1] : vector<2x128xf32> to vector<2xf32>
    %7 = vector.shape_cast %6 : vector<2xf32> to vector<2x1xf32>
    %cst_8 = arith.constant 1.280000e+02 : f32
    %8 = vector.broadcast %cst_8 : f32 to vector<2x1xf32>
    %9 = arith.divf %7, %8 : vector<2x1xf32>
    %10 = vector.broadcast %9 : vector<2x1xf32> to vector<2x128xf32>
    %11 = arith.subf %3, %10 : vector<2x128xf32>
    %12 = arith.mulf %11, %11 : vector<2x128xf32>
    %cst_9 = arith.constant dense<0.000000e+00> : vector<2xf32>
    %13 = vector.multi_reduction <add>, %12, %cst_9 [1] : vector<2x128xf32> to vector<2xf32>
    %14 = vector.shape_cast %13 : vector<2xf32> to vector<2x1xf32>
    %cst_10 = arith.constant 1.280000e+02 : f32
    %15 = vector.broadcast %cst_10 : f32 to vector<2x1xf32>
    %16 = arith.divf %14, %15 : vector<2x1xf32>
    %17 = vector.broadcast %9 : vector<2x1xf32> to vector<2x128xf32>
    %18 = arith.subf %3, %17 : vector<2x128xf32>
    %cst_11 = arith.constant 9.99999997E-7 : f32
    %19 = vector.broadcast %cst_11 : f32 to vector<2x1xf32>
    %20 = arith.addf %16, %19 : vector<2x1xf32>
    %21 = math.rsqrt %20 : vector<2x1xf32>
    %22 = vector.broadcast %21 : vector<2x1xf32> to vector<2x128xf32>
    %23 = arith.mulf %18, %22 : vector<2x128xf32>
    %24 = vector.broadcast %4 : vector<1x128xf32> to vector<2x128xf32>
    %25 = arith.mulf %23, %24 : vector<2x128xf32>
    %26 = vector.broadcast %5 : vector<1x128xf32> to vector<2x128xf32>
    %27 = arith.addf %25, %26 : vector<2x128xf32>
    %c0_12 = arith.constant 0 : index
    %c0_13 = arith.constant 0 : index
    %28 = vector.load %arg4[%c0_12, %c0_13] : memref<128x10xf32, #tpu.memory_space<vmem>>, vector<128x10xf32>
    %cst_14 = arith.constant dense<0.000000e+00> : vector<2x10xf32>
    %29 = tpu.matmul %27, %28, %cst_14 {dimension_numbers = #tpu.dot_dimension_numbers<[1], [0], [0], [1], [0, 0, 1, 1], [], []>} : vector<2x128xf32>, vector<128x10xf32>, vector<2x10xf32> -> vector<2x10xf32>
    %c0_15 = arith.constant 0 : index
    %c0_16 = arith.constant 0 : index
    %30 = vector.load %arg5[%c0_15, %c0_16] : memref<1x10xf32, #tpu.memory_space<vmem>>, vector<1x10xf32>
    %31 = vector.broadcast %30 : vector<1x10xf32> to vector<2x10xf32>
    %32 = arith.addf %29, %31 : vector<2x10xf32>
    %c0_17 = arith.constant 0 : index
    %c0_18 = arith.constant 0 : index
    %33 = vector.load %arg6[%c0_17, %c0_18] : memref<2x10xf32, #tpu.memory_space<vmem>>, vector<2x10xf32>
    tpu.vector_store %arg6[%c0_17, %c0_18], %32 {strides = array<i32>} : memref<2x10xf32, #tpu.memory_space<vmem>>, vector<2x10xf32>,
    return
  }
  func.func @transform_0(%arg0: i32) -> (i32, i32, i32) {
    %c0_i32 = arith.constant 0 : i32
    %c0_i32_0 = arith.constant 0 : i32
    %c0_i32_1 = arith.constant 0 : i32
    %c0_i32_2 = arith.constant 0 : i32
    return %c0_i32, %c0_i32_0, %c0_i32_1 : i32, i32, i32
  }
  func.func @transform_1(%arg0: i32) -> (i32, i32) {
    %c0_i32 = arith.constant 0 : i32
    %c0_i32_0 = arith.constant 0 : i32
    %c0_i32_1 = arith.constant 0 : i32
    return %c0_i32, %c0_i32_0 : i32, i32
  }
  func.func @transform_2(%arg0: i32) -> (i32, i32) {
    %c0_i32 = arith.constant 0 : i32
    %c0_i32_0 = arith.constant 0 : i32
    %c0_i32_1 = arith.constant 0 : i32
    return %c0_i32, %c0_i32_0 : i32, i32
  }
  func.func @transform_3(%arg0: i32) -> (i32, i32) {
    %c0_i32 = arith.constant 0 : i32
    %c0_i32_0 = arith.constant 0 : i32
    %c0_i32_1 = arith.constant 0 : i32
    return %c0_i32, %c0_i32_0 : i32, i32
  }
  func.func @transform_4(%arg0: i32) -> (i32, i32) {
    %c0_i32 = arith.constant 0 : i32
    %c0_i32_0 = arith.constant 0 : i32
    %c0_i32_1 = arith.constant 0 : i32
    return %c0_i32, %c0_i32_0 : i32, i32
  }
  func.func @transform_5(%arg0: i32) -> (i32, i32) {
    %c0_i32 = arith.constant 0 : i32
    %c0_i32_0 = arith.constant 0 : i32
    %c0_i32_1 = arith.constant 0 : i32
    return %c0_i32, %c0_i32_0 : i32, i32
  }
}

</mosaic_0001>

<llo_original>
// kernel: convnext_forward.4
$region0: #{convnext_forward.4}
  #allocation0 [shape = 'u32[]', space=smem, size = 0x4, offset = 0x4, fixed_abs, tag = 'smem constant byte address 0x4 - core index']
  #allocation1 [shape = 'u32[144,128]{1,0:T(1,128)}', space=vmem, size = 0x12000, scoped, tag = 'internal scratch']
  %s0 = inlined_call_operand.vmem [shape: f32[128,48], index: 0, kind: input, shape index: {}]
  %s1 = inlined_call_operand.vmem [shape: bf16[48,128], index: 1, kind: input, shape index: {}]
  %s2 = inlined_call_operand.vmem [shape: f32[1,128], index: 2, kind: input, shape index: {}]
  %s3 = inlined_call_operand.vmem [shape: f32[1,128], index: 3, kind: input, shape index: {}]
  %s4 = inlined_call_operand.vmem [shape: f32[1,128], index: 4, kind: input, shape index: {}]
  %s5 = inlined_call_operand.vmem [shape: f32[128,128], index: 5, kind: output, shape index: {}]
  %s6 = sld [smem:[#allocation0]]
  $region30: #{convnext_forward.4} parent=0
    _
  %s8 = ssub.s32 1, %s6
  %s9 = scalar_select 0, %s8, %s6
  // Predicated region
  $region2: #{convnext_forward.4} parent=0 // pred_check
    _
  $region3: #{convnext_forward.4} parent=0 // pred_check_branch
    %11 = sbr.rel (0) target = $region5
  $region4: #{convnext_forward.4} parent=0 // pred_region
    _
  $region5: #{convnext_forward.4} parent=0 // pred_fallthru
    _
  // Predicated region
  $region6: #{convnext_forward.4} parent=0 // pred_check
    _
  $region7: #{convnext_forward.4} parent=0 // pred_check_branch
    %13 = sbr.rel (0) target = $region9
  $region8: #{convnext_forward.4} parent=0 // pred_region
    _
  $region9: #{convnext_forward.4} parent=0 // pred_fallthru
    _
  // Predicated region
  $region10: #{convnext_forward.4} parent=0 // pred_check
    _
  $region11: #{convnext_forward.4} parent=0 // pred_check_branch
    %15 = sbr.rel (0) target = $region13
  $region12: #{convnext_forward.4} parent=0 // pred_region
    _
  $region13: #{convnext_forward.4} parent=0 // pred_fallthru
    _
  // Predicated region
  $region14: #{convnext_forward.4} parent=0 // pred_check
    _
  $region15: #{convnext_forward.4} parent=0 // pred_check_branch
    %17 = sbr.rel (0) target = $region17
  $region16: #{convnext_forward.4} parent=0 // pred_region
    _
  $region17: #{convnext_forward.4} parent=0 // pred_fallthru
    _
  // Predicated region
  $region18: #{convnext_forward.4} parent=0 // pred_check
    _
  $region19: #{convnext_forward.4} parent=0 // pred_check_branch
    %19 = sbr.rel (0) target = $region21
  $region20: #{convnext_forward.4} parent=0 // pred_region
    _
  $region21: #{convnext_forward.4} parent=0 // pred_fallthru
    _
  %v21 = vld [vmem:[%s0] sm:$0xff]
  %v22 = vld [vmem:[%s0 + $0x8] sm:$0xff]
  %v23 = vld [vmem:[%s0 + $0x10] sm:$0xff]
  %v24 = vld [vmem:[%s0 + $0x18] sm:$0xff]
  %v25 = vld [vmem:[%s0 + $0x20] sm:$0xff]
  %v26 = vld [vmem:[%s0 + $0x28] sm:$0xff]
  %v27 = vld [vmem:[%s0 + $0x30] sm:$0xff]
  %v28 = vld [vmem:[%s0 + $0x38] sm:$0xff]
  %v29 = vld [vmem:[%s0 + $0x40] sm:$0xff]
  %v30 = vld [vmem:[%s0 + $0x48] sm:$0xff]
  %v31 = vld [vmem:[%s0 + $0x50] sm:$0xff]
  %v32 = vld [vmem:[%s0 + $0x58] sm:$0xff]
  %v33 = vld [vmem:[%s0 + $0x60] sm:$0xff]
  %v34 = vld [vmem:[%s0 + $0x68] sm:$0xff]
  %v35 = vld [vmem:[%s0 + $0x70] sm:$0xff]
  %v36 = vld [vmem:[%s0 + $0x78] sm:$0xff]
  %v37 = vpack.c.bf16 %v22, %v21
  %v38 = vpack.c.bf16 %v24, %v23
  %v39 = vpack.c.bf16 %v26, %v25
  %v40 = vpack.c.bf16 %v28, %v27
  %v41 = vpack.c.bf16 %v30, %v29
  %v42 = vpack.c.bf16 %v32, %v31
  %v43 = vpack.c.bf16 %v34, %v33
  %v44 = vpack.c.bf16 %v36, %v35
  %v45 = vld [vmem:[%s1] sm:$0xf]
  %v46 = vld [vmem:[%s1 + $0x4] sm:$0xf]
  %v47 = vld [vmem:[%s1 + $0x8] sm:$0xf]
  %v48 = vld [vmem:[%s1 + $0xc] sm:$0xf]
  %v49 = vld [vmem:[%s1 + $0x10] sm:$0xf]
  %v50 = vld [vmem:[%s1 + $0x14] sm:$0xf]
  %v51 = vld [vmem:[%s2] sm:$0x1]
  %v53 = vlaneseq
  %v54 = vshrl.u32 %v53, 7
  %v55 = vsub.s32 0, %v54
  %v56 = vrot.slane %v51, %v55
  %v64 = vunpack.c.l.b16 %v45
  %v65 = vunpack.c.l.b16 %v46
  %v66 = vunpack.c.l.b16 %v47
  %v67 = vunpack.c.l.b16 %v48
  %v68 = vunpack.c.l.b16 %v49
  %v69 = vunpack.c.l.b16 %v50
  %v70 = vpack.c.b16 %v65, %v64
  %v71 = vpack.c.b16 %v67, %v66
  %v72 = vpack.c.b16 %v69, %v68
  %vm76 = vcmask 392192
  %v78 = vsel %vm76, %v37, 0
  %v81 = vsel %vm76, %v38, 0
  %v84 = vsel %vm76, %v39, 0
  %v87 = vsel %vm76, %v40, 0
  %v90 = vsel %vm76, %v41, 0
  %v93 = vsel %vm76, %v42, 0
  %v96 = vsel %vm76, %v43, 0
  %v99 = vsel %vm76, %v44, 0
  %101 = vmatprep.subr.bf16.mxu0 0
  %102 = vmatpush1.bf16.msra.mxu0 0
  %103 = vmatprep.subr.bf16.mxu0 0
  %104 = vmatpush1.bf16.msra.mxu0 0
  %105 = vmatprep.subr.bf16.mxu0 0
  %106 = vmatpush1.bf16.msra.mxu0 0
  %107 = vmatprep.subr.bf16.mxu0 0
  %108 = vmatpush1.bf16.msra.mxu0 0
  %109 = vmatprep.subr.bf16.mxu0 0
  %110 = vmatpush1.bf16.msra.mxu0 0
  %111 = vmatprep.subr.bf16.mxu0 0
  %112 = vmatpush1.bf16.msra.mxu0 %v72
  %113 = vmatprep.subr.bf16.mxu0 0
  %114 = vmatpush1.bf16.msra.mxu0 %v71
  %115 = vmatprep.subr.bf16.mxu0 0
  %116 = vmatpush1.bf16.msra.mxu0 %v70
  %117 = vmatprep.subr.bf16.mxu0 0
  %118 = vmatpush2.bf16.msra.mxu0 0
  %119 = vmatprep.subr.bf16.mxu0 0
  %120 = vmatpush2.bf16.msra.mxu0 0
  %121 = vmatprep.subr.bf16.mxu0 0
  %122 = vmatpush2.bf16.msra.mxu0 0
  %123 = vmatprep.subr.bf16.mxu0 0
  %124 = vmatpush2.bf16.msra.mxu0 0
  %125 = vmatprep.subr.bf16.mxu0 0
  %126 = vmatpush2.bf16.msra.mxu0 0
  %127 = vmatprep.subr.bf16.mxu0 0
  %128 = vmatpush2.bf16.msra.mxu0 0
  %129 = vmatprep.subr.bf16.mxu0 0
  %130 = vmatpush2.bf16.msra.mxu0 0
  %131 = vmatprep.subr.bf16.mxu0 0
  %132 = vmatpush2.bf16.msra.mxu0 0
  %133 = vmatprep.mubr.bf16.mxu0 0
  %134 = vmatmul.mubr.bf16.gmra.mxu0 %v78
  %v135 = vpop.f32.mrf.mxu0
  %v136 = vadd.f32 %v56, %v135
  %v137 = vpop.f32.mrf.mxu0
  %v138 = vpop.f32.mrf.mxu0
  %v139 = vadd.f32 %v56, %v138
  %v140 = vpop.f32.mrf.mxu0
  %141 = vmatprep.mubr.bf16.mxu0 0
  %142 = vmatmul.mubr.bf16.gmra.mxu0 %v81
  %v143 = vpop.f32.mrf.mxu0
  %v144 = vadd.f32 %v56, %v143
  %v145 = vpop.f32.mrf.mxu0
  %v146 = vpop.f32.mrf.mxu0
  %v147 = vadd.f32 %v56, %v146
  %v148 = vpop.f32.mrf.mxu0
  %149 = vmatprep.mubr.bf16.mxu0 0
  %150 = vmatmul.mubr.bf16.gmra.mxu0 %v84
  %v151 = vpop.f32.mrf.mxu0
  %v152 = vadd.f32 %v56, %v151
  %v153 = vpop.f32.mrf.mxu0
  %v154 = vpop.f32.mrf.mxu0
  %v155 = vadd.f32 %v56, %v154
  %v156 = vpop.f32.mrf.mxu0
  %157 = vmatprep.mubr.bf16.mxu0 0
  %158 = vmatmul.mubr.bf16.gmra.mxu0 %v87
  %v159 = vpop.f32.mrf.mxu0
  %v160 = vadd.f32 %v56, %v159
  %v161 = vpop.f32.mrf.mxu0
  %v162 = vpop.f32.mrf.mxu0
  %v163 = vadd.f32 %v56, %v162
  %v164 = vpop.f32.mrf.mxu0
  %165 = vmatprep.mubr.bf16.mxu0 0
  %166 = vmatmul.mubr.bf16.gmra.mxu0 %v90
  %v167 = vpop.f32.mrf.mxu0
  %v168 = vadd.f32 %v56, %v167
  %v169 = vpop.f32.mrf.mxu0
  %v170 = vpop.f32.mrf.mxu0
  %v171 = vadd.f32 %v56, %v170
  %v172 = vpop.f32.mrf.mxu0
  %173 = vmatprep.mubr.bf16.mxu0 0
  %174 = vmatmul.mubr.bf16.gmra.mxu0 %v93
  %v175 = vpop.f32.mrf.mxu0
  %v176 = vadd.f32 %v56, %v175
  %v177 = vpop.f32.mrf.mxu0
  %v178 = vpop.f32.mrf.mxu0
  %v179 = vadd.f32 %v56, %v178
  %v180 = vpop.f32.mrf.mxu0
  %181 = vmatprep.mubr.bf16.mxu0 0
  %182 = vmatmul.mubr.bf16.gmra.mxu0 %v96
  %v183 = vpop.f32.mrf.mxu0
  %v184 = vadd.f32 %v56, %v183
  %v185 = vpop.f32.mrf.mxu0
  %v186 = vpop.f32.mrf.mxu0
  %v187 = vadd.f32 %v56, %v186
  %v188 = vpop.f32.mrf.mxu0
  %189 = vmatprep.mubr.bf16.mxu0 0
  %190 = vmatmul.mubr.bf16.gmra.mxu0 %v99
  %v191 = vpop.f32.mrf.mxu0
  %v192 = vadd.f32 %v56, %v191
  %v193 = vpop.f32.mrf.mxu0
  %v194 = vpop.f32.mrf.mxu0
  %v195 = vadd.f32 %v56, %v194
  %v196 = vpop.f32.mrf.mxu0
  %197 = vdwg.mxu0
  %v198 = vld [vmem:[%s3] sm:$0x1]
  %v199 = vld [vmem:[%s4] sm:$0x1]
  %200 = vadd.xlane.f32.xlu0 %v136
  %v201 = vpop.xlane.xlu0 %200
  %202 = vadd.xlane.f32.xlu0 %v139
  %v203 = vpop.xlane.xlu0 %202
  %204 = vadd.xlane.f32.xlu0 %v144
  %v205 = vpop.xlane.xlu0 %204
  %206 = vadd.xlane.f32.xlu0 %v147
  %v207 = vpop.xlane.xlu0 %206
  %208 = vadd.xlane.f32.xlu0 %v152
  %v209 = vpop.xlane.xlu0 %208
  %210 = vadd.xlane.f32.xlu0 %v155
  %v211 = vpop.xlane.xlu0 %210
  %212 = vadd.xlane.f32.xlu0 %v160
  %v213 = vpop.xlane.xlu0 %212
  %214 = vadd.xlane.f32.xlu0 %v163
  %v215 = vpop.xlane.xlu0 %214
  %216 = vadd.xlane.f32.xlu0 %v168
  %v217 = vpop.xlane.xlu0 %216
  %218 = vadd.xlane.f32.xlu0 %v171
  %v219 = vpop.xlane.xlu0 %218
  %220 = vadd.xlane.f32.xlu0 %v176
  %v221 = vpop.xlane.xlu0 %220
  %222 = vadd.xlane.f32.xlu0 %v179
  %v223 = vpop.xlane.xlu0 %222
  %224 = vadd.xlane.f32.xlu0 %v184
  %v225 = vpop.xlane.xlu0 %224
  %226 = vadd.xlane.f32.xlu0 %v187
  %v227 = vpop.xlane.xlu0 %226
  %228 = vadd.xlane.f32.xlu0 %v192
  %v229 = vpop.xlane.xlu0 %228
  %230 = vadd.xlane.f32.xlu0 %v195
  %v231 = vpop.xlane.xlu0 %230
  %v232 = vrcp.pop 128.0
  %v233 = vmul.f32 %v201, %v232
  %v234 = vmul.f32 %v203, %v232
  %v235 = vmul.f32 %v205, %v232
  %v236 = vmul.f32 %v207, %v232
  %v237 = vmul.f32 %v209, %v232
  %v238 = vmul.f32 %v211, %v232
  %v239 = vmul.f32 %v213, %v232
  %v240 = vmul.f32 %v215, %v232
  %v241 = vmul.f32 %v217, %v232
  %v242 = vmul.f32 %v219, %v232
  %v243 = vmul.f32 %v221, %v232
  %v244 = vmul.f32 %v223, %v232
  %v245 = vmul.f32 %v225, %v232
  %v246 = vmul.f32 %v227, %v232
  %v247 = vmul.f32 %v229, %v232
  %v248 = vmul.f32 %v231, %v232
  %v249 = vsub.f32 %v136, %v233
  %v250 = vsub.f32 %v139, %v234
  %v251 = vsub.f32 %v144, %v235
  %v252 = vsub.f32 %v147, %v236
  %v253 = vsub.f32 %v152, %v237
  %v254 = vsub.f32 %v155, %v238
  %v255 = vsub.f32 %v160, %v239
  %v256 = vsub.f32 %v163, %v240
  %v257 = vsub.f32 %v168, %v241
  %v258 = vsub.f32 %v171, %v242
  %v259 = vsub.f32 %v176, %v243
  %v260 = vsub.f32 %v179, %v244
  %v261 = vsub.f32 %v184, %v245
  %v262 = vsub.f32 %v187, %v246
  %v263 = vsub.f32 %v192, %v247
  %v264 = vsub.f32 %v195, %v248
  %v265 = vmul.f32 %v249, %v249
  %v266 = vmul.f32 %v250, %v250
  %v267 = vmul.f32 %v251, %v251
  %v268 = vmul.f32 %v252, %v252
  %v269 = vmul.f32 %v253, %v253
  %v270 = vmul.f32 %v254, %v254
  %v271 = vmul.f32 %v255, %v255
  %v272 = vmul.f32 %v256, %v256
  %v273 = vmul.f32 %v257, %v257
  %v274 = vmul.f32 %v258, %v258
  %v275 = vmul.f32 %v259, %v259
  %v276 = vmul.f32 %v260, %v260
  %v277 = vmul.f32 %v261, %v261
  %v278 = vmul.f32 %v262, %v262
  %v279 = vmul.f32 %v263, %v263
  %v280 = vmul.f32 %v264, %v264
  %281 = vadd.xlane.f32.xlu0 %v265
  %v282 = vpop.xlane.xlu0 %281
  %283 = vadd.xlane.f32.xlu0 %v266
  %v284 = vpop.xlane.xlu0 %283
  %285 = vadd.xlane.f32.xlu0 %v267
  %v286 = vpop.xlane.xlu0 %285
  %287 = vadd.xlane.f32.xlu0 %v268
  %v288 = vpop.xlane.xlu0 %287
  %289 = vadd.xlane.f32.xlu0 %v269
  %v290 = vpop.xlane.xlu0 %289
  %291 = vadd.xlane.f32.xlu0 %v270
  %v292 = vpop.xlane.xlu0 %291
  %293 = vadd.xlane.f32.xlu0 %v271
  %v294 = vpop.xlane.xlu0 %293
  %295 = vadd.xlane.f32.xlu0 %v272
  %v296 = vpop.xlane.xlu0 %295
  %297 = vadd.xlane.f32.xlu0 %v273
  %v298 = vpop.xlane.xlu0 %297
  %299 = vadd.xlane.f32.xlu0 %v274
  %v300 = vpop.xlane.xlu0 %299
  %301 = vadd.xlane.f32.xlu0 %v275
  %v302 = vpop.xlane.xlu0 %301
  %303 = vadd.xlane.f32.xlu0 %v276
  %v304 = vpop.xlane.xlu0 %303
  %305 = vadd.xlane.f32.xlu0 %v277
  %v306 = vpop.xlane.xlu0 %305
  %307 = vadd.xlane.f32.xlu0 %v278
  %v308 = vpop.xlane.xlu0 %307
  %309 = vadd.xlane.f32.xlu0 %v279
  %v310 = vpop.xlane.xlu0 %309
  %311 = vadd.xlane.f32.xlu0 %v280
  %v312 = vpop.xlane.xlu0 %311
  %v313 = vmul.f32 %v282, %v232
  %v314 = vmul.f32 %v284, %v232
  %v315 = vmul.f32 %v286, %v232
  %v316 = vmul.f32 %v288, %v232
  %v317 = vmul.f32 %v290, %v232
  %v318 = vmul.f32 %v292, %v232
  %v319 = vmul.f32 %v294, %v232
  %v320 = vmul.f32 %v296, %v232
  %v321 = vmul.f32 %v298, %v232
  %v322 = vmul.f32 %v300, %v232
  %v323 = vmul.f32 %v302, %v232
  %v324 = vmul.f32 %v304, %v232
  %v325 = vmul.f32 %v306, %v232
  %v326 = vmul.f32 %v308, %v232
  %v327 = vmul.f32 %v310, %v232
  %v328 = vmul.f32 %v312, %v232
  %v329 = vadd.f32 %v313, 1e-06
  %v330 = vadd.f32 %v314, 1e-06
  %v331 = vadd.f32 %v315, 1e-06
  %v332 = vadd.f32 %v316, 1e-06
  %v333 = vadd.f32 %v317, 1e-06
  %v334 = vadd.f32 %v318, 1e-06
  %v335 = vadd.f32 %v319, 1e-06
  %v336 = vadd.f32 %v320, 1e-06
  %v337 = vadd.f32 %v321, 1e-06
  %v338 = vadd.f32 %v322, 1e-06
  %v339 = vadd.f32 %v323, 1e-06
  %v340 = vadd.f32 %v324, 1e-06
  %v341 = vadd.f32 %v325, 1e-06
  %v342 = vadd.f32 %v326, 1e-06
  %v343 = vadd.f32 %v327, 1e-06
  %v344 = vadd.f32 %v328, 1e-06
  %v345 = vrsqrt.pop %v329
  %v346 = vrsqrt.pop %v330
  %v347 = vrsqrt.pop %v331
  %v348 = vrsqrt.pop %v332
  %v349 = vrsqrt.pop %v333
  %v350 = vrsqrt.pop %v334
  %v351 = vrsqrt.pop %v335
  %v352 = vrsqrt.pop %v336
  %v353 = vrsqrt.pop %v337
  %v354 = vrsqrt.pop %v338
  %v355 = vrsqrt.pop %v339
  %v356 = vrsqrt.pop %v340
  %v357 = vrsqrt.pop %v341
  %v358 = vrsqrt.pop %v342
  %v359 = vrsqrt.pop %v343
  %v360 = vrsqrt.pop %v344
  %v361 = vmul.f32 %v249, %v345
  %v362 = vmul.f32 %v250, %v346
  %v363 = vmul.f32 %v251, %v347
  %v364 = vmul.f32 %v252, %v348
  %v365 = vmul.f32 %v253, %v349
  %v366 = vmul.f32 %v254, %v350
  %v367 = vmul.f32 %v255, %v351
  %v368 = vmul.f32 %v256, %v352
  %v369 = vmul.f32 %v257, %v353
  %v370 = vmul.f32 %v258, %v354
  %v371 = vmul.f32 %v259, %v355
  %v372 = vmul.f32 %v260, %v356
  %v373 = vmul.f32 %v261, %v357
  %v374 = vmul.f32 %v262, %v358
  %v375 = vmul.f32 %v263, %v359
  %v376 = vmul.f32 %v264, %v360
  %v378 = vlaneseq
  %v379 = vshrl.u32 %v378, 7
  %v380 = vsub.s32 0, %v379
  %v381 = vrot.slane %v198, %v380
  %v383 = vmul.f32 %v361, %v381
  %v384 = vmul.f32 %v362, %v381
  %v385 = vmul.f32 %v363, %v381
  %v386 = vmul.f32 %v364, %v381
  %v387 = vmul.f32 %v365, %v381
  %v388 = vmul.f32 %v366, %v381
  %v389 = vmul.f32 %v367, %v381
  %v390 = vmul.f32 %v368, %v381
  %v391 = vmul.f32 %v369, %v381
  %v392 = vmul.f32 %v370, %v381
  %v393 = vmul.f32 %v371, %v381
  %v394 = vmul.f32 %v372, %v381
  %v395 = vmul.f32 %v373, %v381
  %v396 = vmul.f32 %v374, %v381
  %v397 = vmul.f32 %v375, %v381
  %v398 = vmul.f32 %v376, %v381
  %v400 = vlaneseq
  %v401 = vshrl.u32 %v400, 7
  %v402 = vsub.s32 0, %v401
  %v403 = vrot.slane %v199, %v402
  %v405 = vadd.f32 %v383, %v403
  %v406 = vadd.f32 %v384, %v403
  %v407 = vadd.f32 %v385, %v403
  %v408 = vadd.f32 %v386, %v403
  %v409 = vadd.f32 %v387, %v403
  %v410 = vadd.f32 %v388, %v403
  %v411 = vadd.f32 %v389, %v403
  %v412 = vadd.f32 %v390, %v403
  %v413 = vadd.f32 %v391, %v403
  %v414 = vadd.f32 %v392, %v403
  %v415 = vadd.f32 %v393, %v403
  %v416 = vadd.f32 %v394, %v403
  %v417 = vadd.f32 %v395, %v403
  %v418 = vadd.f32 %v396, %v403
  %v419 = vadd.f32 %v397, %v403
  %v420 = vadd.f32 %v398, %v403
  %421 = vst [vmem:[%s5] sm:$0xff] %v405
  %422 = vst [vmem:[%s5 + $0x8] sm:$0xff] %v406
  %423 = vst [vmem:[%s5 + $0x10] sm:$0xff] %v407
  %424 = vst [vmem:[%s5 + $0x18] sm:$0xff] %v408
  %425 = vst [vmem:[%s5 + $0x20] sm:$0xff] %v409
  %426 = vst [vmem:[%s5 + $0x28] sm:$0xff] %v410
  %427 = vst [vmem:[%s5 + $0x30] sm:$0xff] %v411
  %428 = vst [vmem:[%s5 + $0x38] sm:$0xff] %v412
  %429 = vst [vmem:[%s5 + $0x40] sm:$0xff] %v413
  %430 = vst [vmem:[%s5 + $0x48] sm:$0xff] %v414
  %431 = vst [vmem:[%s5 + $0x50] sm:$0xff] %v415
  %432 = vst [vmem:[%s5 + $0x58] sm:$0xff] %v416
  %433 = vst [vmem:[%s5 + $0x60] sm:$0xff] %v417
  %434 = vst [vmem:[%s5 + $0x68] sm:$0xff] %v418
  %435 = vst [vmem:[%s5 + $0x70] sm:$0xff] %v419
  %436 = vst [vmem:[%s5 + $0x78] sm:$0xff] %v420
  // Predicated region
  $region22: #{convnext_forward.4} parent=0 // pred_check
    _
  $region23: #{convnext_forward.4} parent=0 // pred_check_branch
    %438 = sbr.rel (0) target = $region25
  $region24: #{convnext_forward.4} parent=0 // pred_region
    _
  $region25: #{convnext_forward.4} parent=0 // pred_fallthru
    _
  // Predicated region
  $region26: #{convnext_forward.4} parent=0 // pred_check
    _
  $region27: #{convnext_forward.4} parent=0 // pred_check_branch
    %440 = sbr.rel (0) target = $region29
  $region28: #{convnext_forward.4} parent=0 // pred_region
    _
  $region29: #{convnext_forward.4} parent=0 // pred_fallthru
    _

// kernel: convnext_forward.7
$region0: #{convnext_forward.7}
  #allocation0 [shape = 'u32[]', space=smem, size = 0x4, offset = 0x4, fixed_abs, tag = 'smem constant byte address 0x4 - core index']
  #allocation1 [shape = 'u32[144,128]{1,0:T(1,128)}', space=vmem, size = 0x12000, scoped, tag = 'internal scratch']
  %s0 = inlined_call_operand.vmem [shape: f32[2,64,128], index: 0, kind: input, shape index: {}]
  %s1 = inlined_call_operand.vmem [shape: f32[1,128], index: 1, kind: input, shape index: {}]
  %s2 = inlined_call_operand.vmem [shape: f32[1,128], index: 2, kind: input, shape index: {}]
  %s3 = inlined_call_operand.vmem [shape: f32[128,10], index: 3, kind: input, shape index: {}]
  %s4 = inlined_call_operand.vmem [shape: f32[1,10], index: 4, kind: input, shape index: {}]
  %s5 = inlined_call_operand.hbm [shape: f32[2,10], index: 5, kind: output, shape index: {}]
  %s6 = sld [smem:[#allocation0]]
  $region30: #{convnext_forward.7} parent=0
    _
  %s8 = ssub.s32 1, %s6
  %s9 = scalar_select 0, %s8, %s6
  $region1: #{convnext_forward.7} parent=0
    #allocation2 [shape = 'u8[1024]{0}', space=vmem, size = 0x400, scoped, tag = 'output window, operand 0, single buffered']
    #allocation3 [shape = 's32[1]{0}', space=sflag, size = 0x4, scoped, tag = 'scoped memory for convnext_forward.7']
    %10 = vsyncpa [#allocation3], 0
    // Predicated region
    $region2: #{convnext_forward.7} parent=1 // pred_check
      _
    $region3: #{convnext_forward.7} parent=1 // pred_check_branch
      %12 = sbr.rel (0) target = $region5
    $region4: #{convnext_forward.7} parent=1 // pred_region
      _
    $region5: #{convnext_forward.7} parent=1 // pred_fallthru
      _
    // Predicated region
    $region6: #{convnext_forward.7} parent=1 // pred_check
      _
    $region7: #{convnext_forward.7} parent=1 // pred_check_branch
      %14 = sbr.rel (0) target = $region9
    $region8: #{convnext_forward.7} parent=1 // pred_region
      _
    $region9: #{convnext_forward.7} parent=1 // pred_fallthru
      _
    // Predicated region
    $region10: #{convnext_forward.7} parent=1 // pred_check
      _
    $region11: #{convnext_forward.7} parent=1 // pred_check_branch
      %16 = sbr.rel (0) target = $region13
    $region12: #{convnext_forward.7} parent=1 // pred_region
      _
    $region13: #{convnext_forward.7} parent=1 // pred_fallthru
      _
    // Predicated region
    $region14: #{convnext_forward.7} parent=1 // pred_check
      _
    $region15: #{convnext_forward.7} parent=1 // pred_check_branch
      %18 = sbr.rel (0) target = $region17
    $region16: #{convnext_forward.7} parent=1 // pred_region
      _
    $region17: #{convnext_forward.7} parent=1 // pred_fallthru
      _
    // Predicated region
    $region18: #{convnext_forward.7} parent=1 // pred_check
      _
    $region19: #{convnext_forward.7} parent=1 // pred_check_branch
      %20 = sbr.rel (0) target = $region21
    $region20: #{convnext_forward.7} parent=1 // pred_region
      _
    $region21: #{convnext_forward.7} parent=1 // pred_fallthru
      _
    %v21 = vld [vmem:[%s0] sm:$0xff]
    %v22 = vld [vmem:[%s0 + $0x8] sm:$0xff]
    %v23 = vld [vmem:[%s0 + $0x10] sm:$0xff]
    %v24 = vld [vmem:[%s0 + $0x18] sm:$0xff]
    %v25 = vld [vmem:[%s0 + $0x20] sm:$0xff]
    %v26 = vld [vmem:[%s0 + $0x28] sm:$0xff]
    %v27 = vld [vmem:[%s0 + $0x30] sm:$0xff]
    %v28 = vld [vmem:[%s0 + $0x38] sm:$0xff]
    %v29 = vld [vmem:[%s0 + $0x40] sm:$0xff]
    %v30 = vld [vmem:[%s0 + $0x48] sm:$0xff]
    %v31 = vld [vmem:[%s0 + $0x50] sm:$0xff]
    %v32 = vld [vmem:[%s0 + $0x58] sm:$0xff]
    %v33 = vld [vmem:[%s0 + $0x60] sm:$0xff]
    %v34 = vld [vmem:[%s0 + $0x68] sm:$0xff]
    %v35 = vld [vmem:[%s0 + $0x70] sm:$0xff]
    %v36 = vld [vmem:[%s0 + $0x78] sm:$0xff]
    %v37 = vadd.f32 %v21, %v22
    %v38 = vadd.f32 %v37, %v23
    %v39 = vadd.f32 %v38, %v24
    %v40 = vadd.f32 %v39, %v25
    %v41 = vadd.f32 %v40, %v26
    %v42 = vadd.f32 %v41, %v27
    %v43 = vadd.f32 %v42, %v28
    %v44 = vrot.slane %v43, 4
    %v45 = vadd.f32 %v43, %v44
    %v46 = vrot.slane %v45, 2
    %v47 = vadd.f32 %v45, %v46
    %v48 = vrot.slane %v47, 1
    %v49 = vadd.f32 %v47, %v48
    %v50 = vadd.f32 %v29, %v30
    %v51 = vadd.f32 %v50, %v31
    %v52 = vadd.f32 %v51, %v32
    %v53 = vadd.f32 %v52, %v33
    %v54 = vadd.f32 %v53, %v34
    %v55 = vadd.f32 %v54, %v35
    %v56 = vadd.f32 %v55, %v36
    %v57 = vrot.slane %v56, 4
    %v58 = vadd.f32 %v56, %v57
    %v59 = vrot.slane %v58, 2
    %v60 = vadd.f32 %v58, %v59
    %v61 = vrot.slane %v60, 1
    %v62 = vadd.f32 %v60, %v61
    %v63 = vrcp.pop 64.0
    %v64 = vmul.f32 %v49, %v63
    %v65 = vmul.f32 %v62, %v63
    %v66 = vld [vmem:[%s1] sm:$0x1]
    %v67 = vld [vmem:[%s2] sm:$0x1]
    %vm70 = vcmask 1041409
    %v71 = vsel %vm70, %v65, %v64
    %vm73 = vcmask 1041408
    %v74 = vsel %vm73, %v71, 0.0
    %75 = vadd.xlane.f32.xlu0 %v74
    %v76 = vpop.xlane.xlu0 %75
    %v77 = vrcp.pop 128.0
    %v78 = vmul.f32 %v76, %v77
    %v80 = vrot.slane %v78, 1
    %v83 = vsub.f32 %v64, %v78
    %v84 = vsub.f32 %v65, %v80
    %v85 = vmul.f32 %v83, %v83
    %v86 = vmul.f32 %v84, %v84
    %v89 = vrot.slane %v86, 7
    %v90 = vsel %vm70, %v89, %v85
    %v92 = vsel %vm73, %v90, 0.0
    %93 = vadd.xlane.f32.xlu0 %v92
    %v94 = vpop.xlane.xlu0 %93
    %v95 = vmul.f32 %v94, %v77
    %v96 = vadd.f32 %v95, 1e-06
    %v97 = vrsqrt.pop %v96
    %v99 = vrot.slane %v97, 1
    %v102 = vmul.f32 %v83, %v97
    %v103 = vmul.f32 %v84, %v99
    %v105 = vlaneseq
    %v106 = vshrl.u32 %v105, 7
    %v107 = vsub.s32 0, %v106
    %v108 = vrot.slane %v66, %v107
    %v110 = vmul.f32 %v102, %v108
    %v111 = vmul.f32 %v103, %v108
    %v113 = vlaneseq
    %v114 = vshrl.u32 %v113, 7
    %v115 = vsub.s32 0, %v114
    %v116 = vrot.slane %v67, %v115
    %v118 = vadd.f32 %v110, %v116
    %v119 = vadd.f32 %v111, %v116
    %v120 = vld [vmem:[%s3] sm:$0xff]
    %v121 = vld [vmem:[%s3 + $0x8] sm:$0xff]
    %v122 = vld [vmem:[%s3 + $0x10] sm:$0xff]
    %v123 = vld [vmem:[%s3 + $0x18] sm:$0xff]
    %v124 = vld [vmem:[%s3 + $0x20] sm:$0xff]
    %v125 = vld [vmem:[%s3 + $0x28] sm:$0xff]
    %v126 = vld [vmem:[%s3 + $0x30] sm:$0xff]
    %v127 = vld [vmem:[%s3 + $0x38] sm:$0xff]
    %v128 = vld [vmem:[%s3 + $0x40] sm:$0xff]
    %v129 = vld [vmem:[%s3 + $0x48] sm:$0xff]
    %v130 = vld [vmem:[%s3 + $0x50] sm:$0xff]
    %v131 = vld [vmem:[%s3 + $0x58] sm:$0xff]
    %v132 = vld [vmem:[%s3 + $0x60] sm:$0xff]
    %v133 = vld [vmem:[%s3 + $0x68] sm:$0xff]
    %v134 = vld [vmem:[%s3 + $0x70] sm:$0xff]
    %v135 = vld [vmem:[%s3 + $0x78] sm:$0xff]
    %v136 = vld [vmem:[%s4] sm:$0x1]
    %v138 = vlaneseq
    %v139 = vshrl.u32 %v138, 7
    %v140 = vsub.s32 0, %v139
    %v141 = vrot.slane %v136, %v140
    %v145 = vrot.slane %v119, 7
    %v146 = vsel %vm70, %v145, %v118
    %148 = vmatprep.subr.mxu0 0.0
    %149 = vmatpush1.msra.mxu0 %v135
    %150 = vmatprep.subr.mxu0 0.0
    %151 = vmatpush1.msra.mxu0 %v134
    %152 = vmatprep.subr.mxu0 0.0
    %153 = vmatpush1.msra.mxu0 %v133
    %154 = vmatprep.subr.mxu0 0.0
    %155 = vmatpush1.msra.mxu0 %v132
    %156 = vmatprep.subr.mxu0 0.0
    %157 = vmatpush1.msra.mxu0 %v131
    %158 = vmatprep.subr.mxu0 0.0
    %159 = vmatpush1.msra.mxu0 %v130
    %160 = vmatprep.subr.mxu0 0.0
    %161 = vmatpush1.msra.mxu0 %v129
    %162 = vmatprep.subr.mxu0 0.0
    %163 = vmatpush1.msra.mxu0 %v128
    %164 = vmatprep.subr.mxu0 0.0
    %165 = vmatpush1.msra.mxu0 %v127
    %166 = vmatprep.subr.mxu0 0.0
    %167 = vmatpush1.msra.mxu0 %v126
    %168 = vmatprep.subr.mxu0 0.0
    %169 = vmatpush1.msra.mxu0 %v125
    %170 = vmatprep.subr.mxu0 0.0
    %171 = vmatpush1.msra.mxu0 %v124
    %172 = vmatprep.subr.mxu0 0.0
    %173 = vmatpush1.msra.mxu0 %v123
    %174 = vmatprep.subr.mxu0 0.0
    %175 = vmatpush1.msra.mxu0 %v122
    %176 = vmatprep.subr.mxu0 0.0
    %177 = vmatpush1.msra.mxu0 %v121
    %178 = vmatprep.subr.mxu0 0.0
    %179 = vmatpush1.msra.mxu0 %v120
    %180 = vmatprep.subr.mxu0 0.0
    %181 = vmatpush2.msra.mxu0 0.0
    %182 = vmatprep.subr.mxu0 0.0
    %183 = vmatpush2.msra.mxu0 0.0
    %184 = vmatprep.subr.mxu0 0.0
    %185 = vmatpush2.msra.mxu0 0.0
    %186 = vmatprep.subr.mxu0 0.0
    %187 = vmatpush2.msra.mxu0 0.0
    %188 = vmatprep.subr.mxu0 0.0
    %189 = vmatpush2.msra.mxu0 0.0
    %190 = vmatprep.subr.mxu0 0.0
    %191 = vmatpush2.msra.mxu0 0.0
    %192 = vmatprep.subr.mxu0 0.0
    %193 = vmatpush2.msra.mxu0 0.0
    %194 = vmatprep.subr.mxu0 0.0
    %195 = vmatpush2.msra.mxu0 0.0
    %196 = vmatprep.subr.mxu0 0.0
    %197 = vmatpush2.msra.mxu0 0.0
    %198 = vmatprep.subr.mxu0 0.0
    %199 = vmatpush2.msra.mxu0 0.0
    %200 = vmatprep.subr.mxu0 0.0
    %201 = vmatpush2.msra.mxu0 0.0
    %202 = vmatprep.subr.mxu0 0.0
    %203 = vmatpush2.msra.mxu0 0.0
    %204 = vmatprep.subr.mxu0 0.0
    %205 = vmatpush2.msra.mxu0 0.0
    %206 = vmatprep.subr.mxu0 0.0
    %207 = vmatpush2.msra.mxu0 0.0
    %208 = vmatprep.subr.mxu0 0.0
    %209 = vmatpush2.msra.mxu0 0.0
    %210 = vmatprep.subr.mxu0 0.0
    %211 = vmatpush2.msra.mxu0 0.0
    %212 = vmatprep.mubr.f32.mxu0 0.0
    %213 = vmatmul.mubr.f32.gmra.mxu0 %v146
    %v214 = vpop.f32.mrf.mxu0
    %v215 = vadd.f32 %v141, %v214
    %v216 = vpop.f32.mrf.mxu0
    %217 = vdwg.mxu0
    %vm218 = vcmask 74752
    %219 = vst.msk [vmem:[#allocation2] sm:$0x3] %vm218, %v215
    // Predicated region
    $region22: #{convnext_forward.7} parent=1 // pred_check
      _
    $region23: #{convnext_forward.7} parent=1 // pred_check_branch
      %221 = sbr.rel (0) target = $region25
    $region24: #{convnext_forward.7} parent=1 // pred_region
      %s223 = ssub.s32 32, 32
      %224 = vsyncadd [#allocation3], %s223
      %s226 = sshll.u32 [#allocation2], 4
      %s227 = int_to_ptr.vmem [resolvable:$true] %s226
      %229 = dma.vmem_to_hbm [thread:$0]  %s227, 32, %s5, [#allocation3]
    $region25: #{convnext_forward.7} parent=1 // pred_fallthru
      _
    // Predicated region
    $region26: #{convnext_forward.7} parent=1 // pred_check
      _
    $region27: #{convnext_forward.7} parent=1 // pred_check_branch
      %231 = sbr.rel (0) target = $region29
    $region28: #{convnext_forward.7} parent=1 // pred_region
      %232 = dma.done [#allocation3], 32
    $region29: #{convnext_forward.7} parent=1 // pred_fallthru
      _
    %233 = vsyncpa [#allocation3], 1

// kernel: convnext_forward.5
$region0: #{convnext_forward.5}
  #allocation0 [shape = 'u32[]', space=smem, size = 0x4, offset = 0x4, fixed_abs, tag = 'smem constant byte address 0x4 - core index']
  #allocation1 [shape = 'u32[144,128]{1,0:T(1,128)}', space=vmem, size = 0x12000, scoped, tag = 'internal scratch']
  #allocation2 [shape = 'f32[14,14,128]{2,1,0:T(8,128)}', space=vmem, size = 0x1c000, scoped, tag = 'scratch operand']
  %s0 = inlined_call_operand.vmem [shape: f32[2,8,8,128], index: 0, kind: input, shape index: {}, may-alias: {0,10}]
  %s1 = inlined_call_operand.vmem [shape: f32[49,128], index: 1, kind: input, shape index: {}]
  %s2 = inlined_call_operand.vmem [shape: f32[1,128], index: 2, kind: input, shape index: {}]
  %s3 = inlined_call_operand.vmem [shape: f32[1,128], index: 3, kind: input, shape index: {}]
  %s4 = inlined_call_operand.vmem [shape: f32[1,128], index: 4, kind: input, shape index: {}]
  %s5 = inlined_call_operand.vmem [shape: bf16[128,512], index: 5, kind: input, shape index: {}]
  %s6 = inlined_call_operand.vmem [shape: f32[1,512], index: 6, kind: input, shape index: {}]
  %s7 = inlined_call_operand.vmem [shape: bf16[512,128], index: 7, kind: input, shape index: {}]
  %s8 = inlined_call_operand.vmem [shape: f32[1,128], index: 8, kind: input, shape index: {}]
  %s9 = inlined_call_operand.vmem [shape: f32[1,128], index: 9, kind: input, shape index: {}]
  %s10 = inlined_call_operand.vmem [shape: f32[2,8,8,128], index: 10, kind: output, shape index: {}, may-alias: {0,10}]
  %s11 = sld [smem:[#allocation0]]
  $region73: #{convnext_forward.5} parent=0
    _
  %s13 = ssub.s32 1, %s11
  %s14 = scalar_select 0, %s13, %s11
  loop: start=0, step=1, limit=4
  $region2: #{convnext_forward.5} parent=0 // loop_pre_header
    _
  $region3: #{convnext_forward.5} parent=0 // loop_header
    %s16 = sphi 0, %s20
    %p17 = scmp.ge.s32.totalorder %s16, 4
    %s26 = sphi 0, %s28
    %s29 = sphi 0, %s26
    %s30 = sphi 0, %s29
    %s46 = sphi 0, %s30
    %s50 = sphi 0, %s50
    %s52 = sphi 0, %s50
    %s53 = sphi 0, %s52
    %s67 = sphi 0, %s53
    %s71 = sphi 0, %s71
    %s73 = sphi 0, %s71
    %s74 = sphi 0, %s73
    %s88 = sphi 0, %s74
    %s92 = sphi 0, %s92
    %s94 = sphi 0, %s92
    %s95 = sphi 0, %s94
    %s109 = sphi 0, %s95
    %s113 = sphi 0, %s113
    %s115 = sphi 0, %s113
    %s116 = sphi 0, %s115
    %s130 = sphi 0, %s116
    %s134 = sphi 0, %s134
    %s136 = sphi 0, %s134
    %s137 = sphi 0, %s136
    %s151 = sphi 0, %s137
    %s155 = sphi 0, %s155
    %s157 = sphi 0, %s155
    %s158 = sphi 0, %s157
    %s172 = sphi 0, %s158
    %s176 = sphi 0, %s176
    %s178 = sphi 0, %s176
    %s179 = sphi 0, %s178
    %s193 = sphi 0, %s179
    %s197 = sphi 0, %s197
    %s199 = sphi 0, %s197
    %s200 = sphi 0, %s199
    %s214 = sphi 0, %s200
    %s218 = sphi 0, %s218
    %s220 = sphi 0, %s218
    %s221 = sphi 0, %s220
    %s235 = sphi 0, %s221
    %s241 = sphi 0, %s243
    %s244 = sphi 0, %s241
    %s245 = sphi 0, %s244
    %s261 = sphi 0, %s245
  $region4: #{convnext_forward.5} parent=0 // loop_header_branch
    %19 = sbr.rel (%p17) target = $region8
  $region5: #{convnext_forward.5} parent=0 // loop_body
    %s21 = ssub.s32 %s16, 1
    %s22 = ssub.s32 %s16, 2
    %s23 = sadd.s32 %s16, 1
    %s24 = ssub.s32 %s16, %s23
    %p25 = scmp.eq.s32.totalorder %s24, 0
    %s27 = sadd.s32 %s26, 1
    %s28 = scalar_select %p25, %s26, %s27
    %p31 = pneg %p25
    %p32 = scmp.eq.s32.totalorder %s16, 1
    %p33 = por %p31, %p32
    %p34 = scmp.ne.s32.totalorder %s26, %s29
    %p35 = scmp.eq.s32.totalorder %s16, 0
    %p36 = por %p34, %p35
    %p37 = scmp.ne.s32.totalorder %s26, %s29
    %p38 = scmp.eq.s32.totalorder %s21, 1
    %p39 = por %p37, %p38
    %p40 = scmp.ne.s32.totalorder %s29, %s30
    %p41 = scmp.eq.s32.totalorder %s21, 0
    %p42 = por %p40, %p41
    %p43 = scmp.ne.s32.totalorder %s29, %s30
    %p44 = scmp.eq.s32.totalorder %s22, 1
    %p45 = por %p43, %p44
    %p47 = scmp.ne.s32.totalorder %s30, %s46
    %p48 = scmp.eq.s32.totalorder %s22, 0
    %p49 = por %p47, %p48
    %s51 = sadd.s32 %s50, 1
    %p54 = scmp.eq.s32.totalorder %s16, 1
    %p55 = scmp.ne.s32.totalorder %s50, %s52
    %p56 = scmp.eq.s32.totalorder %s16, 0
    %p57 = por %p55, %p56
    %p58 = scmp.ne.s32.totalorder %s50, %s52
    %p59 = scmp.eq.s32.totalorder %s21, 1
    %p60 = por %p58, %p59
    %p61 = scmp.ne.s32.totalorder %s52, %s53
    %p62 = scmp.eq.s32.totalorder %s21, 0
    %p63 = por %p61, %p62
    %p64 = scmp.ne.s32.totalorder %s52, %s53
    %p65 = scmp.eq.s32.totalorder %s22, 1
    %p66 = por %p64, %p65
    %p68 = scmp.ne.s32.totalorder %s53, %s67
    %p69 = scmp.eq.s32.totalorder %s22, 0
    %p70 = por %p68, %p69
    %s72 = sadd.s32 %s71, 1
    %p75 = scmp.eq.s32.totalorder %s16, 1
    %p76 = scmp.ne.s32.totalorder %s71, %s73
    %p77 = scmp.eq.s32.totalorder %s16, 0
    %p78 = por %p76, %p77
    %p79 = scmp.ne.s32.totalorder %s71, %s73
    %p80 = scmp.eq.s32.totalorder %s21, 1
    %p81 = por %p79, %p80
    %p82 = scmp.ne.s32.totalorder %s73, %s74
    %p83 = scmp.eq.s32.totalorder %s21, 0
    %p84 = por %p82, %p83
    %p85 = scmp.ne.s32.totalorder %s73, %s74
    %p86 = scmp.eq.s32.totalorder %s22, 1
    %p87 = por %p85, %p86
    %p89 = scmp.ne.s32.totalorder %s74, %s88
    %p90 = scmp.eq.s32.totalorder %s22, 0
    %p91 = por %p89, %p90
    %s93 = sadd.s32 %s92, 1
    %p96 = scmp.eq.s32.totalorder %s16, 1
    %p97 = scmp.ne.s32.totalorder %s92, %s94
    %p98 = scmp.eq.s32.totalorder %s16, 0
    %p99 = por %p97, %p98
    %p100 = scmp.ne.s32.totalorder %s92, %s94
    %p101 = scmp.eq.s32.totalorder %s21, 1
    %p102 = por %p100, %p101
    %p103 = scmp.ne.s32.totalorder %s94, %s95
    %p104 = scmp.eq.s32.totalorder %s21, 0
    %p105 = por %p103, %p104
    %p106 = scmp.ne.s32.totalorder %s94, %s95
    %p107 = scmp.eq.s32.totalorder %s22, 1
    %p108 = por %p106, %p107
    %p110 = scmp.ne.s32.totalorder %s95, %s109
    %p111 = scmp.eq.s32.totalorder %s22, 0
    %p112 = por %p110, %p111
    %s114 = sadd.s32 %s113, 1
    %p117 = scmp.eq.s32.totalorder %s16, 1
    %p118 = scmp.ne.s32.totalorder %s113, %s115
    %p119 = scmp.eq.s32.totalorder %s16, 0
    %p120 = por %p118, %p119
    %p121 = scmp.ne.s32.totalorder %s113, %s115
    %p122 = scmp.eq.s32.totalorder %s21, 1
    %p123 = por %p121, %p122
    %p124 = scmp.ne.s32.totalorder %s115, %s116
    %p125 = scmp.eq.s32.totalorder %s21, 0
    %p126 = por %p124, %p125
    %p127 = scmp.ne.s32.totalorder %s115, %s116
    %p128 = scmp.eq.s32.totalorder %s22, 1
    %p129 = por %p127, %p128
    %p131 = scmp.ne.s32.totalorder %s116, %s130
    %p132 = scmp.eq.s32.totalorder %s22, 0
    %p133 = por %p131, %p132
    %s135 = sadd.s32 %s134, 1
    %p138 = scmp.eq.s32.totalorder %s16, 1
    %p139 = scmp.ne.s32.totalorder %s134, %s136
    %p140 = scmp.eq.s32.totalorder %s16, 0
    %p141 = por %p139, %p140
    %p142 = scmp.ne.s32.totalorder %s134, %s136
    %p143 = scmp.eq.s32.totalorder %s21, 1
    %p144 = por %p142, %p143
    %p145 = scmp.ne.s32.totalorder %s136, %s137
    %p146 = scmp.eq.s32.totalorder %s21, 0
    %p147 = por %p145, %p146
    %p148 = scmp.ne.s32.totalorder %s136, %s137
    %p149 = scmp.eq.s32.totalorder %s22, 1
    %p150 = por %p148, %p149
    %p152 = scmp.ne.s32.totalorder %s137, %s151
    %p153 = scmp.eq.s32.totalorder %s22, 0
    %p154 = por %p152, %p153
    %s156 = sadd.s32 %s155, 1
    %p159 = scmp.eq.s32.totalorder %s16, 1
    %p160 = scmp.ne.s32.totalorder %s155, %s157
    %p161 = scmp.eq.s32.totalorder %s16, 0
    %p162 = por %p160, %p161
    %p163 = scmp.ne.s32.totalorder %s155, %s157
    %p164 = scmp.eq.s32.totalorder %s21, 1
    %p165 = por %p163, %p164
    %p166 = scmp.ne.s32.totalorder %s157, %s158
    %p167 = scmp.eq.s32.totalorder %s21, 0
    %p168 = por %p166, %p167
    %p169 = scmp.ne.s32.totalorder %s157, %s158
    %p170 = scmp.eq.s32.totalorder %s22, 1
    %p171 = por %p169, %p170
    %p173 = scmp.ne.s32.totalorder %s158, %s172
    %p174 = scmp.eq.s32.totalorder %s22, 0
    %p175 = por %p173, %p174
    %s177 = sadd.s32 %s176, 1
    %p180 = scmp.eq.s32.totalorder %s16, 1
    %p181 = scmp.ne.s32.totalorder %s176, %s178
    %p182 = scmp.eq.s32.totalorder %s16, 0
    %p183 = por %p181, %p182
    %p184 = scmp.ne.s32.totalorder %s176, %s178
    %p185 = scmp.eq.s32.totalorder %s21, 1
    %p186 = por %p184, %p185
    %p187 = scmp.ne.s32.totalorder %s178, %s179
    %p188 = scmp.eq.s32.totalorder %s21, 0
    %p189 = por %p187, %p188
    %p190 = scmp.ne.s32.totalorder %s178, %s179
    %p191 = scmp.eq.s32.totalorder %s22, 1
    %p192 = por %p190, %p191
    %p194 = scmp.ne.s32.totalorder %s179, %s193
    %p195 = scmp.eq.s32.totalorder %s22, 0
    %p196 = por %p194, %p195
    %s198 = sadd.s32 %s197, 1
    %p201 = scmp.eq.s32.totalorder %s16, 1
    %p202 = scmp.ne.s32.totalorder %s197, %s199
    %p203 = scmp.eq.s32.totalorder %s16, 0
    %p204 = por %p202, %p203
    %p205 = scmp.ne.s32.totalorder %s197, %s199
    %p206 = scmp.eq.s32.totalorder %s21, 1
    %p207 = por %p205, %p206
    %p208 = scmp.ne.s32.totalorder %s199, %s200
    %p209 = scmp.eq.s32.totalorder %s21, 0
    %p210 = por %p208, %p209
    %p211 = scmp.ne.s32.totalorder %s199, %s200
    %p212 = scmp.eq.s32.totalorder %s22, 1
    %p213 = por %p211, %p212
    %p215 = scmp.ne.s32.totalorder %s200, %s214
    %p216 = scmp.eq.s32.totalorder %s22, 0
    %p217 = por %p215, %p216
    %s219 = sadd.s32 %s218, 1
    %p222 = scmp.eq.s32.totalorder %s16, 1
    %p223 = scmp.ne.s32.totalorder %s218, %s220
    %p224 = scmp.eq.s32.totalorder %s16, 0
    %p225 = por %p223, %p224
    %p226 = scmp.ne.s32.totalorder %s218, %s220
    %p227 = scmp.eq.s32.totalorder %s21, 1
    %p228 = por %p226, %p227
    %p229 = scmp.ne.s32.totalorder %s220, %s221
    %p230 = scmp.eq.s32.totalorder %s21, 0
    %p231 = por %p229, %p230
    %p232 = scmp.ne.s32.totalorder %s220, %s221
    %p233 = scmp.eq.s32.totalorder %s22, 1
    %p234 = por %p232, %p233
    %p236 = scmp.ne.s32.totalorder %s221, %s235
    %p237 = scmp.eq.s32.totalorder %s22, 0
    %p238 = por %p236, %p237
    %s239 = ssub.s32 %s16, %s23
    %p240 = scmp.eq.s32.totalorder %s239, 0
    %s242 = sadd.s32 %s241, 1
    %s243 = scalar_select %p240, %s241, %s242
    %p246 = pneg %p240
    %p247 = scmp.eq.s32.totalorder %s16, 1
    %p248 = por %p246, %p247
    %p249 = scmp.ne.s32.totalorder %s241, %s244
    %p250 = scmp.eq.s32.totalorder %s16, 0
    %p251 = por %p249, %p250
    %p252 = scmp.ne.s32.totalorder %s241, %s244
    %p253 = scmp.eq.s32.totalorder %s21, 1
    %p254 = por %p252, %p253
    %p255 = scmp.ne.s32.totalorder %s244, %s245
    %p256 = scmp.eq.s32.totalorder %s21, 0
    %p257 = por %p255, %p256
    %p258 = scmp.ne.s32.totalorder %s244, %s245
    %p259 = scmp.eq.s32.totalorder %s22, 1
    %p260 = por %p258, %p259
    %p262 = scmp.ne.s32.totalorder %s245, %s261
    %p263 = scmp.eq.s32.totalorder %s22, 0
    %p264 = por %p262, %p263
    %p265 = scmp.le.s32.totalorder 1, %s16
    %p266 = scmp.lt.s32.totalorder %s16, 3
    %p267 = pnand %p265, %p266
    %p268 = pneg %p267
    // Predicated region
    $region9: #{convnext_forward.5} parent=5 // pred_check
      _
    $region10: #{convnext_forward.5} parent=5 // pred_check_branch
      %270 = sbr.rel (%p267) target = $region12
    $region11: #{convnext_forward.5} parent=5 // pred_region
      %s271 = ssub.s32 %s16, 1
      // Predicated region
      $region13: #{convnext_forward.5} parent=11 // pred_check
        %p272 = pneg %p63
      $region14: #{convnext_forward.5} parent=11 // pred_check_branch
        %274 = sbr.rel (%p272) target = $region16
      $region15: #{convnext_forward.5} parent=11 // pred_region
        _
      $region16: #{convnext_forward.5} parent=11 // pred_fallthru
        _
      // Predicated region
      $region17: #{convnext_forward.5} parent=11 // pred_check
        %p275 = pneg %p84
      $region18: #{convnext_forward.5} parent=11 // pred_check_branch
        %277 = sbr.rel (%p275) target = $region20
      $region19: #{convnext_forward.5} parent=11 // pred_region
        _
      $region20: #{convnext_forward.5} parent=11 // pred_fallthru
        _
      // Predicated region
      $region21: #{convnext_forward.5} parent=11 // pred_check
        %p278 = pneg %p105
      $region22: #{convnext_forward.5} parent=11 // pred_check_branch
        %280 = sbr.rel (%p278) target = $region24
      $region23: #{convnext_forward.5} parent=11 // pred_region
        _
      $region24: #{convnext_forward.5} parent=11 // pred_fallthru
        _
      // Predicated region
      $region25: #{convnext_forward.5} parent=11 // pred_check
        %p281 = pneg %p126
      $region26: #{convnext_forward.5} parent=11 // pred_check_branch
        %283 = sbr.rel (%p281) target = $region28
      $region27: #{convnext_forward.5} parent=11 // pred_region
        _
      $region28: #{convnext_forward.5} parent=11 // pred_fallthru
        _
      // Predicated region
      $region29: #{convnext_forward.5} parent=11 // pred_check
        %p284 = pneg %p147
      $region30: #{convnext_forward.5} parent=11 // pred_check_branch
        %286 = sbr.rel (%p284) target = $region32
      $region31: #{convnext_forward.5} parent=11 // pred_region
        _
      $region32: #{convnext_forward.5} parent=11 // pred_fallthru
        _
      // Predicated region
      $region33: #{convnext_forward.5} parent=11 // pred_check
        %p287 = pneg %p168
      $region34: #{convnext_forward.5} parent=11 // pred_check_branch
        %289 = sbr.rel (%p287) target = $region36
      $region35: #{convnext_forward.5} parent=11 // pred_region
        _
      $region36: #{convnext_forward.5} parent=11 // pred_fallthru
        _
      // Predicated region
      $region37: #{convnext_forward.5} parent=11 // pred_check
        %p290 = pneg %p189
      $region38: #{convnext_forward.5} parent=11 // pred_check_branch
        %292 = sbr.rel (%p290) target = $region40
      $region39: #{convnext_forward.5} parent=11 // pred_region
        _
      $region40: #{convnext_forward.5} parent=11 // pred_fallthru
        _
      // Predicated region
      $region41: #{convnext_forward.5} parent=11 // pred_check
        %p293 = pneg %p210
      $region42: #{convnext_forward.5} parent=11 // pred_check_branch
        %295 = sbr.rel (%p293) target = $region44
      $region43: #{convnext_forward.5} parent=11 // pred_region
        _
      $region44: #{convnext_forward.5} parent=11 // pred_fallthru
        _
      // Predicated region
      $region45: #{convnext_forward.5} parent=11 // pred_check
        %p296 = pneg %p231
      $region46: #{convnext_forward.5} parent=11 // pred_check_branch
        %298 = sbr.rel (%p296) target = $region48
      $region47: #{convnext_forward.5} parent=11 // pred_region
        _
      $region48: #{convnext_forward.5} parent=11 // pred_fallthru
        _
    $region12: #{convnext_forward.5} parent=5 // pred_fallthru
      _
    %p299 = scmp.lt.s32.totalorder %s16, 2
    // Predicated region
    $region49: #{convnext_forward.5} parent=5 // pred_check
      %p300 = pneg %p299
    $region50: #{convnext_forward.5} parent=5 // pred_check_branch
      %302 = sbr.rel (%p300) target = $region52
    $region51: #{convnext_forward.5} parent=5 // pred_region
      // Predicated region
      $region53: #{convnext_forward.5} parent=51 // pred_check
        %p303 = pneg %p36
      $region54: #{convnext_forward.5} parent=51 // pred_check_branch
        %305 = sbr.rel (%p303) target = $region56
      $region55: #{convnext_forward.5} parent=51 // pred_region
        %p306 = scmp.lt.s32.totalorder %s16, 1
        %s307 = scalar_select %p306, %s16, 1
        %s308 = smul.addr %s307, 8
        %s309 = smul.addr %s308, 8
        %s310 = scalar_lea.vmem %s0, %s309
      $region56: #{convnext_forward.5} parent=51 // pred_fallthru
        _
    $region52: #{convnext_forward.5} parent=5 // pred_fallthru
      _
    %p311 = scmp.le.s32.totalorder 1, %s16
    %p312 = scmp.lt.s32.totalorder %s16, 3
    %p313 = pnand %p311, %p312
    %p314 = pneg %p313
    // Predicated region
    $region57: #{convnext_forward.5} parent=5 // pred_check
      _
    $region58: #{convnext_forward.5} parent=5 // pred_check_branch
      %316 = sbr.rel (%p313) target = $region60
    $region59: #{convnext_forward.5} parent=5 // pred_region
      %s317 = ssub.s32 %s16, 1
      %p318 = scmp.lt.s32.totalorder %s21, 1
      %s319 = scalar_select %p318, %s21, 1
      %s320 = smul.addr %s319, 8
      %s321 = smul.addr %s320, 8
      %s322 = scalar_lea.vmem %s0, %s321
      %p323 = pneg %p42
      %p324 = pneg %p39
      %p325 = pneg %p63
      %p326 = pneg %p60
      %p327 = pneg %p84
      %p328 = pneg %p81
      %p329 = pneg %p105
      %p330 = pneg %p102
      %p331 = pneg %p126
      %p332 = pneg %p123
      %p333 = pneg %p147
      %p334 = pneg %p144
      %p335 = pneg %p168
      %p336 = pneg %p165
      %p337 = pneg %p189
      %p338 = pneg %p186
      %p339 = pneg %p210
      %p340 = pneg %p207
      %p341 = pneg %p231
      %p342 = pneg %p228
      %p343 = pneg %p257
      %p344 = pneg %p254
      %p345 = scmp.lt.s32.totalorder %s21, 1
      %s346 = scalar_select %p345, %s21, 1
      %s347 = smul.addr %s346, 8
      %s348 = smul.addr %s347, 8
      %s349 = scalar_lea.vmem %s10, %s348
      %p350 = scmp.lt.s32.totalorder %s21, 1
      %s351 = scalar_select %p350, %s21, 1
      %s352 = smul.addr %s351, 8
      %s353 = smul.addr %s352, 8
      %s354 = scalar_lea.vmem %s0, %s353
      %p355 = scmp.lt.s32.totalorder %s21, 1
      %s356 = scalar_select %p355, %s21, 1
      %s357 = smul.addr %s356, 8
      %s358 = smul.addr %s357, 8
      %s359 = scalar_lea.vmem %s10, %s358
      %361 = vst [vmem:[#allocation2] sm:$0xff] 0.0
      %362 = vst [vmem:[#allocation2 + $0x8] sm:$0x3f] 0.0
      %363 = vst [vmem:[#allocation2 + $0x10] sm:$0xff] 0.0
      %364 = vst [vmem:[#allocation2 + $0x18] sm:$0x3f] 0.0
      %365 = vst [vmem:[#allocation2 + $0x20] sm:$0xff] 0.0
      %366 = vst [vmem:[#allocation2 + $0x28] sm:$0x3f] 0.0
      %367 = vst [vmem:[#allocation2 + $0x30] sm:$0xff] 0.0
      %368 = vst [vmem:[#allocation2 + $0x38] sm:$0x3f] 0.0
      %369 = vst [vmem:[#allocation2 + $0x40] sm:$0xff] 0.0
      %370 = vst [vmem:[#allocation2 + $0x48] sm:$0x3f] 0.0
      %371 = vst [vmem:[#allocation2 + $0x50] sm:$0xff] 0.0
      %372 = vst [vmem:[#allocation2 + $0x58] sm:$0x3f] 0.0
      %373 = vst [vmem:[#allocation2 + $0x60] sm:$0xff] 0.0
      %374 = vst [vmem:[#allocation2 + $0x68] sm:$0x3f] 0.0
      %375 = vst [vmem:[#allocation2 + $0x70] sm:$0xff] 0.0
      %376 = vst [vmem:[#allocation2 + $0x78] sm:$0x3f] 0.0
      %377 = vst [vmem:[#allocation2 + $0x80] sm:$0xff] 0.0
      %378 = vst [vmem:[#allocation2 + $0x88] sm:$0x3f] 0.0
      %379 = vst [vmem:[#allocation2 + $0x90] sm:$0xff] 0.0
      %380 = vst [vmem:[#allocation2 + $0x98] sm:$0x3f] 0.0
      %381 = vst [vmem:[#allocation2 + $0xa0] sm:$0xff] 0.0
      %382 = vst [vmem:[#allocation2 + $0xa8] sm:$0x3f] 0.0
      %383 = vst [vmem:[#allocation2 + $0xb0] sm:$0xff] 0.0
      %384 = vst [vmem:[#allocation2 + $0xb8] sm:$0x3f] 0.0
      %385 = vst [vmem:[#allocation2 + $0xc0] sm:$0xff] 0.0
      %386 = vst [vmem:[#allocation2 + $0xc8] sm:$0x3f] 0.0
      %387 = vst [vmem:[#allocation2 + $0xd0] sm:$0xff] 0.0
      %388 = vst [vmem:[#allocation2 + $0xd8] sm:$0x3f] 0.0
      %v389 = vld [vmem:[%s354] sm:$0xff]
      %v390 = vld [vmem:[%s354 + $0x8] sm:$0xff]
      %v391 = vld [vmem:[%s354 + $0x10] sm:$0xff]
      %v392 = vld [vmem:[%s354 + $0x18] sm:$0xff]
      %v393 = vld [vmem:[%s354 + $0x20] sm:$0xff]
      %v394 = vld [vmem:[%s354 + $0x28] sm:$0xff]
      %v395 = vld [vmem:[%s354 + $0x30] sm:$0xff]
      %v396 = vld [vmem:[%s354 + $0x38] sm:$0xff]
      %s397 = scalar_lea.vmem [#allocation2], 48
      %398 = vst [vmem:[%s397 + $0x3] sm:$0xff] %v389
      %399 = vst [vmem:[%s397 + $0x13] sm:$0xff] %v390
      %400 = vst [vmem:[%s397 + $0x23] sm:$0xff] %v391
      %401 = vst [vmem:[%s397 + $0x33] sm:$0xff] %v392
      %402 = vst [vmem:[%s397 + $0x43] sm:$0xff] %v393
      %403 = vst [vmem:[%s397 + $0x53] sm:$0xff] %v394
      %404 = vst [vmem:[%s397 + $0x63] sm:$0xff] %v395
      %405 = vst [vmem:[%s397 + $0x73] sm:$0xff] %v396
      %v406 = vld [vmem:[%s1] sm:$0x1]
      %v407 = vld [vmem:[#allocation2] sm:$0xff]
      %v408 = vld [vmem:[#allocation2 + $0x10] sm:$0xff]
      %v409 = vld [vmem:[#allocation2 + $0x20] sm:$0xff]
      %v410 = vld [vmem:[#allocation2 + $0x30] sm:$0xff]
      %v411 = vld [vmem:[#allocation2 + $0x40] sm:$0xff]
      %v412 = vld [vmem:[#allocation2 + $0x50] sm:$0xff]
      %v413 = vld [vmem:[#allocation2 + $0x60] sm:$0xff]
      %v414 = vld [vmem:[#allocation2 + $0x70] sm:$0xff]
      %v415 = vlaneseq
      %v416 = vshrl.u32 %v415, 7
      %v417 = vsub.s32 0, %v416
      %v418 = vrot.slane %v406, %v417
      %v419 = vmul.f32 %v407, %v418
      %v420 = vmul.f32 %v408, %v418
      %v421 = vmul.f32 %v409, %v418
      %v422 = vmul.f32 %v410, %v418
      %v423 = vmul.f32 %v411, %v418
      %v424 = vmul.f32 %v412, %v418
      %v425 = vmul.f32 %v413, %v418
      %v426 = vmul.f32 %v414, %v418
      %v427 = vadd.f32 %v419, 0.0
      %v428 = vadd.f32 %v420, 0.0
      %v429 = vadd.f32 %v421, 0.0
      %v430 = vadd.f32 %v422, 0.0
      %v431 = vadd.f32 %v423, 0.0
      %v432 = vadd.f32 %v424, 0.0
      %v433 = vadd.f32 %v425, 0.0
      %v434 = vadd.f32 %v426, 0.0
      %v435 = vld [vmem:[%s1 + $0x1] sm:$0x1]
      %v436 = vld [vmem:[#allocation2 + $0x1] sm:$0xff]
      %v437 = vld [vmem:[#allocation2 + $0x11] sm:$0xff]
      %v438 = vld [vmem:[#allocation2 + $0x21] sm:$0xff]
      %v439 = vld [vmem:[#allocation2 + $0x31] sm:$0xff]
      %v440 = vld [vmem:[#allocation2 + $0x41] sm:$0xff]
      %v441 = vld [vmem:[#allocation2 + $0x51] sm:$0xff]
      %v442 = vld [vmem:[#allocation2 + $0x61] sm:$0xff]
      %v443 = vld [vmem:[#allocation2 + $0x71] sm:$0xff]
      %v444 = vlaneseq
      %v445 = vshrl.u32 %v444, 7
      %v446 = vsub.s32 0, %v445
      %v447 = vrot.slane %v435, %v446
      %v448 = vmul.f32 %v436, %v447
      %v449 = vmul.f32 %v437, %v447
      %v450 = vmul.f32 %v438, %v447
      %v451 = vmul.f32 %v439, %v447
      %v452 = vmul.f32 %v440, %v447
      %v453 = vmul.f32 %v441, %v447
      %v454 = vmul.f32 %v442, %v447
      %v455 = vmul.f32 %v443, %v447
      %v456 = vadd.f32 %v427, %v448
      %v457 = vadd.f32 %v428, %v449
      %v458 = vadd.f32 %v429, %v450
      %v459 = vadd.f32 %v430, %v451
      %v460 = vadd.f32 %v431, %v452
      %v461 = vadd.f32 %v432, %v453
      %v462 = vadd.f32 %v433, %v454
      %v463 = vadd.f32 %v434, %v455
      %v464 = vld [vmem:[%s1 + $0x2] sm:$0x1]
      %v465 = vld [vmem:[#allocation2 + $0x2] sm:$0xff]
      %v466 = vld [vmem:[#allocation2 + $0x12] sm:$0xff]
      %v467 = vld [vmem:[#allocation2 + $0x22] sm:$0xff]
      %v468 = vld [vmem:[#allocation2 + $0x32] sm:$0xff]
      %v469 = vld [vmem:[#allocation2 + $0x42] sm:$0xff]
      %v470 = vld [vmem:[#allocation2 + $0x52] sm:$0xff]
      %v471 = vld [vmem:[#allocation2 + $0x62] sm:$0xff]
      %v472 = vld [vmem:[#allocation2 + $0x72] sm:$0xff]
      %v473 = vlaneseq
      %v474 = vshrl.u32 %v473, 7
      %v475 = vsub.s32 0, %v474
      %v476 = vrot.slane %v464, %v475
      %v477 = vmul.f32 %v465, %v476
      %v478 = vmul.f32 %v466, %v476
      %v479 = vmul.f32 %v467, %v476
      %v480 = vmul.f32 %v468, %v476
      %v481 = vmul.f32 %v469, %v476
      %v482 = vmul.f32 %v470, %v476
      %v483 = vmul.f32 %v471, %v476
      %v484 = vmul.f32 %v472, %v476
      %v485 = vadd.f32 %v456, %v477
      %v486 = vadd.f32 %v457, %v478
      %v487 = vadd.f32 %v458, %v479
      %v488 = vadd.f32 %v459, %v480
      %v489 = vadd.f32 %v460, %v481
      %v490 = vadd.f32 %v461, %v482
      %v491 = vadd.f32 %v462, %v483
      %v492 = vadd.f32 %v463, %v484
      %v493 = vld [vmem:[%s1 + $0x3] sm:$0x1]
      %v494 = vld [vmem:[#allocation2 + $0x3] sm:$0xff]
      %v495 = vld [vmem:[#allocation2 + $0x13] sm:$0xff]
      %v496 = vld [vmem:[#allocation2 + $0x23] sm:$0xff]
      %v497 = vld [vmem:[#allocation2 + $0x33] sm:$0xff]
      %v498 = vld [vmem:[#allocation2 + $0x43] sm:$0xff]
      %v499 = vld [vmem:[#allocation2 + $0x53] sm:$0xff]
      %v500 = vld [vmem:[#allocation2 + $0x63] sm:$0xff]
      %v501 = vld [vmem:[#allocation2 + $0x73] sm:$0xff]
      %v502 = vlaneseq
      %v503 = vshrl.u32 %v502, 7
      %v504 = vsub.s32 0, %v503
      %v505 = vrot.slane %v493, %v504
      %v506 = vmul.f32 %v494, %v505
      %v507 = vmul.f32 %v495, %v505
      %v508 = vmul.f32 %v496, %v505
      %v509 = vmul.f32 %v497, %v505
      %v510 = vmul.f32 %v498, %v505
      %v511 = vmul.f32 %v499, %v505
      %v512 = vmul.f32 %v500, %v505
      %v513 = vmul.f32 %v501, %v505
      %v514 = vadd.f32 %v485, %v506
      %v515 = vadd.f32 %v486, %v507
      %v516 = vadd.f32 %v487, %v508
      %v517 = vadd.f32 %v488, %v509
      %v518 = vadd.f32 %v489, %v510
      %v519 = vadd.f32 %v490, %v511
      %v520 = vadd.f32 %v491, %v512
      %v521 = vadd.f32 %v492, %v513
      %v522 = vld [vmem:[%s1 + $0x4] sm:$0x1]
      %v523 = vld [vmem:[#allocation2 + $0x4] sm:$0xff]
      %v524 = vld [vmem:[#allocation2 + $0x14] sm:$0xff]
      %v525 = vld [vmem:[#allocation2 + $0x24] sm:$0xff]
      %v526 = vld [vmem:[#allocation2 + $0x34] sm:$0xff]
      %v527 = vld [vmem:[#allocation2 + $0x44] sm:$0xff]
      %v528 = vld [vmem:[#allocation2 + $0x54] sm:$0xff]
      %v529 = vld [vmem:[#allocation2 + $0x64] sm:$0xff]
      %v530 = vld [vmem:[#allocation2 + $0x74] sm:$0xff]
      %v531 = vlaneseq
      %v532 = vshrl.u32 %v531, 7
      %v533 = vsub.s32 0, %v532
      %v534 = vrot.slane %v522, %v533
      %v535 = vmul.f32 %v523, %v534
      %v536 = vmul.f32 %v524, %v534
      %v537 = vmul.f32 %v525, %v534
      %v538 = vmul.f32 %v526, %v534
      %v539 = vmul.f32 %v527, %v534
      %v540 = vmul.f32 %v528, %v534
      %v541 = vmul.f32 %v529, %v534
      %v542 = vmul.f32 %v530, %v534
      %v543 = vadd.f32 %v514, %v535
      %v544 = vadd.f32 %v515, %v536
      %v545 = vadd.f32 %v516, %v537
      %v546 = vadd.f32 %v517, %v538
      %v547 = vadd.f32 %v518, %v539
      %v548 = vadd.f32 %v519, %v540
      %v549 = vadd.f32 %v520, %v541
      %v550 = vadd.f32 %v521, %v542
      %v551 = vld [vmem:[%s1 + $0x5] sm:$0x1]
      %v552 = vld [vmem:[#allocation2 + $0x5] sm:$0xff]
      %v553 = vld [vmem:[#allocation2 + $0x15] sm:$0xff]
      %v554 = vld [vmem:[#allocation2 + $0x25] sm:$0xff]
      %v555 = vld [vmem:[#allocation2 + $0x35] sm:$0xff]
      %v556 = vld [vmem:[#allocation2 + $0x45] sm:$0xff]
      %v557 = vld [vmem:[#allocation2 + $0x55] sm:$0xff]
      %v558 = vld [vmem:[#allocation2 + $0x65] sm:$0xff]
      %v559 = vld [vmem:[#allocation2 + $0x75] sm:$0xff]
      %v560 = vlaneseq
      %v561 = vshrl.u32 %v560, 7
      %v562 = vsub.s32 0, %v561
      %v563 = vrot.slane %v551, %v562
      %v564 = vmul.f32 %v552, %v563
      %v565 = vmul.f32 %v553, %v563
      %v566 = vmul.f32 %v554, %v563
      %v567 = vmul.f32 %v555, %v563
      %v568 = vmul.f32 %v556, %v563
      %v569 = vmul.f32 %v557, %v563
      %v570 = vmul.f32 %v558, %v563
      %v571 = vmul.f32 %v559, %v563
      %v572 = vadd.f32 %v543, %v564
      %v573 = vadd.f32 %v544, %v565
      %v574 = vadd.f32 %v545, %v566
      %v575 = vadd.f32 %v546, %v567
      %v576 = vadd.f32 %v547, %v568
      %v577 = vadd.f32 %v548, %v569
      %v578 = vadd.f32 %v549, %v570
      %v579 = vadd.f32 %v550, %v571
      %v580 = vld [vmem:[%s1 + $0x6] sm:$0x1]
      %v581 = vld [vmem:[#allocation2 + $0x6] sm:$0xff]
      %v582 = vld [vmem:[#allocation2 + $0x16] sm:$0xff]
      %v583 = vld [vmem:[#allocation2 + $0x26] sm:$0xff]
      %v584 = vld [vmem:[#allocation2 + $0x36] sm:$0xff]
      %v585 = vld [vmem:[#allocation2 + $0x46] sm:$0xff]
      %v586 = vld [vmem:[#allocation2 + $0x56] sm:$0xff]
      %v587 = vld [vmem:[#allocation2 + $0x66] sm:$0xff]
      %v588 = vld [vmem:[#allocation2 + $0x76] sm:$0xff]
      %v589 = vlaneseq
      %v590 = vshrl.u32 %v589, 7
      %v591 = vsub.s32 0, %v590
      %v592 = vrot.slane %v580, %v591
      %v593 = vmul.f32 %v581, %v592
      %v594 = vmul.f32 %v582, %v592
      %v595 = vmul.f32 %v583, %v592
      %v596 = vmul.f32 %v584, %v592
      %v597 = vmul.f32 %v585, %v592
      %v598 = vmul.f32 %v586, %v592
      %v599 = vmul.f32 %v587, %v592
      %v600 = vmul.f32 %v588, %v592
      %v601 = vadd.f32 %v572, %v593
      %v602 = vadd.f32 %v573, %v594
      %v603 = vadd.f32 %v574, %v595
      %v604 = vadd.f32 %v575, %v596
      %v605 = vadd.f32 %v576, %v597
      %v606 = vadd.f32 %v577, %v598
      %v607 = vadd.f32 %v578, %v599
      %v608 = vadd.f32 %v579, %v600
      %v609 = vld [vmem:[%s1 + $0x7] sm:$0x1]
      %s610 = scalar_lea.vmem [#allocation2], 16
      %v611 = vld [vmem:[%s610] sm:$0xff]
      %v612 = vld [vmem:[%s610 + $0x10] sm:$0xff]
      %v613 = vld [vmem:[%s610 + $0x20] sm:$0xff]
      %v614 = vld [vmem:[%s610 + $0x30] sm:$0xff]
      %v615 = vld [vmem:[%s610 + $0x40] sm:$0xff]
      %v616 = vld [vmem:[%s610 + $0x50] sm:$0xff]
      %v617 = vld [vmem:[%s610 + $0x60] sm:$0xff]
      %v618 = vld [vmem:[%s610 + $0x70] sm:$0xff]
      %v619 = vlaneseq
      %v620 = vshrl.u32 %v619, 7
      %v621 = vsub.s32 0, %v620
      %v622 = vrot.slane %v609, %v621
      %v623 = vmul.f32 %v611, %v622
      %v624 = vmul.f32 %v612, %v622
      %v625 = vmul.f32 %v613, %v622
      %v626 = vmul.f32 %v614, %v622
      %v627 = vmul.f32 %v615, %v622
      %v628 = vmul.f32 %v616, %v622
      %v629 = vmul.f32 %v617, %v622
      %v630 = vmul.f32 %v618, %v622
      %v631 = vadd.f32 %v601, %v623
      %v632 = vadd.f32 %v602, %v624
      %v633 = vadd.f32 %v603, %v625
      %v634 = vadd.f32 %v604, %v626
      %v635 = vadd.f32 %v605, %v627
      %v636 = vadd.f32 %v606, %v628
      %v637 = vadd.f32 %v607, %v629
      %v638 = vadd.f32 %v608, %v630
      %v639 = vld [vmem:[%s1 + $0x8] sm:$0x1]
      %v640 = vld [vmem:[%s610 + $0x1] sm:$0xff]
      %v641 = vld [vmem:[%s610 + $0x11] sm:$0xff]
      %v642 = vld [vmem:[%s610 + $0x21] sm:$0xff]
      %v643 = vld [vmem:[%s610 + $0x31] sm:$0xff]
      %v644 = vld [vmem:[%s610 + $0x41] sm:$0xff]
      %v645 = vld [vmem:[%s610 + $0x51] sm:$0xff]
      %v646 = vld [vmem:[%s610 + $0x61] sm:$0xff]
      %v647 = vld [vmem:[%s610 + $0x71] sm:$0xff]
      %v648 = vlaneseq
      %v649 = vshrl.u32 %v648, 7
      %v650 = vsub.s32 0, %v649
      %v651 = vrot.slane %v639, %v650
      %v652 = vmul.f32 %v640, %v651
      %v653 = vmul.f32 %v641, %v651
      %v654 = vmul.f32 %v642, %v651
      %v655 = vmul.f32 %v643, %v651
      %v656 = vmul.f32 %v644, %v651
      %v657 = vmul.f32 %v645, %v651
      %v658 = vmul.f32 %v646, %v651
      %v659 = vmul.f32 %v647, %v651
      %v660 = vadd.f32 %v631, %v652
      %v661 = vadd.f32 %v632, %v653
      %v662 = vadd.f32 %v633, %v654
      %v663 = vadd.f32 %v634, %v655
      %v664 = vadd.f32 %v635, %v656
      %v665 = vadd.f32 %v636, %v657
      %v666 = vadd.f32 %v637, %v658
      %v667 = vadd.f32 %v638, %v659
      %v668 = vld [vmem:[%s1 + $0x9] sm:$0x1]
      %v669 = vld [vmem:[%s610 + $0x2] sm:$0xff]
      %v670 = vld [vmem:[%s610 + $0x12] sm:$0xff]
      %v671 = vld [vmem:[%s610 + $0x22] sm:$0xff]
      %v672 = vld [vmem:[%s610 + $0x32] sm:$0xff]
      %v673 = vld [vmem:[%s610 + $0x42] sm:$0xff]
      %v674 = vld [vmem:[%s610 + $0x52] sm:$0xff]
      %v675 = vld [vmem:[%s610 + $0x62] sm:$0xff]
      %v676 = vld [vmem:[%s610 + $0x72] sm:$0xff]
      %v677 = vlaneseq
      %v678 = vshrl.u32 %v677, 7
      %v679 = vsub.s32 0, %v678
      %v680 = vrot.slane %v668, %v679
      %v681 = vmul.f32 %v669, %v680
      %v682 = vmul.f32 %v670, %v680
      %v683 = vmul.f32 %v671, %v680
      %v684 = vmul.f32 %v672, %v680
      %v685 = vmul.f32 %v673, %v680
      %v686 = vmul.f32 %v674, %v680
      %v687 = vmul.f32 %v675, %v680
      %v688 = vmul.f32 %v676, %v680
      %v689 = vadd.f32 %v660, %v681
      %v690 = vadd.f32 %v661, %v682
      %v691 = vadd.f32 %v662, %v683
      %v692 = vadd.f32 %v663, %v684
      %v693 = vadd.f32 %v664, %v685
      %v694 = vadd.f32 %v665, %v686
      %v695 = vadd.f32 %v666, %v687
      %v696 = vadd.f32 %v667, %v688
      %v697 = vld [vmem:[%s1 + $0xa] sm:$0x1]
      %v698 = vld [vmem:[%s610 + $0x3] sm:$0xff]
      %v699 = vld [vmem:[%s610 + $0x13] sm:$0xff]
      %v700 = vld [vmem:[%s610 + $0x23] sm:$0xff]
      %v701 = vld [vmem:[%s610 + $0x33] sm:$0xff]
      %v702 = vld [vmem:[%s610 + $0x43] sm:$0xff]
      %v703 = vld [vmem:[%s610 + $0x53] sm:$0xff]
      %v704 = vld [vmem:[%s610 + $0x63] sm:$0xff]
      %v705 = vld [vmem:[%s610 + $0x73] sm:$0xff]
      %v706 = vlaneseq
      %v707 = vshrl.u32 %v706, 7
      %v708 = vsub.s32 0, %v707
      %v709 = vrot.slane %v697, %v708
      %v710 = vmul.f32 %v698, %v709
      %v711 = vmul.f32 %v699, %v709
      %v712 = vmul.f32 %v700, %v709
      %v713 = vmul.f32 %v701, %v709
      %v714 = vmul.f32 %v702, %v709
      %v715 = vmul.f32 %v703, %v709
      %v716 = vmul.f32 %v704, %v709
      %v717 = vmul.f32 %v705, %v709
      %v718 = vadd.f32 %v689, %v710
      %v719 = vadd.f32 %v690, %v711
      %v720 = vadd.f32 %v691, %v712
      %v721 = vadd.f32 %v692, %v713
      %v722 = vadd.f32 %v693, %v714
      %v723 = vadd.f32 %v694, %v715
      %v724 = vadd.f32 %v695, %v716
      %v725 = vadd.f32 %v696, %v717
      %v726 = vld [vmem:[%s1 + $0xb] sm:$0x1]
      %v727 = vld [vmem:[%s610 + $0x4] sm:$0xff]
      %v728 = vld [vmem:[%s610 + $0x14] sm:$0xff]
      %v729 = vld [vmem:[%s610 + $0x24] sm:$0xff]
      %v730 = vld [vmem:[%s610 + $0x34] sm:$0xff]
      %v731 = vld [vmem:[%s610 + $0x44] sm:$0xff]
      %v732 = vld [vmem:[%s610 + $0x54] sm:$0xff]
      %v733 = vld [vmem:[%s610 + $0x64] sm:$0xff]
      %v734 = vld [vmem:[%s610 + $0x74] sm:$0xff]
      %v735 = vlaneseq
      %v736 = vshrl.u32 %v735, 7
      %v737 = vsub.s32 0, %v736
      %v738 = vrot.slane %v726, %v737
      %v739 = vmul.f32 %v727, %v738
      %v740 = vmul.f32 %v728, %v738
      %v741 = vmul.f32 %v729, %v738
      %v742 = vmul.f32 %v730, %v738
      %v743 = vmul.f32 %v731, %v738
      %v744 = vmul.f32 %v732, %v738
      %v745 = vmul.f32 %v733, %v738
      %v746 = vmul.f32 %v734, %v738
      %v747 = vadd.f32 %v718, %v739
      %v748 = vadd.f32 %v719, %v740
      %v749 = vadd.f32 %v720, %v741
      %v750 = vadd.f32 %v721, %v742
      %v751 = vadd.f32 %v722, %v743
      %v752 = vadd.f32 %v723, %v744
      %v753 = vadd.f32 %v724, %v745
      %v754 = vadd.f32 %v725, %v746
      %v755 = vld [vmem:[%s1 + $0xc] sm:$0x1]
      %v756 = vld [vmem:[%s610 + $0x5] sm:$0xff]
      %v757 = vld [vmem:[%s610 + $0x15] sm:$0xff]
      %v758 = vld [vmem:[%s610 + $0x25] sm:$0xff]
      %v759 = vld [vmem:[%s610 + $0x35] sm:$0xff]
      %v760 = vld [vmem:[%s610 + $0x45] sm:$0xff]
      %v761 = vld [vmem:[%s610 + $0x55] sm:$0xff]
      %v762 = vld [vmem:[%s610 + $0x65] sm:$0xff]
      %v763 = vld [vmem:[%s610 + $0x75] sm:$0xff]
      %v764 = vlaneseq
      %v765 = vshrl.u32 %v764, 7
      %v766 = vsub.s32 0, %v765
      %v767 = vrot.slane %v755, %v766
      %v768 = vmul.f32 %v756, %v767
      %v769 = vmul.f32 %v757, %v767
      %v770 = vmul.f32 %v758, %v767
      %v771 = vmul.f32 %v759, %v767
      %v772 = vmul.f32 %v760, %v767
      %v773 = vmul.f32 %v761, %v767
      %v774 = vmul.f32 %v762, %v767
      %v775 = vmul.f32 %v763, %v767
      %v776 = vadd.f32 %v747, %v768
      %v777 = vadd.f32 %v748, %v769
      %v778 = vadd.f32 %v749, %v770
      %v779 = vadd.f32 %v750, %v771
      %v780 = vadd.f32 %v751, %v772
      %v781 = vadd.f32 %v752, %v773
      %v782 = vadd.f32 %v753, %v774
      %v783 = vadd.f32 %v754, %v775
      %v784 = vld [vmem:[%s1 + $0xd] sm:$0x1]
      %v785 = vld [vmem:[%s610 + $0x6] sm:$0xff]
      %v786 = vld [vmem:[%s610 + $0x16] sm:$0xff]
      %v787 = vld [vmem:[%s610 + $0x26] sm:$0xff]
      %v788 = vld [vmem:[%s610 + $0x36] sm:$0xff]
      %v789 = vld [vmem:[%s610 + $0x46] sm:$0xff]
      %v790 = vld [vmem:[%s610 + $0x56] sm:$0xff]
      %v791 = vld [vmem:[%s610 + $0x66] sm:$0xff]
      %v792 = vld [vmem:[%s610 + $0x76] sm:$0xff]
      %v793 = vlaneseq
      %v794 = vshrl.u32 %v793, 7
      %v795 = vsub.s32 0, %v794
      %v796 = vrot.slane %v784, %v795
      %v797 = vmul.f32 %v785, %v796
      %v798 = vmul.f32 %v786, %v796
      %v799 = vmul.f32 %v787, %v796
      %v800 = vmul.f32 %v788, %v796
      %v801 = vmul.f32 %v789, %v796
      %v802 = vmul.f32 %v790, %v796
      %v803 = vmul.f32 %v791, %v796
      %v804 = vmul.f32 %v792, %v796
      %v805 = vadd.f32 %v776, %v797
      %v806 = vadd.f32 %v777, %v798
      %v807 = vadd.f32 %v778, %v799
      %v808 = vadd.f32 %v779, %v800
      %v809 = vadd.f32 %v780, %v801
      %v810 = vadd.f32 %v781, %v802
      %v811 = vadd.f32 %v782, %v803
      %v812 = vadd.f32 %v783, %v804
      %v813 = vld [vmem:[%s1 + $0xe] sm:$0x1]
      %s814 = scalar_lea.vmem [#allocation2], 32
      %v815 = vld [vmem:[%s814] sm:$0xff]
      %v816 = vld [vmem:[%s814 + $0x10] sm:$0xff]
      %v817 = vld [vmem:[%s814 + $0x20] sm:$0xff]
      %v818 = vld [vmem:[%s814 + $0x30] sm:$0xff]
      %v819 = vld [vmem:[%s814 + $0x40] sm:$0xff]
      %v820 = vld [vmem:[%s814 + $0x50] sm:$0xff]
      %v821 = vld [vmem:[%s814 + $0x60] sm:$0xff]
      %v822 = vld [vmem:[%s814 + $0x70] sm:$0xff]
      %v823 = vlaneseq
      %v824 = vshrl.u32 %v823, 7
      %v825 = vsub.s32 0, %v824
      %v826 = vrot.slane %v813, %v825
      %v827 = vmul.f32 %v815, %v826
      %v828 = vmul.f32 %v816, %v826
      %v829 = vmul.f32 %v817, %v826
      %v830 = vmul.f32 %v818, %v826
      %v831 = vmul.f32 %v819, %v826
      %v832 = vmul.f32 %v820, %v826
      %v833 = vmul.f32 %v821, %v826
      %v834 = vmul.f32 %v822, %v826
      %v835 = vadd.f32 %v805, %v827
      %v836 = vadd.f32 %v806, %v828
      %v837 = vadd.f32 %v807, %v829
      %v838 = vadd.f32 %v808, %v830
      %v839 = vadd.f32 %v809, %v831
      %v840 = vadd.f32 %v810, %v832
      %v841 = vadd.f32 %v811, %v833
      %v842 = vadd.f32 %v812, %v834
      %v843 = vld [vmem:[%s1 + $0xf] sm:$0x1]
      %v844 = vld [vmem:[%s814 + $0x1] sm:$0xff]
      %v845 = vld [vmem:[%s814 + $0x11] sm:$0xff]
      %v846 = vld [vmem:[%s814 + $0x21] sm:$0xff]
      %v847 = vld [vmem:[%s814 + $0x31] sm:$0xff]
      %v848 = vld [vmem:[%s814 + $0x41] sm:$0xff]
      %v849 = vld [vmem:[%s814 + $0x51] sm:$0xff]
      %v850 = vld [vmem:[%s814 + $0x61] sm:$0xff]
      %v851 = vld [vmem:[%s814 + $0x71] sm:$0xff]
      %v852 = vlaneseq
      %v853 = vshrl.u32 %v852, 7
      %v854 = vsub.s32 0, %v853
      %v855 = vrot.slane %v843, %v854
      %v856 = vmul.f32 %v844, %v855
      %v857 = vmul.f32 %v845, %v855
      %v858 = vmul.f32 %v846, %v855
      %v859 = vmul.f32 %v847, %v855
      %v860 = vmul.f32 %v848, %v855
      %v861 = vmul.f32 %v849, %v855
      %v862 = vmul.f32 %v850, %v855
      %v863 = vmul.f32 %v851, %v855
      %v864 = vadd.f32 %v835, %v856
      %v865 = vadd.f32 %v836, %v857
      %v866 = vadd.f32 %v837, %v858
      %v867 = vadd.f32 %v838, %v859
      %v868 = vadd.f32 %v839, %v860
      %v869 = vadd.f32 %v840, %v861
      %v870 = vadd.f32 %v841, %v862
      %v871 = vadd.f32 %v842, %v863
      %v872 = vld [vmem:[%s1 + $0x10] sm:$0x1]
      %v873 = vld [vmem:[%s814 + $0x2] sm:$0xff]
      %v874 = vld [vmem:[%s814 + $0x12] sm:$0xff]
      %v875 = vld [vmem:[%s814 + $0x22] sm:$0xff]
      %v876 = vld [vmem:[%s814 + $0x32] sm:$0xff]
      %v877 = vld [vmem:[%s814 + $0x42] sm:$0xff]
      %v878 = vld [vmem:[%s814 + $0x52] sm:$0xff]
      %v879 = vld [vmem:[%s814 + $0x62] sm:$0xff]
      %v880 = vld [vmem:[%s814 + $0x72] sm:$0xff]
      %v881 = vlaneseq
      %v882 = vshrl.u32 %v881, 7
      %v883 = vsub.s32 0, %v882
      %v884 = vrot.slane %v872, %v883
      %v885 = vmul.f32 %v873, %v884
      %v886 = vmul.f32 %v874, %v884
      %v887 = vmul.f32 %v875, %v884
      %v888 = vmul.f32 %v876, %v884
      %v889 = vmul.f32 %v877, %v884
      %v890 = vmul.f32 %v878, %v884
      %v891 = vmul.f32 %v879, %v884
      %v892 = vmul.f32 %v880, %v884
      %v893 = vadd.f32 %v864, %v885
      %v894 = vadd.f32 %v865, %v886
      %v895 = vadd.f32 %v866, %v887
      %v896 = vadd.f32 %v867, %v888
      %v897 = vadd.f32 %v868, %v889
      %v898 = vadd.f32 %v869, %v890
      %v899 = vadd.f32 %v870, %v891
      %v900 = vadd.f32 %v871, %v892
      %v901 = vld [vmem:[%s1 + $0x11] sm:$0x1]
      %v902 = vld [vmem:[%s814 + $0x3] sm:$0xff]
      %v903 = vld [vmem:[%s814 + $0x13] sm:$0xff]
      %v904 = vld [vmem:[%s814 + $0x23] sm:$0xff]
      %v905 = vld [vmem:[%s814 + $0x33] sm:$0xff]
      %v906 = vld [vmem:[%s814 + $0x43] sm:$0xff]
      %v907 = vld [vmem:[%s814 + $0x53] sm:$0xff]
      %v908 = vld [vmem:[%s814 + $0x63] sm:$0xff]
      %v909 = vld [vmem:[%s814 + $0x73] sm:$0xff]
      %v910 = vlaneseq
      %v911 = vshrl.u32 %v910, 7
      %v912 = vsub.s32 0, %v911
      %v913 = vrot.slane %v901, %v912
      %v914 = vmul.f32 %v902, %v913
      %v915 = vmul.f32 %v903, %v913
      %v916 = vmul.f32 %v904, %v913
      %v917 = vmul.f32 %v905, %v913
      %v918 = vmul.f32 %v906, %v913
      %v919 = vmul.f32 %v907, %v913
      %v920 = vmul.f32 %v908, %v913
      %v921 = vmul.f32 %v909, %v913
      %v922 = vadd.f32 %v893, %v914
      %v923 = vadd.f32 %v894, %v915
      %v924 = vadd.f32 %v895, %v916
      %v925 = vadd.f32 %v896, %v917
      %v926 = vadd.f32 %v897, %v918
      %v927 = vadd.f32 %v898, %v919
      %v928 = vadd.f32 %v899, %v920
      %v929 = vadd.f32 %v900, %v921
      %v930 = vld [vmem:[%s1 + $0x12] sm:$0x1]
      %v931 = vld [vmem:[%s814 + $0x4] sm:$0xff]
      %v932 = vld [vmem:[%s814 + $0x14] sm:$0xff]
      %v933 = vld [vmem:[%s814 + $0x24] sm:$0xff]
      %v934 = vld [vmem:[%s814 + $0x34] sm:$0xff]
      %v935 = vld [vmem:[%s814 + $0x44] sm:$0xff]
      %v936 = vld [vmem:[%s814 + $0x54] sm:$0xff]
      %v937 = vld [vmem:[%s814 + $0x64] sm:$0xff]
      %v938 = vld [vmem:[%s814 + $0x74] sm:$0xff]
      %v939 = vlaneseq
      %v940 = vshrl.u32 %v939, 7
      %v941 = vsub.s32 0, %v940
      %v942 = vrot.slane %v930, %v941
      %v943 = vmul.f32 %v931, %v942
      %v944 = vmul.f32 %v932, %v942
      %v945 = vmul.f32 %v933, %v942
      %v946 = vmul.f32 %v934, %v942
      %v947 = vmul.f32 %v935, %v942
      %v948 = vmul.f32 %v936, %v942
      %v949 = vmul.f32 %v937, %v942
      %v950 = vmul.f32 %v938, %v942
      %v951 = vadd.f32 %v922, %v943
      %v952 = vadd.f32 %v923, %v944
      %v953 = vadd.f32 %v924, %v945
      %v954 = vadd.f32 %v925, %v946
      %v955 = vadd.f32 %v926, %v947
      %v956 = vadd.f32 %v927, %v948
      %v957 = vadd.f32 %v928, %v949
      %v958 = vadd.f32 %v929, %v950
      %v959 = vld [vmem:[%s1 + $0x13] sm:$0x1]
      %v960 = vld [vmem:[%s814 + $0x5] sm:$0xff]
      %v961 = vld [vmem:[%s814 + $0x15] sm:$0xff]
      %v962 = vld [vmem:[%s814 + $0x25] sm:$0xff]
      %v963 = vld [vmem:[%s814 + $0x35] sm:$0xff]
      %v964 = vld [vmem:[%s814 + $0x45] sm:$0xff]
      %v965 = vld [vmem:[%s814 + $0x55] sm:$0xff]
      %v966 = vld [vmem:[%s814 + $0x65] sm:$0xff]
      %v967 = vld [vmem:[%s814 + $0x75] sm:$0xff]
      %v968 = vlaneseq
      %v969 = vshrl.u32 %v968, 7
      %v970 = vsub.s32 0, %v969
      %v971 = vrot.slane %v959, %v970
      %v972 = vmul.f32 %v960, %v971
      %v973 = vmul.f32 %v961, %v971
      %v974 = vmul.f32 %v962, %v971
      %v975 = vmul.f32 %v963, %v971
      %v976 = vmul.f32 %v964, %v971
      %v977 = vmul.f32 %v965, %v971
      %v978 = vmul.f32 %v966, %v971
      %v979 = vmul.f32 %v967, %v971
      %v980 = vadd.f32 %v951, %v972
      %v981 = vadd.f32 %v952, %v973
      %v982 = vadd.f32 %v953, %v974
      %v983 = vadd.f32 %v954, %v975
      %v984 = vadd.f32 %v955, %v976
      %v985 = vadd.f32 %v956, %v977
      %v986 = vadd.f32 %v957, %v978
      %v987 = vadd.f32 %v958, %v979
      %v988 = vld [vmem:[%s1 + $0x14] sm:$0x1]
      %v989 = vld [vmem:[%s814 + $0x6] sm:$0xff]
      %v990 = vld [vmem:[%s814 + $0x16] sm:$0xff]
      %v991 = vld [vmem:[%s814 + $0x26] sm:$0xff]
      %v992 = vld [vmem:[%s814 + $0x36] sm:$0xff]
      %v993 = vld [vmem:[%s814 + $0x46] sm:$0xff]
      %v994 = vld [vmem:[%s814 + $0x56] sm:$0xff]
      %v995 = vld [vmem:[%s814 + $0x66] sm:$0xff]
      %v996 = vld [vmem:[%s814 + $0x76] sm:$0xff]
      %v997 = vlaneseq
      %v998 = vshrl.u32 %v997, 7
      %v999 = vsub.s32 0, %v998
      %v1000 = vrot.slane %v988, %v999
      %v1001 = vmul.f32 %v989, %v1000
      %v1002 = vmul.f32 %v990, %v1000
      %v1003 = vmul.f32 %v991, %v1000
      %v1004 = vmul.f32 %v992, %v1000
      %v1005 = vmul.f32 %v993, %v1000
      %v1006 = vmul.f32 %v994, %v1000
      %v1007 = vmul.f32 %v995, %v1000
      %v1008 = vmul.f32 %v996, %v1000
      %v1009 = vadd.f32 %v980, %v1001
      %v1010 = vadd.f32 %v981, %v1002
      %v1011 = vadd.f32 %v982, %v1003
      %v1012 = vadd.f32 %v983, %v1004
      %v1013 = vadd.f32 %v984, %v1005
      %v1014 = vadd.f32 %v985, %v1006
      %v1015 = vadd.f32 %v986, %v1007
      %v1016 = vadd.f32 %v987, %v1008
      %v1017 = vld [vmem:[%s1 + $0x15] sm:$0x1]
      %v1018 = vld [vmem:[%s397] sm:$0xff]
      %v1019 = vld [vmem:[%s397 + $0x10] sm:$0xff]
      %v1020 = vld [vmem:[%s397 + $0x20] sm:$0xff]
      %v1021 = vld [vmem:[%s397 + $0x30] sm:$0xff]
      %v1022 = vld [vmem:[%s397 + $0x40] sm:$0xff]
      %v1023 = vld [vmem:[%s397 + $0x50] sm:$0xff]
      %v1024 = vld [vmem:[%s397 + $0x60] sm:$0xff]
      %v1025 = vld [vmem:[%s397 + $0x70] sm:$0xff]
      %v1026 = vlaneseq
      %v1027 = vshrl.u32 %v1026, 7
      %v1028 = vsub.s32 0, %v1027
      %v1029 = vrot.slane %v1017, %v1028
      %v1030 = vmul.f32 %v1018, %v1029
      %v1031 = vmul.f32 %v1019, %v1029
      %v1032 = vmul.f32 %v1020, %v1029
      %v1033 = vmul.f32 %v1021, %v1029
      %v1034 = vmul.f32 %v1022, %v1029
      %v1035 = vmul.f32 %v1023, %v1029
      %v1036 = vmul.f32 %v1024, %v1029
      %v1037 = vmul.f32 %v1025, %v1029
      %v1038 = vadd.f32 %v1009, %v1030
      %v1039 = vadd.f32 %v1010, %v1031
      %v1040 = vadd.f32 %v1011, %v1032
      %v1041 = vadd.f32 %v1012, %v1033
      %v1042 = vadd.f32 %v1013, %v1034
      %v1043 = vadd.f32 %v1014, %v1035
      %v1044 = vadd.f32 %v1015, %v1036
      %v1045 = vadd.f32 %v1016, %v1037
      %v1046 = vld [vmem:[%s1 + $0x16] sm:$0x1]
      %v1047 = vld [vmem:[%s397 + $0x1] sm:$0xff]
      %v1048 = vld [vmem:[%s397 + $0x11] sm:$0xff]
      %v1049 = vld [vmem:[%s397 + $0x21] sm:$0xff]
      %v1050 = vld [vmem:[%s397 + $0x31] sm:$0xff]
      %v1051 = vld [vmem:[%s397 + $0x41] sm:$0xff]
      %v1052 = vld [vmem:[%s397 + $0x51] sm:$0xff]
      %v1053 = vld [vmem:[%s397 + $0x61] sm:$0xff]
      %v1054 = vld [vmem:[%s397 + $0x71] sm:$0xff]
      %v1055 = vlaneseq
      %v1056 = vshrl.u32 %v1055, 7
      %v1057 = vsub.s32 0, %v1056
      %v1058 = vrot.slane %v1046, %v1057
      %v1059 = vmul.f32 %v1047, %v1058
      %v1060 = vmul.f32 %v1048, %v1058
      %v1061 = vmul.f32 %v1049, %v1058
      %v1062 = vmul.f32 %v1050, %v1058
      %v1063 = vmul.f32 %v1051, %v1058
      %v1064 = vmul.f32 %v1052, %v1058
      %v1065 = vmul.f32 %v1053, %v1058
      %v1066 = vmul.f32 %v1054, %v1058
      %v1067 = vadd.f32 %v1038, %v1059
      %v1068 = vadd.f32 %v1039, %v1060
      %v1069 = vadd.f32 %v1040, %v1061
      %v1070 = vadd.f32 %v1041, %v1062
      %v1071 = vadd.f32 %v1042, %v1063
      %v1072 = vadd.f32 %v1043, %v1064
      %v1073 = vadd.f32 %v1044, %v1065
      %v1074 = vadd.f32 %v1045, %v1066
      %v1075 = vld [vmem:[%s1 + $0x17] sm:$0x1]
      %v1076 = vld [vmem:[%s397 + $0x2] sm:$0xff]
      %v1077 = vld [vmem:[%s397 + $0x12] sm:$0xff]
      %v1078 = vld [vmem:[%s397 + $0x22] sm:$0xff]
      %v1079 = vld [vmem:[%s397 + $0x32] sm:$0xff]
      %v1080 = vld [vmem:[%s397 + $0x42] sm:$0xff]
      %v1081 = vld [vmem:[%s397 + $0x52] sm:$0xff]
      %v1082 = vld [vmem:[%s397 + $0x62] sm:$0xff]
      %v1083 = vld [vmem:[%s397 + $0x72] sm:$0xff]
      %v1084 = vlaneseq
      %v1085 = vshrl.u32 %v1084, 7
      %v1086 = vsub.s32 0, %v1085
      %v1087 = vrot.slane %v1075, %v1086
      %v1088 = vmul.f32 %v1076, %v1087
      %v1089 = vmul.f32 %v1077, %v1087
      %v1090 = vmul.f32 %v1078, %v1087
      %v1091 = vmul.f32 %v1079, %v1087
      %v1092 = vmul.f32 %v1080, %v1087
      %v1093 = vmul.f32 %v1081, %v1087
      %v1094 = vmul.f32 %v1082, %v1087
      %v1095 = vmul.f32 %v1083, %v1087
      %v1096 = vadd.f32 %v1067, %v1088
      %v1097 = vadd.f32 %v1068, %v1089
      %v1098 = vadd.f32 %v1069, %v1090
      %v1099 = vadd.f32 %v1070, %v1091
      %v1100 = vadd.f32 %v1071, %v1092
      %v1101 = vadd.f32 %v1072, %v1093
      %v1102 = vadd.f32 %v1073, %v1094
      %v1103 = vadd.f32 %v1074, %v1095
      %v1104 = vld [vmem:[%s1 + $0x18] sm:$0x1]
      %v1105 = vld [vmem:[%s397 + $0x3] sm:$0xff]
      %v1106 = vld [vmem:[%s397 + $0x13] sm:$0xff]
      %v1107 = vld [vmem:[%s397 + $0x23] sm:$0xff]
      %v1108 = vld [vmem:[%s397 + $0x33] sm:$0xff]
      %v1109 = vld [vmem:[%s397 + $0x43] sm:$0xff]
      %v1110 = vld [vmem:[%s397 + $0x53] sm:$0xff]
      %v1111 = vld [vmem:[%s397 + $0x63] sm:$0xff]
      %v1112 = vld [vmem:[%s397 + $0x73] sm:$0xff]
      %v1113 = vlaneseq
      %v1114 = vshrl.u32 %v1113, 7
      %v1115 = vsub.s32 0, %v1114
      %v1116 = vrot.slane %v1104, %v1115
      %v1117 = vmul.f32 %v1105, %v1116
      %v1118 = vmul.f32 %v1106, %v1116
      %v1119 = vmul.f32 %v1107, %v1116
      %v1120 = vmul.f32 %v1108, %v1116
      %v1121 = vmul.f32 %v1109, %v1116
      %v1122 = vmul.f32 %v1110, %v1116
      %v1123 = vmul.f32 %v1111, %v1116
      %v1124 = vmul.f32 %v1112, %v1116
      %v1125 = vadd.f32 %v1096, %v1117
      %v1126 = vadd.f32 %v1097, %v1118
      %v1127 = vadd.f32 %v1098, %v1119
      %v1128 = vadd.f32 %v1099, %v1120
      %v1129 = vadd.f32 %v1100, %v1121
      %v1130 = vadd.f32 %v1101, %v1122
      %v1131 = vadd.f32 %v1102, %v1123
      %v1132 = vadd.f32 %v1103, %v1124
      %v1133 = vld [vmem:[%s1 + $0x19] sm:$0x1]
      %v1134 = vld [vmem:[%s397 + $0x4] sm:$0xff]
      %v1135 = vld [vmem:[%s397 + $0x14] sm:$0xff]
      %v1136 = vld [vmem:[%s397 + $0x24] sm:$0xff]
      %v1137 = vld [vmem:[%s397 + $0x34] sm:$0xff]
      %v1138 = vld [vmem:[%s397 + $0x44] sm:$0xff]
      %v1139 = vld [vmem:[%s397 + $0x54] sm:$0xff]
      %v1140 = vld [vmem:[%s397 + $0x64] sm:$0xff]
      %v1141 = vld [vmem:[%s397 + $0x74] sm:$0xff]
      %v1142 = vlaneseq
      %v1143 = vshrl.u32 %v1142, 7
      %v1144 = vsub.s32 0, %v1143
      %v1145 = vrot.slane %v1133, %v1144
      %v1146 = vmul.f32 %v1134, %v1145
      %v1147 = vmul.f32 %v1135, %v1145
      %v1148 = vmul.f32 %v1136, %v1145
      %v1149 = vmul.f32 %v1137, %v1145
      %v1150 = vmul.f32 %v1138, %v1145
      %v1151 = vmul.f32 %v1139, %v1145
      %v1152 = vmul.f32 %v1140, %v1145
      %v1153 = vmul.f32 %v1141, %v1145
      %v1154 = vadd.f32 %v1125, %v1146
      %v1155 = vadd.f32 %v1126, %v1147
      %v1156 = vadd.f32 %v1127, %v1148
      %v1157 = vadd.f32 %v1128, %v1149
      %v1158 = vadd.f32 %v1129, %v1150
      %v1159 = vadd.f32 %v1130, %v1151
      %v1160 = vadd.f32 %v1131, %v1152
      %v1161 = vadd.f32 %v1132, %v1153
      %v1162 = vld [vmem:[%s1 + $0x1a] sm:$0x1]
      %v1163 = vld [vmem:[%s397 + $0x5] sm:$0xff]
      %v1164 = vld [vmem:[%s397 + $0x15] sm:$0xff]
      %v1165 = vld [vmem:[%s397 + $0x25] sm:$0xff]
      %v1166 = vld [vmem:[%s397 + $0x35] sm:$0xff]
      %v1167 = vld [vmem:[%s397 + $0x45] sm:$0xff]
      %v1168 = vld [vmem:[%s397 + $0x55] sm:$0xff]
      %v1169 = vld [vmem:[%s397 + $0x65] sm:$0xff]
      %v1170 = vld [vmem:[%s397 + $0x75] sm:$0xff]
      %v1171 = vlaneseq
      %v1172 = vshrl.u32 %v1171, 7
      %v1173 = vsub.s32 0, %v1172
      %v1174 = vrot.slane %v1162, %v1173
      %v1175 = vmul.f32 %v1163, %v1174
      %v1176 = vmul.f32 %v1164, %v1174
      %v1177 = vmul.f32 %v1165, %v1174
      %v1178 = vmul.f32 %v1166, %v1174
      %v1179 = vmul.f32 %v1167, %v1174
      %v1180 = vmul.f32 %v1168, %v1174
      %v1181 = vmul.f32 %v1169, %v1174
      %v1182 = vmul.f32 %v1170, %v1174
      %v1183 = vadd.f32 %v1154, %v1175
      %v1184 = vadd.f32 %v1155, %v1176
      %v1185 = vadd.f32 %v1156, %v1177
      %v1186 = vadd.f32 %v1157, %v1178
      %v1187 = vadd.f32 %v1158, %v1179
      %v1188 = vadd.f32 %v1159, %v1180
      %v1189 = vadd.f32 %v1160, %v1181
      %v1190 = vadd.f32 %v1161, %v1182
      %v1191 = vld [vmem:[%s1 + $0x1b] sm:$0x1]
      %v1192 = vld [vmem:[%s397 + $0x6] sm:$0xff]
      %v1193 = vld [vmem:[%s397 + $0x16] sm:$0xff]
      %v1194 = vld [vmem:[%s397 + $0x26] sm:$0xff]
      %v1195 = vld [vmem:[%s397 + $0x36] sm:$0xff]
      %v1196 = vld [vmem:[%s397 + $0x46] sm:$0xff]
      %v1197 = vld [vmem:[%s397 + $0x56] sm:$0xff]
      %v1198 = vld [vmem:[%s397 + $0x66] sm:$0xff]
      %v1199 = vld [vmem:[%s397 + $0x76] sm:$0xff]
      %v1200 = vlaneseq
      %v1201 = vshrl.u32 %v1200, 7
      %v1202 = vsub.s32 0, %v1201
      %v1203 = vrot.slane %v1191, %v1202
      %v1204 = vmul.f32 %v1192, %v1203
      %v1205 = vmul.f32 %v1193, %v1203
      %v1206 = vmul.f32 %v1194, %v1203
      %v1207 = vmul.f32 %v1195, %v1203
      %v1208 = vmul.f32 %v1196, %v1203
      %v1209 = vmul.f32 %v1197, %v1203
      %v1210 = vmul.f32 %v1198, %v1203
      %v1211 = vmul.f32 %v1199, %v1203
      %v1212 = vadd.f32 %v1183, %v1204
      %v1213 = vadd.f32 %v1184, %v1205
      %v1214 = vadd.f32 %v1185, %v1206
      %v1215 = vadd.f32 %v1186, %v1207
      %v1216 = vadd.f32 %v1187, %v1208
      %v1217 = vadd.f32 %v1188, %v1209
      %v1218 = vadd.f32 %v1189, %v1210
      %v1219 = vadd.f32 %v1190, %v1211
      %v1220 = vld [vmem:[%s1 + $0x1c] sm:$0x1]
      %s1221 = scalar_lea.vmem [#allocation2], 64
      %v1222 = vld [vmem:[%s1221] sm:$0xff]
      %v1223 = vld [vmem:[%s1221 + $0x10] sm:$0xff]
      %v1224 = vld [vmem:[%s1221 + $0x20] sm:$0xff]
      %v1225 = vld [vmem:[%s1221 + $0x30] sm:$0xff]
      %v1226 = vld [vmem:[%s1221 + $0x40] sm:$0xff]
      %v1227 = vld [vmem:[%s1221 + $0x50] sm:$0xff]
      %v1228 = vld [vmem:[%s1221 + $0x60] sm:$0xff]
      %v1229 = vld [vmem:[%s1221 + $0x70] sm:$0xff]
      %v1230 = vlaneseq
      %v1231 = vshrl.u32 %v1230, 7
      %v1232 = vsub.s32 0, %v1231
      %v1233 = vrot.slane %v1220, %v1232
      %v1234 = vmul.f32 %v1222, %v1233
      %v1235 = vmul.f32 %v1223, %v1233
      %v1236 = vmul.f32 %v1224, %v1233
      %v1237 = vmul.f32 %v1225, %v1233
      %v1238 = vmul.f32 %v1226, %v1233
      %v1239 = vmul.f32 %v1227, %v1233
      %v1240 = vmul.f32 %v1228, %v1233
      %v1241 = vmul.f32 %v1229, %v1233
      %v1242 = vadd.f32 %v1212, %v1234
      %v1243 = vadd.f32 %v1213, %v1235
      %v1244 = vadd.f32 %v1214, %v1236
      %v1245 = vadd.f32 %v1215, %v1237
      %v1246 = vadd.f32 %v1216, %v1238
      %v1247 = vadd.f32 %v1217, %v1239
      %v1248 = vadd.f32 %v1218, %v1240
      %v1249 = vadd.f32 %v1219, %v1241
      %v1250 = vld [vmem:[%s1 + $0x1d] sm:$0x1]
      %v1251 = vld [vmem:[%s1221 + $0x1] sm:$0xff]
      %v1252 = vld [vmem:[%s1221 + $0x11] sm:$0xff]
      %v1253 = vld [vmem:[%s1221 + $0x21] sm:$0xff]
      %v1254 = vld [vmem:[%s1221 + $0x31] sm:$0xff]
      %v1255 = vld [vmem:[%s1221 + $0x41] sm:$0xff]
      %v1256 = vld [vmem:[%s1221 + $0x51] sm:$0xff]
      %v1257 = vld [vmem:[%s1221 + $0x61] sm:$0xff]
      %v1258 = vld [vmem:[%s1221 + $0x71] sm:$0xff]
      %v1259 = vlaneseq
      %v1260 = vshrl.u32 %v1259, 7
      %v1261 = vsub.s32 0, %v1260
      %v1262 = vrot.slane %v1250, %v1261
      %v1263 = vmul.f32 %v1251, %v1262
      %v1264 = vmul.f32 %v1252, %v1262
      %v1265 = vmul.f32 %v1253, %v1262
      %v1266 = vmul.f32 %v1254, %v1262
      %v1267 = vmul.f32 %v1255, %v1262
      %v1268 = vmul.f32 %v1256, %v1262
      %v1269 = vmul.f32 %v1257, %v1262
      %v1270 = vmul.f32 %v1258, %v1262
      %v1271 = vadd.f32 %v1242, %v1263
      %v1272 = vadd.f32 %v1243, %v1264
      %v1273 = vadd.f32 %v1244, %v1265
      %v1274 = vadd.f32 %v1245, %v1266
      %v1275 = vadd.f32 %v1246, %v1267
      %v1276 = vadd.f32 %v1247, %v1268
      %v1277 = vadd.f32 %v1248, %v1269
      %v1278 = vadd.f32 %v1249, %v1270
      %v1279 = vld [vmem:[%s1 + $0x1e] sm:$0x1]
      %v1280 = vld [vmem:[%s1221 + $0x2] sm:$0xff]
      %v1281 = vld [vmem:[%s1221 + $0x12] sm:$0xff]
      %v1282 = vld [vmem:[%s1221 + $0x22] sm:$0xff]
      %v1283 = vld [vmem:[%s1221 + $0x32] sm:$0xff]
      %v1284 = vld [vmem:[%s1221 + $0x42] sm:$0xff]
      %v1285 = vld [vmem:[%s1221 + $0x52] sm:$0xff]
      %v1286 = vld [vmem:[%s1221 + $0x62] sm:$0xff]
      %v1287 = vld [vmem:[%s1221 + $0x72] sm:$0xff]
      %v1288 = vlaneseq
      %v1289 = vshrl.u32 %v1288, 7
      %v1290 = vsub.s32 0, %v1289
      %v1291 = vrot.slane %v1279, %v1290
      %v1292 = vmul.f32 %v1280, %v1291
      %v1293 = vmul.f32 %v1281, %v1291
      %v1294 = vmul.f32 %v1282, %v1291
      %v1295 = vmul.f32 %v1283, %v1291
      %v1296 = vmul.f32 %v1284, %v1291
      %v1297 = vmul.f32 %v1285, %v1291
      %v1298 = vmul.f32 %v1286, %v1291
      %v1299 = vmul.f32 %v1287, %v1291
      %v1300 = vadd.f32 %v1271, %v1292
      %v1301 = vadd.f32 %v1272, %v1293
      %v1302 = vadd.f32 %v1273, %v1294
      %v1303 = vadd.f32 %v1274, %v1295
      %v1304 = vadd.f32 %v1275, %v1296
      %v1305 = vadd.f32 %v1276, %v1297
      %v1306 = vadd.f32 %v1277, %v1298
      %v1307 = vadd.f32 %v1278, %v1299
      %v1308 = vld [vmem:[%s1 + $0x1f] sm:$0x1]
      %v1309 = vld [vmem:[%s1221 + $0x3] sm:$0xff]
      %v1310 = vld [vmem:[%s1221 + $0x13] sm:$0xff]
      %v1311 = vld [vmem:[%s1221 + $0x23] sm:$0xff]
      %v1312 = vld [vmem:[%s1221 + $0x33] sm:$0xff]
      %v1313 = vld [vmem:[%s1221 + $0x43] sm:$0xff]
      %v1314 = vld [vmem:[%s1221 + $0x53] sm:$0xff]
      %v1315 = vld [vmem:[%s1221 + $0x63] sm:$0xff]
      %v1316 = vld [vmem:[%s1221 + $0x73] sm:$0xff]
      %v1317 = vlaneseq
      %v1318 = vshrl.u32 %v1317, 7
      %v1319 = vsub.s32 0, %v1318
      %v1320 = vrot.slane %v1308, %v1319
      %v1321 = vmul.f32 %v1309, %v1320
      %v1322 = vmul.f32 %v1310, %v1320
      %v1323 = vmul.f32 %v1311, %v1320
      %v1324 = vmul.f32 %v1312, %v1320
      %v1325 = vmul.f32 %v1313, %v1320
      %v1326 = vmul.f32 %v1314, %v1320
      %v1327 = vmul.f32 %v1315, %v1320
      %v1328 = vmul.f32 %v1316, %v1320
      %v1329 = vadd.f32 %v1300, %v1321
      %v1330 = vadd.f32 %v1301, %v1322
      %v1331 = vadd.f32 %v1302, %v1323
      %v1332 = vadd.f32 %v1303, %v1324
      %v1333 = vadd.f32 %v1304, %v1325
      %v1334 = vadd.f32 %v1305, %v1326
      %v1335 = vadd.f32 %v1306, %v1327
      %v1336 = vadd.f32 %v1307, %v1328
      %v1337 = vld [vmem:[%s1 + $0x20] sm:$0x1]
      %v1338 = vld [vmem:[%s1221 + $0x4] sm:$0xff]
      %v1339 = vld [vmem:[%s1221 + $0x14] sm:$0xff]
      %v1340 = vld [vmem:[%s1221 + $0x24] sm:$0xff]
      %v1341 = vld [vmem:[%s1221 + $0x34] sm:$0xff]
      %v1342 = vld [vmem:[%s1221 + $0x44] sm:$0xff]
      %v1343 = vld [vmem:[%s1221 + $0x54] sm:$0xff]
      %v1344 = vld [vmem:[%s1221 + $0x64] sm:$0xff]
      %v1345 = vld [vmem:[%s1221 + $0x74] sm:$0xff]
      %v1346 = vlaneseq
      %v1347 = vshrl.u32 %v1346, 7
      %v1348 = vsub.s32 0, %v1347
      %v1349 = vrot.slane %v1337, %v1348
      %v1350 = vmul.f32 %v1338, %v1349
      %v1351 = vmul.f32 %v1339, %v1349
      %v1352 = vmul.f32 %v1340, %v1349
      %v1353 = vmul.f32 %v1341, %v1349
      %v1354 = vmul.f32 %v1342, %v1349
      %v1355 = vmul.f32 %v1343, %v1349
      %v1356 = vmul.f32 %v1344, %v1349
      %v1357 = vmul.f32 %v1345, %v1349
      %v1358 = vadd.f32 %v1329, %v1350
      %v1359 = vadd.f32 %v1330, %v1351
      %v1360 = vadd.f32 %v1331, %v1352
      %v1361 = vadd.f32 %v1332, %v1353
      %v1362 = vadd.f32 %v1333, %v1354
      %v1363 = vadd.f32 %v1334, %v1355
      %v1364 = vadd.f32 %v1335, %v1356
      %v1365 = vadd.f32 %v1336, %v1357
      %v1366 = vld [vmem:[%s1 + $0x21] sm:$0x1]
      %v1367 = vld [vmem:[%s1221 + $0x5] sm:$0xff]
      %v1368 = vld [vmem:[%s1221 + $0x15] sm:$0xff]
      %v1369 = vld [vmem:[%s1221 + $0x25] sm:$0xff]
      %v1370 = vld [vmem:[%s1221 + $0x35] sm:$0xff]
      %v1371 = vld [vmem:[%s1221 + $0x45] sm:$0xff]
      %v1372 = vld [vmem:[%s1221 + $0x55] sm:$0xff]
      %v1373 = vld [vmem:[%s1221 + $0x65] sm:$0xff]
      %v1374 = vld [vmem:[%s1221 + $0x75] sm:$0xff]
      %v1375 = vlaneseq
      %v1376 = vshrl.u32 %v1375, 7
      %v1377 = vsub.s32 0, %v1376
      %v1378 = vrot.slane %v1366, %v1377
      %v1379 = vmul.f32 %v1367, %v1378
      %v1380 = vmul.f32 %v1368, %v1378
      %v1381 = vmul.f32 %v1369, %v1378
      %v1382 = vmul.f32 %v1370, %v1378
      %v1383 = vmul.f32 %v1371, %v1378
      %v1384 = vmul.f32 %v1372, %v1378
      %v1385 = vmul.f32 %v1373, %v1378
      %v1386 = vmul.f32 %v1374, %v1378
      %v1387 = vadd.f32 %v1358, %v1379
      %v1388 = vadd.f32 %v1359, %v1380
      %v1389 = vadd.f32 %v1360, %v1381
      %v1390 = vadd.f32 %v1361, %v1382
      %v1391 = vadd.f32 %v1362, %v1383
      %v1392 = vadd.f32 %v1363, %v1384
      %v1393 = vadd.f32 %v1364, %v1385
      %v1394 = vadd.f32 %v1365, %v1386
      %v1395 = vld [vmem:[%s1 + $0x22] sm:$0x1]
      %v1396 = vld [vmem:[%s1221 + $0x6] sm:$0xff]
      %v1397 = vld [vmem:[%s1221 + $0x16] sm:$0xff]
      %v1398 = vld [vmem:[%s1221 + $0x26] sm:$0xff]
      %v1399 = vld [vmem:[%s1221 + $0x36] sm:$0xff]
      %v1400 = vld [vmem:[%s1221 + $0x46] sm:$0xff]
      %v1401 = vld [vmem:[%s1221 + $0x56] sm:$0xff]
      %v1402 = vld [vmem:[%s1221 + $0x66] sm:$0xff]
      %v1403 = vld [vmem:[%s1221 + $0x76] sm:$0xff]
      %v1404 = vlaneseq
      %v1405 = vshrl.u32 %v1404, 7
      %v1406 = vsub.s32 0, %v1405
      %v1407 = vrot.slane %v1395, %v1406
      %v1408 = vmul.f32 %v1396, %v1407
      %v1409 = vmul.f32 %v1397, %v1407
      %v1410 = vmul.f32 %v1398, %v1407
      %v1411 = vmul.f32 %v1399, %v1407
      %v1412 = vmul.f32 %v1400, %v1407
      %v1413 = vmul.f32 %v1401, %v1407
      %v1414 = vmul.f32 %v1402, %v1407
      %v1415 = vmul.f32 %v1403, %v1407
      %v1416 = vadd.f32 %v1387, %v1408
      %v1417 = vadd.f32 %v1388, %v1409
      %v1418 = vadd.f32 %v1389, %v1410
      %v1419 = vadd.f32 %v1390, %v1411
      %v1420 = vadd.f32 %v1391, %v1412
      %v1421 = vadd.f32 %v1392, %v1413
      %v1422 = vadd.f32 %v1393, %v1414
      %v1423 = vadd.f32 %v1394, %v1415
      %v1424 = vld [vmem:[%s1 + $0x23] sm:$0x1]
      %s1425 = scalar_lea.vmem [#allocation2], 80
      %v1426 = vld [vmem:[%s1425] sm:$0xff]
      %v1427 = vld [vmem:[%s1425 + $0x10] sm:$0xff]
      %v1428 = vld [vmem:[%s1425 + $0x20] sm:$0xff]
      %v1429 = vld [vmem:[%s1425 + $0x30] sm:$0xff]
      %v1430 = vld [vmem:[%s1425 + $0x40] sm:$0xff]
      %v1431 = vld [vmem:[%s1425 + $0x50] sm:$0xff]
      %v1432 = vld [vmem:[%s1425 + $0x60] sm:$0xff]
      %v1433 = vld [vmem:[%s1425 + $0x70] sm:$0xff]
      %v1434 = vlaneseq
      %v1435 = vshrl.u32 %v1434, 7
      %v1436 = vsub.s32 0, %v1435
      %v1437 = vrot.slane %v1424, %v1436
      %v1438 = vmul.f32 %v1426, %v1437
      %v1439 = vmul.f32 %v1427, %v1437
      %v1440 = vmul.f32 %v1428, %v1437
      %v1441 = vmul.f32 %v1429, %v1437
      %v1442 = vmul.f32 %v1430, %v1437
      %v1443 = vmul.f32 %v1431, %v1437
      %v1444 = vmul.f32 %v1432, %v1437
      %v1445 = vmul.f32 %v1433, %v1437
      %v1446 = vadd.f32 %v1416, %v1438
      %v1447 = vadd.f32 %v1417, %v1439
      %v1448 = vadd.f32 %v1418, %v1440
      %v1449 = vadd.f32 %v1419, %v1441
      %v1450 = vadd.f32 %v1420, %v1442
      %v1451 = vadd.f32 %v1421, %v1443
      %v1452 = vadd.f32 %v1422, %v1444
      %v1453 = vadd.f32 %v1423, %v1445
      %v1454 = vld [vmem:[%s1 + $0x24] sm:$0x1]
      %v1455 = vld [vmem:[%s1425 + $0x1] sm:$0xff]
      %v1456 = vld [vmem:[%s1425 + $0x11] sm:$0xff]
      %v1457 = vld [vmem:[%s1425 + $0x21] sm:$0xff]
      %v1458 = vld [vmem:[%s1425 + $0x31] sm:$0xff]
      %v1459 = vld [vmem:[%s1425 + $0x41] sm:$0xff]
      %v1460 = vld [vmem:[%s1425 + $0x51] sm:$0xff]
      %v1461 = vld [vmem:[%s1425 + $0x61] sm:$0xff]
      %v1462 = vld [vmem:[%s1425 + $0x71] sm:$0xff]
      %v1463 = vlaneseq
      %v1464 = vshrl.u32 %v1463, 7
      %v1465 = vsub.s32 0, %v1464
      %v1466 = vrot.slane %v1454, %v1465
      %v1467 = vmul.f32 %v1455, %v1466
      %v1468 = vmul.f32 %v1456, %v1466
      %v1469 = vmul.f32 %v1457, %v1466
      %v1470 = vmul.f32 %v1458, %v1466
      %v1471 = vmul.f32 %v1459, %v1466
      %v1472 = vmul.f32 %v1460, %v1466
      %v1473 = vmul.f32 %v1461, %v1466
      %v1474 = vmul.f32 %v1462, %v1466
      %v1475 = vadd.f32 %v1446, %v1467
      %v1476 = vadd.f32 %v1447, %v1468
      %v1477 = vadd.f32 %v1448, %v1469
      %v1478 = vadd.f32 %v1449, %v1470
      %v1479 = vadd.f32 %v1450, %v1471
      %v1480 = vadd.f32 %v1451, %v1472
      %v1481 = vadd.f32 %v1452, %v1473
      %v1482 = vadd.f32 %v1453, %v1474
      %v1483 = vld [vmem:[%s1 + $0x25] sm:$0x1]
      %v1484 = vld [vmem:[%s1425 + $0x2] sm:$0xff]
      %v1485 = vld [vmem:[%s1425 + $0x12] sm:$0xff]
      %v1486 = vld [vmem:[%s1425 + $0x22] sm:$0xff]
      %v1487 = vld [vmem:[%s1425 + $0x32] sm:$0xff]
      %v1488 = vld [vmem:[%s1425 + $0x42] sm:$0xff]
      %v1489 = vld [vmem:[%s1425 + $0x52] sm:$0xff]
      %v1490 = vld [vmem:[%s1425 + $0x62] sm:$0xff]
      %v1491 = vld [vmem:[%s1425 + $0x72] sm:$0xff]
      %v1492 = vlaneseq
      %v1493 = vshrl.u32 %v1492, 7
      %v1494 = vsub.s32 0, %v1493
      %v1495 = vrot.slane %v1483, %v1494
      %v1496 = vmul.f32 %v1484, %v1495
      %v1497 = vmul.f32 %v1485, %v1495
      %v1498 = vmul.f32 %v1486, %v1495
      %v1499 = vmul.f32 %v1487, %v1495
      %v1500 = vmul.f32 %v1488, %v1495
      %v1501 = vmul.f32 %v1489, %v1495
      %v1502 = vmul.f32 %v1490, %v1495
      %v1503 = vmul.f32 %v1491, %v1495
      %v1504 = vadd.f32 %v1475, %v1496
      %v1505 = vadd.f32 %v1476, %v1497
      %v1506 = vadd.f32 %v1477, %v1498
      %v1507 = vadd.f32 %v1478, %v1499
      %v1508 = vadd.f32 %v1479, %v1500
      %v1509 = vadd.f32 %v1480, %v1501
      %v1510 = vadd.f32 %v1481, %v1502
      %v1511 = vadd.f32 %v1482, %v1503
      %v1512 = vld [vmem:[%s1 + $0x26] sm:$0x1]
      %v1513 = vld [vmem:[%s1425 + $0x3] sm:$0xff]
      %v1514 = vld [vmem:[%s1425 + $0x13] sm:$0xff]
      %v1515 = vld [vmem:[%s1425 + $0x23] sm:$0xff]
      %v1516 = vld [vmem:[%s1425 + $0x33] sm:$0xff]
      %v1517 = vld [vmem:[%s1425 + $0x43] sm:$0xff]
      %v1518 = vld [vmem:[%s1425 + $0x53] sm:$0xff]
      %v1519 = vld [vmem:[%s1425 + $0x63] sm:$0xff]
      %v1520 = vld [vmem:[%s1425 + $0x73] sm:$0xff]
      %v1521 = vlaneseq
      %v1522 = vshrl.u32 %v1521, 7
      %v1523 = vsub.s32 0, %v1522
      %v1524 = vrot.slane %v1512, %v1523
      %v1525 = vmul.f32 %v1513, %v1524
      %v1526 = vmul.f32 %v1514, %v1524
      %v1527 = vmul.f32 %v1515, %v1524
      %v1528 = vmul.f32 %v1516, %v1524
      %v1529 = vmul.f32 %v1517, %v1524
      %v1530 = vmul.f32 %v1518, %v1524
      %v1531 = vmul.f32 %v1519, %v1524
      %v1532 = vmul.f32 %v1520, %v1524
      %v1533 = vadd.f32 %v1504, %v1525
      %v1534 = vadd.f32 %v1505, %v1526
      %v1535 = vadd.f32 %v1506, %v1527
      %v1536 = vadd.f32 %v1507, %v1528
      %v1537 = vadd.f32 %v1508, %v1529
      %v1538 = vadd.f32 %v1509, %v1530
      %v1539 = vadd.f32 %v1510, %v1531
      %v1540 = vadd.f32 %v1511, %v1532
      %v1541 = vld [vmem:[%s1 + $0x27] sm:$0x1]
      %v1542 = vld [vmem:[%s1425 + $0x4] sm:$0xff]
      %v1543 = vld [vmem:[%s1425 + $0x14] sm:$0xff]
      %v1544 = vld [vmem:[%s1425 + $0x24] sm:$0xff]
      %v1545 = vld [vmem:[%s1425 + $0x34] sm:$0xff]
      %v1546 = vld [vmem:[%s1425 + $0x44] sm:$0xff]
      %v1547 = vld [vmem:[%s1425 + $0x54] sm:$0xff]
      %v1548 = vld [vmem:[%s1425 + $0x64] sm:$0xff]
      %v1549 = vld [vmem:[%s1425 + $0x74] sm:$0xff]
      %v1550 = vlaneseq
      %v1551 = vshrl.u32 %v1550, 7
      %v1552 = vsub.s32 0, %v1551
      %v1553 = vrot.slane %v1541, %v1552
      %v1554 = vmul.f32 %v1542, %v1553
      %v1555 = vmul.f32 %v1543, %v1553
      %v1556 = vmul.f32 %v1544, %v1553
      %v1557 = vmul.f32 %v1545, %v1553
      %v1558 = vmul.f32 %v1546, %v1553
      %v1559 = vmul.f32 %v1547, %v1553
      %v1560 = vmul.f32 %v1548, %v1553
      %v1561 = vmul.f32 %v1549, %v1553
      %v1562 = vadd.f32 %v1533, %v1554
      %v1563 = vadd.f32 %v1534, %v1555
      %v1564 = vadd.f32 %v1535, %v1556
      %v1565 = vadd.f32 %v1536, %v1557
      %v1566 = vadd.f32 %v1537, %v1558
      %v1567 = vadd.f32 %v1538, %v1559
      %v1568 = vadd.f32 %v1539, %v1560
      %v1569 = vadd.f32 %v1540, %v1561
      %v1570 = vld [vmem:[%s1 + $0x28] sm:$0x1]
      %v1571 = vld [vmem:[%s1425 + $0x5] sm:$0xff]
      %v1572 = vld [vmem:[%s1425 + $0x15] sm:$0xff]
      %v1573 = vld [vmem:[%s1425 + $0x25] sm:$0xff]
      %v1574 = vld [vmem:[%s1425 + $0x35] sm:$0xff]
      %v1575 = vld [vmem:[%s1425 + $0x45] sm:$0xff]
      %v1576 = vld [vmem:[%s1425 + $0x55] sm:$0xff]
      %v1577 = vld [vmem:[%s1425 + $0x65] sm:$0xff]
      %v1578 = vld [vmem:[%s1425 + $0x75] sm:$0xff]
      %v1579 = vlaneseq
      %v1580 = vshrl.u32 %v1579, 7
      %v1581 = vsub.s32 0, %v1580
      %v1582 = vrot.slane %v1570, %v1581
      %v1583 = vmul.f32 %v1571, %v1582
      %v1584 = vmul.f32 %v1572, %v1582
      %v1585 = vmul.f32 %v1573, %v1582
      %v1586 = vmul.f32 %v1574, %v1582
      %v1587 = vmul.f32 %v1575, %v1582
      %v1588 = vmul.f32 %v1576, %v1582
      %v1589 = vmul.f32 %v1577, %v1582
      %v1590 = vmul.f32 %v1578, %v1582
      %v1591 = vadd.f32 %v1562, %v1583
      %v1592 = vadd.f32 %v1563, %v1584
      %v1593 = vadd.f32 %v1564, %v1585
      %v1594 = vadd.f32 %v1565, %v1586
      %v1595 = vadd.f32 %v1566, %v1587
      %v1596 = vadd.f32 %v1567, %v1588
      %v1597 = vadd.f32 %v1568, %v1589
      %v1598 = vadd.f32 %v1569, %v1590
      %v1599 = vld [vmem:[%s1 + $0x29] sm:$0x1]
      %v1600 = vld [vmem:[%s1425 + $0x6] sm:$0xff]
      %v1601 = vld [vmem:[%s1425 + $0x16] sm:$0xff]
      %v1602 = vld [vmem:[%s1425 + $0x26] sm:$0xff]
      %v1603 = vld [vmem:[%s1425 + $0x36] sm:$0xff]
      %v1604 = vld [vmem:[%s1425 + $0x46] sm:$0xff]
      %v1605 = vld [vmem:[%s1425 + $0x56] sm:$0xff]
      %v1606 = vld [vmem:[%s1425 + $0x66] sm:$0xff]
      %v1607 = vld [vmem:[%s1425 + $0x76] sm:$0xff]
      %v1608 = vlaneseq
      %v1609 = vshrl.u32 %v1608, 7
      %v1610 = vsub.s32 0, %v1609
      %v1611 = vrot.slane %v1599, %v1610
      %v1612 = vmul.f32 %v1600, %v1611
      %v1613 = vmul.f32 %v1601, %v1611
      %v1614 = vmul.f32 %v1602, %v1611
      %v1615 = vmul.f32 %v1603, %v1611
      %v1616 = vmul.f32 %v1604, %v1611
      %v1617 = vmul.f32 %v1605, %v1611
      %v1618 = vmul.f32 %v1606, %v1611
      %v1619 = vmul.f32 %v1607, %v1611
      %v1620 = vadd.f32 %v1591, %v1612
      %v1621 = vadd.f32 %v1592, %v1613
      %v1622 = vadd.f32 %v1593, %v1614
      %v1623 = vadd.f32 %v1594, %v1615
      %v1624 = vadd.f32 %v1595, %v1616
      %v1625 = vadd.f32 %v1596, %v1617
      %v1626 = vadd.f32 %v1597, %v1618
      %v1627 = vadd.f32 %v1598, %v1619
      %v1628 = vld [vmem:[%s1 + $0x2a] sm:$0x1]
      %s1629 = scalar_lea.vmem [#allocation2], 96
      %v1630 = vld [vmem:[%s1629] sm:$0xff]
      %v1631 = vld [vmem:[%s1629 + $0x10] sm:$0xff]
      %v1632 = vld [vmem:[%s1629 + $0x20] sm:$0xff]
      %v1633 = vld [vmem:[%s1629 + $0x30] sm:$0xff]
      %v1634 = vld [vmem:[%s1629 + $0x40] sm:$0xff]
      %v1635 = vld [vmem:[%s1629 + $0x50] sm:$0xff]
      %v1636 = vld [vmem:[%s1629 + $0x60] sm:$0xff]
      %v1637 = vld [vmem:[%s1629 + $0x70] sm:$0xff]
      %v1638 = vlaneseq
      %v1639 = vshrl.u32 %v1638, 7
      %v1640 = vsub.s32 0, %v1639
      %v1641 = vrot.slane %v1628, %v1640
      %v1642 = vmul.f32 %v1630, %v1641
      %v1643 = vmul.f32 %v1631, %v1641
      %v1644 = vmul.f32 %v1632, %v1641
      %v1645 = vmul.f32 %v1633, %v1641
      %v1646 = vmul.f32 %v1634, %v1641
      %v1647 = vmul.f32 %v1635, %v1641
      %v1648 = vmul.f32 %v1636, %v1641
      %v1649 = vmul.f32 %v1637, %v1641
      %v1650 = vadd.f32 %v1620, %v1642
      %v1651 = vadd.f32 %v1621, %v1643
      %v1652 = vadd.f32 %v1622, %v1644
      %v1653 = vadd.f32 %v1623, %v1645
      %v1654 = vadd.f32 %v1624, %v1646
      %v1655 = vadd.f32 %v1625, %v1647
      %v1656 = vadd.f32 %v1626, %v1648
      %v1657 = vadd.f32 %v1627, %v1649
      %v1658 = vld [vmem:[%s1 + $0x2b] sm:$0x1]
      %v1659 = vld [vmem:[%s1629 + $0x1] sm:$0xff]
      %v1660 = vld [vmem:[%s1629 + $0x11] sm:$0xff]
      %v1661 = vld [vmem:[%s1629 + $0x21] sm:$0xff]
      %v1662 = vld [vmem:[%s1629 + $0x31] sm:$0xff]
      %v1663 = vld [vmem:[%s1629 + $0x41] sm:$0xff]
      %v1664 = vld [vmem:[%s1629 + $0x51] sm:$0xff]
      %v1665 = vld [vmem:[%s1629 + $0x61] sm:$0xff]
      %v1666 = vld [vmem:[%s1629 + $0x71] sm:$0xff]
      %v1667 = vlaneseq
      %v1668 = vshrl.u32 %v1667, 7
      %v1669 = vsub.s32 0, %v1668
      %v1670 = vrot.slane %v1658, %v1669
      %v1671 = vmul.f32 %v1659, %v1670
      %v1672 = vmul.f32 %v1660, %v1670
      %v1673 = vmul.f32 %v1661, %v1670
      %v1674 = vmul.f32 %v1662, %v1670
      %v1675 = vmul.f32 %v1663, %v1670
      %v1676 = vmul.f32 %v1664, %v1670
      %v1677 = vmul.f32 %v1665, %v1670
      %v1678 = vmul.f32 %v1666, %v1670
      %v1679 = vadd.f32 %v1650, %v1671
      %v1680 = vadd.f32 %v1651, %v1672
      %v1681 = vadd.f32 %v1652, %v1673
      %v1682 = vadd.f32 %v1653, %v1674
      %v1683 = vadd.f32 %v1654, %v1675
      %v1684 = vadd.f32 %v1655, %v1676
      %v1685 = vadd.f32 %v1656, %v1677
      %v1686 = vadd.f32 %v1657, %v1678
      %v1687 = vld [vmem:[%s1 + $0x2c] sm:$0x1]
      %v1688 = vld [vmem:[%s1629 + $0x2] sm:$0xff]
      %v1689 = vld [vmem:[%s1629 + $0x12] sm:$0xff]
      %v1690 = vld [vmem:[%s1629 + $0x22] sm:$0xff]
      %v1691 = vld [vmem:[%s1629 + $0x32] sm:$0xff]
      %v1692 = vld [vmem:[%s1629 + $0x42] sm:$0xff]
      %v1693 = vld [vmem:[%s1629 + $0x52] sm:$0xff]
      %v1694 = vld [vmem:[%s1629 + $0x62] sm:$0xff]
      %v1695 = vld [vmem:[%s1629 + $0x72] sm:$0xff]
      %v1696 = vlaneseq
      %v1697 = vshrl.u32 %v1696, 7
      %v1698 = vsub.s32 0, %v1697
      %v1699 = vrot.slane %v1687, %v1698
      %v1700 = vmul.f32 %v1688, %v1699
      %v1701 = vmul.f32 %v1689, %v1699
      %v1702 = vmul.f32 %v1690, %v1699
      %v1703 = vmul.f32 %v1691, %v1699
      %v1704 = vmul.f32 %v1692, %v1699
      %v1705 = vmul.f32 %v1693, %v1699
      %v1706 = vmul.f32 %v1694, %v1699
      %v1707 = vmul.f32 %v1695, %v1699
      %v1708 = vadd.f32 %v1679, %v1700
      %v1709 = vadd.f32 %v1680, %v1701
      %v1710 = vadd.f32 %v1681, %v1702
      %v1711 = vadd.f32 %v1682, %v1703
      %v1712 = vadd.f32 %v1683, %v1704
      %v1713 = vadd.f32 %v1684, %v1705
      %v1714 = vadd.f32 %v1685, %v1706
      %v1715 = vadd.f32 %v1686, %v1707
      %v1716 = vld [vmem:[%s1 + $0x2d] sm:$0x1]
      %v1717 = vld [vmem:[%s1629 + $0x3] sm:$0xff]
      %v1718 = vld [vmem:[%s1629 + $0x13] sm:$0xff]
      %v1719 = vld [vmem:[%s1629 + $0x23] sm:$0xff]
      %v1720 = vld [vmem:[%s1629 + $0x33] sm:$0xff]
      %v1721 = vld [vmem:[%s1629 + $0x43] sm:$0xff]
      %v1722 = vld [vmem:[%s1629 + $0x53] sm:$0xff]
      %v1723 = vld [vmem:[%s1629 + $0x63] sm:$0xff]
      %v1724 = vld [vmem:[%s1629 + $0x73] sm:$0xff]
      %v1725 = vlaneseq
      %v1726 = vshrl.u32 %v1725, 7
      %v1727 = vsub.s32 0, %v1726
      %v1728 = vrot.slane %v1716, %v1727
      %v1729 = vmul.f32 %v1717, %v1728
      %v1730 = vmul.f32 %v1718, %v1728
      %v1731 = vmul.f32 %v1719, %v1728
      %v1732 = vmul.f32 %v1720, %v1728
      %v1733 = vmul.f32 %v1721, %v1728
      %v1734 = vmul.f32 %v1722, %v1728
      %v1735 = vmul.f32 %v1723, %v1728
      %v1736 = vmul.f32 %v1724, %v1728
      %v1737 = vadd.f32 %v1708, %v1729
      %v1738 = vadd.f32 %v1709, %v1730
      %v1739 = vadd.f32 %v1710, %v1731
      %v1740 = vadd.f32 %v1711, %v1732
      %v1741 = vadd.f32 %v1712, %v1733
      %v1742 = vadd.f32 %v1713, %v1734
      %v1743 = vadd.f32 %v1714, %v1735
      %v1744 = vadd.f32 %v1715, %v1736
      %v1745 = vld [vmem:[%s1 + $0x2e] sm:$0x1]
      %v1746 = vld [vmem:[%s1629 + $0x4] sm:$0xff]
      %v1747 = vld [vmem:[%s1629 + $0x14] sm:$0xff]
      %v1748 = vld [vmem:[%s1629 + $0x24] sm:$0xff]
      %v1749 = vld [vmem:[%s1629 + $0x34] sm:$0xff]
      %v1750 = vld [vmem:[%s1629 + $0x44] sm:$0xff]
      %v1751 = vld [vmem:[%s1629 + $0x54] sm:$0xff]
      %v1752 = vld [vmem:[%s1629 + $0x64] sm:$0xff]
      %v1753 = vld [vmem:[%s1629 + $0x74] sm:$0xff]
      %v1754 = vlaneseq
      %v1755 = vshrl.u32 %v1754, 7
      %v1756 = vsub.s32 0, %v1755
      %v1757 = vrot.slane %v1745, %v1756
      %v1758 = vmul.f32 %v1746, %v1757
      %v1759 = vmul.f32 %v1747, %v1757
      %v1760 = vmul.f32 %v1748, %v1757
      %v1761 = vmul.f32 %v1749, %v1757
      %v1762 = vmul.f32 %v1750, %v1757
      %v1763 = vmul.f32 %v1751, %v1757
      %v1764 = vmul.f32 %v1752, %v1757
      %v1765 = vmul.f32 %v1753, %v1757
      %v1766 = vadd.f32 %v1737, %v1758
      %v1767 = vadd.f32 %v1738, %v1759
      %v1768 = vadd.f32 %v1739, %v1760
      %v1769 = vadd.f32 %v1740, %v1761
      %v1770 = vadd.f32 %v1741, %v1762
      %v1771 = vadd.f32 %v1742, %v1763
      %v1772 = vadd.f32 %v1743, %v1764
      %v1773 = vadd.f32 %v1744, %v1765
      %v1774 = vld [vmem:[%s1 + $0x2f] sm:$0x1]
      %v1775 = vld [vmem:[%s1629 + $0x5] sm:$0xff]
      %v1776 = vld [vmem:[%s1629 + $0x15] sm:$0xff]
      %v1777 = vld [vmem:[%s1629 + $0x25] sm:$0xff]
      %v1778 = vld [vmem:[%s1629 + $0x35] sm:$0xff]
      %v1779 = vld [vmem:[%s1629 + $0x45] sm:$0xff]
      %v1780 = vld [vmem:[%s1629 + $0x55] sm:$0xff]
      %v1781 = vld [vmem:[%s1629 + $0x65] sm:$0xff]
      %v1782 = vld [vmem:[%s1629 + $0x75] sm:$0xff]
      %v1783 = vlaneseq
      %v1784 = vshrl.u32 %v1783, 7
      %v1785 = vsub.s32 0, %v1784
      %v1786 = vrot.slane %v1774, %v1785
      %v1787 = vmul.f32 %v1775, %v1786
      %v1788 = vmul.f32 %v1776, %v1786
      %v1789 = vmul.f32 %v1777, %v1786
      %v1790 = vmul.f32 %v1778, %v1786
      %v1791 = vmul.f32 %v1779, %v1786
      %v1792 = vmul.f32 %v1780, %v1786
      %v1793 = vmul.f32 %v1781, %v1786
      %v1794 = vmul.f32 %v1782, %v1786
      %v1795 = vadd.f32 %v1766, %v1787
      %v1796 = vadd.f32 %v1767, %v1788
      %v1797 = vadd.f32 %v1768, %v1789
      %v1798 = vadd.f32 %v1769, %v1790
      %v1799 = vadd.f32 %v1770, %v1791
      %v1800 = vadd.f32 %v1771, %v1792
      %v1801 = vadd.f32 %v1772, %v1793
      %v1802 = vadd.f32 %v1773, %v1794
      %v1803 = vld [vmem:[%s1 + $0x30] sm:$0x1]
      %v1804 = vld [vmem:[%s1629 + $0x6] sm:$0xff]
      %v1805 = vld [vmem:[%s1629 + $0x16] sm:$0xff]
      %v1806 = vld [vmem:[%s1629 + $0x26] sm:$0xff]
      %v1807 = vld [vmem:[%s1629 + $0x36] sm:$0xff]
      %v1808 = vld [vmem:[%s1629 + $0x46] sm:$0xff]
      %v1809 = vld [vmem:[%s1629 + $0x56] sm:$0xff]
      %v1810 = vld [vmem:[%s1629 + $0x66] sm:$0xff]
      %v1811 = vld [vmem:[%s1629 + $0x76] sm:$0xff]
      %v1812 = vlaneseq
      %v1813 = vshrl.u32 %v1812, 7
      %v1814 = vsub.s32 0, %v1813
      %v1815 = vrot.slane %v1803, %v1814
      %v1816 = vmul.f32 %v1804, %v1815
      %v1817 = vmul.f32 %v1805, %v1815
      %v1818 = vmul.f32 %v1806, %v1815
      %v1819 = vmul.f32 %v1807, %v1815
      %v1820 = vmul.f32 %v1808, %v1815
      %v1821 = vmul.f32 %v1809, %v1815
      %v1822 = vmul.f32 %v1810, %v1815
      %v1823 = vmul.f32 %v1811, %v1815
      %v1824 = vadd.f32 %v1795, %v1816
      %v1825 = vadd.f32 %v1796, %v1817
      %v1826 = vadd.f32 %v1797, %v1818
      %v1827 = vadd.f32 %v1798, %v1819
      %v1828 = vadd.f32 %v1799, %v1820
      %v1829 = vadd.f32 %v1800, %v1821
      %v1830 = vadd.f32 %v1801, %v1822
      %v1831 = vadd.f32 %v1802, %v1823
      %v1832 = vld [vmem:[%s2] sm:$0x1]
      %v1834 = vlaneseq
      %v1835 = vshrl.u32 %v1834, 7
      %v1836 = vsub.s32 0, %v1835
      %v1837 = vrot.slane %v1832, %v1836
      %v1839 = vadd.f32 %v1824, %v1837
      %v1840 = vadd.f32 %v1825, %v1837
      %v1841 = vadd.f32 %v1826, %v1837
      %v1842 = vadd.f32 %v1827, %v1837
      %v1843 = vadd.f32 %v1828, %v1837
      %v1844 = vadd.f32 %v1829, %v1837
      %v1845 = vadd.f32 %v1830, %v1837
      %v1846 = vadd.f32 %v1831, %v1837
      %v1847 = vld [vmem:[%s3] sm:$0x1]
      %v1848 = vld [vmem:[%s4] sm:$0x1]
      %1849 = vadd.xlane.f32.xlu0 %v1839
      %v1850 = vpop.xlane.xlu0 %1849
      %1851 = vadd.xlane.f32.xlu0 %v1840
      %v1852 = vpop.xlane.xlu0 %1851
      %1853 = vadd.xlane.f32.xlu0 %v1841
      %v1854 = vpop.xlane.xlu0 %1853
      %1855 = vadd.xlane.f32.xlu0 %v1842
      %v1856 = vpop.xlane.xlu0 %1855
      %1857 = vadd.xlane.f32.xlu0 %v1843
      %v1858 = vpop.xlane.xlu0 %1857
      %1859 = vadd.xlane.f32.xlu0 %v1844
      %v1860 = vpop.xlane.xlu0 %1859
      %1861 = vadd.xlane.f32.xlu0 %v1845
      %v1862 = vpop.xlane.xlu0 %1861
      %1863 = vadd.xlane.f32.xlu0 %v1846
      %v1864 = vpop.xlane.xlu0 %1863
      %v1865 = vrcp.pop 128.0
      %v1866 = vmul.f32 %v1850, %v1865
      %v1867 = vmul.f32 %v1852, %v1865
      %v1868 = vmul.f32 %v1854, %v1865
      %v1869 = vmul.f32 %v1856, %v1865
      %v1870 = vmul.f32 %v1858, %v1865
      %v1871 = vmul.f32 %v1860, %v1865
      %v1872 = vmul.f32 %v1862, %v1865
      %v1873 = vmul.f32 %v1864, %v1865
      %v1874 = vsub.f32 %v1839, %v1866
      %v1875 = vsub.f32 %v1840, %v1867
      %v1876 = vsub.f32 %v1841, %v1868
      %v1877 = vsub.f32 %v1842, %v1869
      %v1878 = vsub.f32 %v1843, %v1870
      %v1879 = vsub.f32 %v1844, %v1871
      %v1880 = vsub.f32 %v1845, %v1872
      %v1881 = vsub.f32 %v1846, %v1873
      %v1882 = vmul.f32 %v1874, %v1874
      %v1883 = vmul.f32 %v1875, %v1875
      %v1884 = vmul.f32 %v1876, %v1876
      %v1885 = vmul.f32 %v1877, %v1877
      %v1886 = vmul.f32 %v1878, %v1878
      %v1887 = vmul.f32 %v1879, %v1879
      %v1888 = vmul.f32 %v1880, %v1880
      %v1889 = vmul.f32 %v1881, %v1881
      %1890 = vadd.xlane.f32.xlu0 %v1882
      %v1891 = vpop.xlane.xlu0 %1890
      %1892 = vadd.xlane.f32.xlu0 %v1883
      %v1893 = vpop.xlane.xlu0 %1892
      %1894 = vadd.xlane.f32.xlu0 %v1884
      %v1895 = vpop.xlane.xlu0 %1894
      %1896 = vadd.xlane.f32.xlu0 %v1885
      %v1897 = vpop.xlane.xlu0 %1896
      %1898 = vadd.xlane.f32.xlu0 %v1886
      %v1899 = vpop.xlane.xlu0 %1898
      %1900 = vadd.xlane.f32.xlu0 %v1887
      %v1901 = vpop.xlane.xlu0 %1900
      %1902 = vadd.xlane.f32.xlu0 %v1888
      %v1903 = vpop.xlane.xlu0 %1902
      %1904 = vadd.xlane.f32.xlu0 %v1889
      %v1905 = vpop.xlane.xlu0 %1904
      %v1906 = vmul.f32 %v1891, %v1865
      %v1907 = vmul.f32 %v1893, %v1865
      %v1908 = vmul.f32 %v1895, %v1865
      %v1909 = vmul.f32 %v1897, %v1865
      %v1910 = vmul.f32 %v1899, %v1865
      %v1911 = vmul.f32 %v1901, %v1865
      %v1912 = vmul.f32 %v1903, %v1865
      %v1913 = vmul.f32 %v1905, %v1865
      %v1914 = vadd.f32 %v1906, 1e-06
      %v1915 = vadd.f32 %v1907, 1e-06
      %v1916 = vadd.f32 %v1908, 1e-06
      %v1917 = vadd.f32 %v1909, 1e-06
      %v1918 = vadd.f32 %v1910, 1e-06
      %v1919 = vadd.f32 %v1911, 1e-06
      %v1920 = vadd.f32 %v1912, 1e-06
      %v1921 = vadd.f32 %v1913, 1e-06
      %v1922 = vrsqrt.pop %v1914
      %v1923 = vrsqrt.pop %v1915
      %v1924 = vrsqrt.pop %v1916
      %v1925 = vrsqrt.pop %v1917
      %v1926 = vrsqrt.pop %v1918
      %v1927 = vrsqrt.pop %v1919
      %v1928 = vrsqrt.pop %v1920
      %v1929 = vrsqrt.pop %v1921
      %v1930 = vmul.f32 %v1874, %v1922
      %v1931 = vmul.f32 %v1875, %v1923
      %v1932 = vmul.f32 %v1876, %v1924
      %v1933 = vmul.f32 %v1877, %v1925
      %v1934 = vmul.f32 %v1878, %v1926
      %v1935 = vmul.f32 %v1879, %v1927
      %v1936 = vmul.f32 %v1880, %v1928
      %v1937 = vmul.f32 %v1881, %v1929
      %v1939 = vlaneseq
      %v1940 = vshrl.u32 %v1939, 7
      %v1941 = vsub.s32 0, %v1940
      %v1942 = vrot.slane %v1847, %v1941
      %v1944 = vmul.f32 %v1930, %v1942
      %v1945 = vmul.f32 %v1931, %v1942
      %v1946 = vmul.f32 %v1932, %v1942
      %v1947 = vmul.f32 %v1933, %v1942
      %v1948 = vmul.f32 %v1934, %v1942
      %v1949 = vmul.f32 %v1935, %v1942
      %v1950 = vmul.f32 %v1936, %v1942
      %v1951 = vmul.f32 %v1937, %v1942
      %v1953 = vlaneseq
      %v1954 = vshrl.u32 %v1953, 7
      %v1955 = vsub.s32 0, %v1954
      %v1956 = vrot.slane %v1848, %v1955
      %v1958 = vadd.f32 %v1944, %v1956
      %v1959 = vadd.f32 %v1945, %v1956
      %v1960 = vadd.f32 %v1946, %v1956
      %v1961 = vadd.f32 %v1947, %v1956
      %v1962 = vadd.f32 %v1948, %v1956
      %v1963 = vadd.f32 %v1949, %v1956
      %v1964 = vadd.f32 %v1950, %v1956
      %v1965 = vadd.f32 %v1951, %v1956
      %v1966 = vpack.c.bf16 %v1959, %v1958
      %v1967 = vpack.c.bf16 %v1961, %v1960
      %v1968 = vpack.c.bf16 %v1963, %v1962
      %v1969 = vpack.c.bf16 %v1965, %v1964
      %v1970 = vld [vmem:[%s5] sm:$0xff]
      %v1971 = vld [vmem:[%s5 + $0x8] sm:$0xff]
      %v1972 = vld [vmem:[%s5 + $0x10] sm:$0xff]
      %v1973 = vld [vmem:[%s5 + $0x18] sm:$0xff]
      %v1974 = vld [vmem:[%s5 + $0x20] sm:$0xff]
      %v1975 = vld [vmem:[%s5 + $0x28] sm:$0xff]
      %v1976 = vld [vmem:[%s5 + $0x30] sm:$0xff]
      %v1977 = vld [vmem:[%s5 + $0x38] sm:$0xff]
      %v1978 = vld [vmem:[%s5 + $0x40] sm:$0xff]
      %v1979 = vld [vmem:[%s5 + $0x48] sm:$0xff]
      %v1980 = vld [vmem:[%s5 + $0x50] sm:$0xff]
      %v1981 = vld [vmem:[%s5 + $0x58] sm:$0xff]
      %v1982 = vld [vmem:[%s5 + $0x60] sm:$0xff]
      %v1983 = vld [vmem:[%s5 + $0x68] sm:$0xff]
      %v1984 = vld [vmem:[%s5 + $0x70] sm:$0xff]
      %v1985 = vld [vmem:[%s5 + $0x78] sm:$0xff]
      %v1986 = vld [vmem:[%s5 + $0x80] sm:$0xff]
      %v1987 = vld [vmem:[%s5 + $0x88] sm:$0xff]
      %v1988 = vld [vmem:[%s5 + $0x90] sm:$0xff]
      %v1989 = vld [vmem:[%s5 + $0x98] sm:$0xff]
      %v1990 = vld [vmem:[%s5 + $0xa0] sm:$0xff]
      %v1991 = vld [vmem:[%s5 + $0xa8] sm:$0xff]
      %v1992 = vld [vmem:[%s5 + $0xb0] sm:$0xff]
      %v1993 = vld [vmem:[%s5 + $0xb8] sm:$0xff]
      %v1994 = vld [vmem:[%s5 + $0xc0] sm:$0xff]
      %v1995 = vld [vmem:[%s5 + $0xc8] sm:$0xff]
      %v1996 = vld [vmem:[%s5 + $0xd0] sm:$0xff]
      %v1997 = vld [vmem:[%s5 + $0xd8] sm:$0xff]
      %v1998 = vld [vmem:[%s5 + $0xe0] sm:$0xff]
      %v1999 = vld [vmem:[%s5 + $0xe8] sm:$0xff]
      %v2000 = vld [vmem:[%s5 + $0xf0] sm:$0xff]
      %v2001 = vld [vmem:[%s5 + $0xf8] sm:$0xff]
      %v2002 = vld [vmem:[%s6] sm:$0xf]
      %v2004 = vlaneseq
      %v2005 = vshrl.u32 %v2004, 7
      %v2006 = vsub.s32 0, %v2005
      %v2007 = vrot.slane %v2002, %v2006
      %v2008 = vlaneseq
      %v2009 = vshrl.u32 %v2008, 7
      %v2010 = vsub.s32 1, %v2009
      %v2011 = vrot.slane %v2002, %v2010
      %v2012 = vlaneseq
      %v2013 = vshrl.u32 %v2012, 7
      %v2014 = vsub.s32 2, %v2013
      %v2015 = vrot.slane %v2002, %v2014
      %v2016 = vlaneseq
      %v2017 = vshrl.u32 %v2016, 7
      %v2018 = vsub.s32 3, %v2017
      %v2019 = vrot.slane %v2002, %v2018
      %v2056 = vunpack.c.l.b16 %v1970
      %v2057 = vunpack.c.h.b16 %v1970
      %v2058 = vunpack.c.l.b16 %v1971
      %v2059 = vunpack.c.h.b16 %v1971
      %v2060 = vunpack.c.l.b16 %v1972
      %v2061 = vunpack.c.h.b16 %v1972
      %v2062 = vunpack.c.l.b16 %v1973
      %v2063 = vunpack.c.h.b16 %v1973
      %v2064 = vunpack.c.l.b16 %v1974
      %v2065 = vunpack.c.h.b16 %v1974
      %v2066 = vunpack.c.l.b16 %v1975
      %v2067 = vunpack.c.h.b16 %v1975
      %v2068 = vunpack.c.l.b16 %v1976
      %v2069 = vunpack.c.h.b16 %v1976
      %v2070 = vunpack.c.l.b16 %v1977
      %v2071 = vunpack.c.h.b16 %v1977
      %v2072 = vunpack.c.l.b16 %v1978
      %v2073 = vunpack.c.h.b16 %v1978
      %v2074 = vunpack.c.l.b16 %v1979
      %v2075 = vunpack.c.h.b16 %v1979
      %v2076 = vunpack.c.l.b16 %v1980
      %v2077 = vunpack.c.h.b16 %v1980
      %v2078 = vunpack.c.l.b16 %v1981
      %v2079 = vunpack.c.h.b16 %v1981
      %v2080 = vunpack.c.l.b16 %v1982
      %v2081 = vunpack.c.h.b16 %v1982
      %v2082 = vunpack.c.l.b16 %v1983
      %v2083 = vunpack.c.h.b16 %v1983
      %v2084 = vunpack.c.l.b16 %v1984
      %v2085 = vunpack.c.h.b16 %v1984
      %v2086 = vunpack.c.l.b16 %v1985
      %v2087 = vunpack.c.h.b16 %v1985
      %v2088 = vunpack.c.l.b16 %v1986
      %v2089 = vunpack.c.h.b16 %v1986
      %v2090 = vunpack.c.l.b16 %v1987
      %v2091 = vunpack.c.h.b16 %v1987
      %v2092 = vunpack.c.l.b16 %v1988
      %v2093 = vunpack.c.h.b16 %v1988
      %v2094 = vunpack.c.l.b16 %v1989
      %v2095 = vunpack.c.h.b16 %v1989
      %v2096 = vunpack.c.l.b16 %v1990
      %v2097 = vunpack.c.h.b16 %v1990
      %v2098 = vunpack.c.l.b16 %v1991
      %v2099 = vunpack.c.h.b16 %v1991
      %v2100 = vunpack.c.l.b16 %v1992
      %v2101 = vunpack.c.h.b16 %v1992
      %v2102 = vunpack.c.l.b16 %v1993
      %v2103 = vunpack.c.h.b16 %v1993
      %v2104 = vunpack.c.l.b16 %v1994
      %v2105 = vunpack.c.h.b16 %v1994
      %v2106 = vunpack.c.l.b16 %v1995
      %v2107 = vunpack.c.h.b16 %v1995
      %v2108 = vunpack.c.l.b16 %v1996
      %v2109 = vunpack.c.h.b16 %v1996
      %v2110 = vunpack.c.l.b16 %v1997
      %v2111 = vunpack.c.h.b16 %v1997
      %v2112 = vunpack.c.l.b16 %v1998
      %v2113 = vunpack.c.h.b16 %v1998
      %v2114 = vunpack.c.l.b16 %v1999
      %v2115 = vunpack.c.h.b16 %v1999
      %v2116 = vunpack.c.l.b16 %v2000
      %v2117 = vunpack.c.h.b16 %v2000
      %v2118 = vunpack.c.l.b16 %v2001
      %v2119 = vunpack.c.h.b16 %v2001
      %v2120 = vpack.c.b16 %v2060, %v2056
      %v2121 = vpack.c.b16 %v2061, %v2057
      %v2122 = vpack.c.b16 %v2062, %v2058
      %v2123 = vpack.c.b16 %v2063, %v2059
      %v2124 = vpack.c.b16 %v2068, %v2064
      %v2125 = vpack.c.b16 %v2069, %v2065
      %v2126 = vpack.c.b16 %v2070, %v2066
      %v2127 = vpack.c.b16 %v2071, %v2067
      %v2128 = vpack.c.b16 %v2076, %v2072
      %v2129 = vpack.c.b16 %v2077, %v2073
      %v2130 = vpack.c.b16 %v2078, %v2074
      %v2131 = vpack.c.b16 %v2079, %v2075
      %v2132 = vpack.c.b16 %v2084, %v2080
      %v2133 = vpack.c.b16 %v2085, %v2081
      %v2134 = vpack.c.b16 %v2086, %v2082
      %v2135 = vpack.c.b16 %v2087, %v2083
      %v2136 = vpack.c.b16 %v2092, %v2088
      %v2137 = vpack.c.b16 %v2093, %v2089
      %v2138 = vpack.c.b16 %v2094, %v2090
      %v2139 = vpack.c.b16 %v2095, %v2091
      %v2140 = vpack.c.b16 %v2100, %v2096
      %v2141 = vpack.c.b16 %v2101, %v2097
      %v2142 = vpack.c.b16 %v2102, %v2098
      %v2143 = vpack.c.b16 %v2103, %v2099
      %v2144 = vpack.c.b16 %v2108, %v2104
      %v2145 = vpack.c.b16 %v2109, %v2105
      %v2146 = vpack.c.b16 %v2110, %v2106
      %v2147 = vpack.c.b16 %v2111, %v2107
      %v2148 = vpack.c.b16 %v2116, %v2112
      %v2149 = vpack.c.b16 %v2117, %v2113
      %v2150 = vpack.c.b16 %v2118, %v2114
      %v2151 = vpack.c.b16 %v2119, %v2115
      %2184 = vmatprep.subr.bf16.mxu0 %v2149
      %2185 = vmatpush1.bf16.msra.mxu0 %v2148
      %2186 = vmatprep.subr.bf16.mxu0 %v2145
      %2187 = vmatpush1.bf16.msra.mxu0 %v2144
      %2188 = vmatprep.subr.bf16.mxu0 %v2141
      %2189 = vmatpush1.bf16.msra.mxu0 %v2140
      %2190 = vmatprep.subr.bf16.mxu0 %v2137
      %2191 = vmatpush1.bf16.msra.mxu0 %v2136
      %2192 = vmatprep.subr.bf16.mxu0 %v2133
      %2193 = vmatpush1.bf16.msra.mxu0 %v2132
      %2194 = vmatprep.subr.bf16.mxu0 %v2129
      %2195 = vmatpush1.bf16.msra.mxu0 %v2128
      %2196 = vmatprep.subr.bf16.mxu0 %v2125
      %2197 = vmatpush1.bf16.msra.mxu0 %v2124
      %2198 = vmatprep.subr.bf16.mxu0 %v2121
      %2199 = vmatpush1.bf16.msra.mxu0 %v2120
      %2200 = vmatprep.subr.bf16.mxu0 0
      %2201 = vmatpush2.bf16.msra.mxu0 0
      %2202 = vmatprep.subr.bf16.mxu0 0
      %2203 = vmatpush2.bf16.msra.mxu0 0
      %2204 = vmatprep.subr.bf16.mxu0 0
      %2205 = vmatpush2.bf16.msra.mxu0 0
      %2206 = vmatprep.subr.bf16.mxu0 0
      %2207 = vmatpush2.bf16.msra.mxu0 0
      %2208 = vmatprep.subr.bf16.mxu0 0
      %2209 = vmatpush2.bf16.msra.mxu0 0
      %2210 = vmatprep.subr.bf16.mxu0 0
      %2211 = vmatpush2.bf16.msra.mxu0 0
      %2212 = vmatprep.subr.bf16.mxu0 0
      %2213 = vmatpush2.bf16.msra.mxu0 0
      %2214 = vmatprep.subr.bf16.mxu0 0
      %2215 = vmatpush2.bf16.msra.mxu0 0
      %2216 = vmatprep.mubr.bf16.mxu0 0
      %2217 = vmatmul.mubr.bf16.gmra.mxu0 %v1966
      %v2218 = vpop.f32.mrf.mxu0
      %v2219 = vadd.f32 %v2007, %v2218
      %v2220 = vpop.f32.mrf.mxu0
      %v2221 = vadd.f32 %v2011, %v2220
      %v2222 = vpop.f32.mrf.mxu0
      %v2223 = vadd.f32 %v2007, %v2222
      %v2224 = vpop.f32.mrf.mxu0
      %v2225 = vadd.f32 %v2011, %v2224
      %2226 = vmatprep.mubr.bf16.mxu0 0
      %2227 = vmatmul.mubr.bf16.gmra.mxu0 %v1967
      %v2228 = vpop.f32.mrf.mxu0
      %v2229 = vadd.f32 %v2007, %v2228
      %v2230 = vpop.f32.mrf.mxu0
      %v2231 = vadd.f32 %v2011, %v2230
      %v2232 = vpop.f32.mrf.mxu0
      %v2233 = vadd.f32 %v2007, %v2232
      %v2234 = vpop.f32.mrf.mxu0
      %v2235 = vadd.f32 %v2011, %v2234
      %2236 = vmatprep.mubr.bf16.mxu0 0
      %2237 = vmatmul.mubr.bf16.gmra.mxu0 %v1968
      %v2238 = vpop.f32.mrf.mxu0
      %v2239 = vadd.f32 %v2007, %v2238
      %v2240 = vpop.f32.mrf.mxu0
      %v2241 = vadd.f32 %v2011, %v2240
      %v2242 = vpop.f32.mrf.mxu0
      %v2243 = vadd.f32 %v2007, %v2242
      %v2244 = vpop.f32.mrf.mxu0
      %v2245 = vadd.f32 %v2011, %v2244
      %2246 = vmatprep.mubr.bf16.mxu0 0
      %2247 = vmatmul.mubr.bf16.gmra.mxu0 %v1969
      %v2248 = vpop.f32.mrf.mxu0
      %v2249 = vadd.f32 %v2007, %v2248
      %v2250 = vpop.f32.mrf.mxu0
      %v2251 = vadd.f32 %v2011, %v2250
      %v2252 = vpop.f32.mrf.mxu0
      %v2253 = vadd.f32 %v2007, %v2252
      %v2254 = vpop.f32.mrf.mxu0
      %v2255 = vadd.f32 %v2011, %v2254
      %2256 = vdwg.mxu0
      %2257 = vmatprep.subr.bf16.mxu0 %v2151
      %2258 = vmatpush1.bf16.msra.mxu0 %v2150
      %2259 = vmatprep.subr.bf16.mxu0 %v2147
      %2260 = vmatpush1.bf16.msra.mxu0 %v2146
      %2261 = vmatprep.subr.bf16.mxu0 %v2143
      %2262 = vmatpush1.bf16.msra.mxu0 %v2142
      %2263 = vmatprep.subr.bf16.mxu0 %v2139
      %2264 = vmatpush1.bf16.msra.mxu0 %v2138
      %2265 = vmatprep.subr.bf16.mxu0 %v2135
      %2266 = vmatpush1.bf16.msra.mxu0 %v2134
      %2267 = vmatprep.subr.bf16.mxu0 %v2131
      %2268 = vmatpush1.bf16.msra.mxu0 %v2130
      %2269 = vmatprep.subr.bf16.mxu0 %v2127
      %2270 = vmatpush1.bf16.msra.mxu0 %v2126
      %2271 = vmatprep.subr.bf16.mxu0 %v2123
      %2272 = vmatpush1.bf16.msra.mxu0 %v2122
      %2273 = vmatprep.subr.bf16.mxu0 0
      %2274 = vmatpush2.bf16.msra.mxu0 0
      %2275 = vmatprep.subr.bf16.mxu0 0
      %2276 = vmatpush2.bf16.msra.mxu0 0
      %2277 = vmatprep.subr.bf16.mxu0 0
      %2278 = vmatpush2.bf16.msra.mxu0 0
      %2279 = vmatprep.subr.bf16.mxu0 0
      %2280 = vmatpush2.bf16.msra.mxu0 0
      %2281 = vmatprep.subr.bf16.mxu0 0
      %2282 = vmatpush2.bf16.msra.mxu0 0
      %2283 = vmatprep.subr.bf16.mxu0 0
      %2284 = vmatpush2.bf16.msra.mxu0 0
      %2285 = vmatprep.subr.bf16.mxu0 0
      %2286 = vmatpush2.bf16.msra.mxu0 0
      %2287 = vmatprep.subr.bf16.mxu0 0
      %2288 = vmatpush2.bf16.msra.mxu0 0
      %2289 = vmatprep.mubr.bf16.mxu0 0
      %2290 = vmatmul.mubr.bf16.gmra.mxu0 %v1966
      %v2291 = vpop.f32.mrf.mxu0
      %v2292 = vadd.f32 %v2015, %v2291
      %v2293 = vpop.f32.mrf.mxu0
      %v2294 = vadd.f32 %v2019, %v2293
      %v2295 = vpop.f32.mrf.mxu0
      %v2296 = vadd.f32 %v2015, %v2295
      %v2297 = vpop.f32.mrf.mxu0
      %v2298 = vadd.f32 %v2019, %v2297
      %2299 = vmatprep.mubr.bf16.mxu0 0
      %2300 = vmatmul.mubr.bf16.gmra.mxu0 %v1967
      %v2301 = vpop.f32.mrf.mxu0
      %v2302 = vadd.f32 %v2015, %v2301
      %v2303 = vpop.f32.mrf.mxu0
      %v2304 = vadd.f32 %v2019, %v2303
      %v2305 = vpop.f32.mrf.mxu0
      %v2306 = vadd.f32 %v2015, %v2305
      %v2307 = vpop.f32.mrf.mxu0
      %v2308 = vadd.f32 %v2019, %v2307
      %2309 = vmatprep.mubr.bf16.mxu0 0
      %2310 = vmatmul.mubr.bf16.gmra.mxu0 %v1968
      %v2311 = vpop.f32.mrf.mxu0
      %v2312 = vadd.f32 %v2015, %v2311
      %v2313 = vpop.f32.mrf.mxu0
      %v2314 = vadd.f32 %v2019, %v2313
      %v2315 = vpop.f32.mrf.mxu0
      %v2316 = vadd.f32 %v2015, %v2315
      %v2317 = vpop.f32.mrf.mxu0
      %v2318 = vadd.f32 %v2019, %v2317
      %2319 = vmatprep.mubr.bf16.mxu0 0
      %2320 = vmatmul.mubr.bf16.gmra.mxu0 %v1969
      %v2321 = vpop.f32.mrf.mxu0
      %v2322 = vadd.f32 %v2015, %v2321
      %v2323 = vpop.f32.mrf.mxu0
      %v2324 = vadd.f32 %v2019, %v2323
      %v2325 = vpop.f32.mrf.mxu0
      %v2326 = vadd.f32 %v2015, %v2325
      %v2327 = vpop.f32.mrf.mxu0
      %v2328 = vadd.f32 %v2019, %v2327
      %2329 = vdwg.mxu0
      %v2330 = vmul.f32 %v2219, %v2219
      %v2331 = vmul.f32 %v2221, %v2221
      %v2332 = vmul.f32 %v2292, %v2292
      %v2333 = vmul.f32 %v2294, %v2294
      %v2334 = vmul.f32 %v2223, %v2223
      %v2335 = vmul.f32 %v2225, %v2225
      %v2336 = vmul.f32 %v2296, %v2296
      %v2337 = vmul.f32 %v2298, %v2298
      %v2338 = vmul.f32 %v2229, %v2229
      %v2339 = vmul.f32 %v2231, %v2231
      %v2340 = vmul.f32 %v2302, %v2302
      %v2341 = vmul.f32 %v2304, %v2304
      %v2342 = vmul.f32 %v2233, %v2233
      %v2343 = vmul.f32 %v2235, %v2235
      %v2344 = vmul.f32 %v2306, %v2306
      %v2345 = vmul.f32 %v2308, %v2308
      %v2346 = vmul.f32 %v2239, %v2239
      %v2347 = vmul.f32 %v2241, %v2241
      %v2348 = vmul.f32 %v2312, %v2312
      %v2349 = vmul.f32 %v2314, %v2314
      %v2350 = vmul.f32 %v2243, %v2243
      %v2351 = vmul.f32 %v2245, %v2245
      %v2352 = vmul.f32 %v2316, %v2316
      %v2353 = vmul.f32 %v2318, %v2318
      %v2354 = vmul.f32 %v2249, %v2249
      %v2355 = vmul.f32 %v2251, %v2251
      %v2356 = vmul.f32 %v2322, %v2322
      %v2357 = vmul.f32 %v2324, %v2324
      %v2358 = vmul.f32 %v2253, %v2253
      %v2359 = vmul.f32 %v2255, %v2255
      %v2360 = vmul.f32 %v2326, %v2326
      %v2361 = vmul.f32 %v2328, %v2328
      %v2362 = vmul.f32 %v2219, %v2330
      %v2363 = vmul.f32 %v2221, %v2331
      %v2364 = vmul.f32 %v2292, %v2332
      %v2365 = vmul.f32 %v2294, %v2333
      %v2366 = vmul.f32 %v2223, %v2334
      %v2367 = vmul.f32 %v2225, %v2335
      %v2368 = vmul.f32 %v2296, %v2336
      %v2369 = vmul.f32 %v2298, %v2337
      %v2370 = vmul.f32 %v2229, %v2338
      %v2371 = vmul.f32 %v2231, %v2339
      %v2372 = vmul.f32 %v2302, %v2340
      %v2373 = vmul.f32 %v2304, %v2341
      %v2374 = vmul.f32 %v2233, %v2342
      %v2375 = vmul.f32 %v2235, %v2343
      %v2376 = vmul.f32 %v2306, %v2344
      %v2377 = vmul.f32 %v2308, %v2345
      %v2378 = vmul.f32 %v2239, %v2346
      %v2379 = vmul.f32 %v2241, %v2347
      %v2380 = vmul.f32 %v2312, %v2348
      %v2381 = vmul.f32 %v2314, %v2349
      %v2382 = vmul.f32 %v2243, %v2350
      %v2383 = vmul.f32 %v2245, %v2351
      %v2384 = vmul.f32 %v2316, %v2352
      %v2385 = vmul.f32 %v2318, %v2353
      %v2386 = vmul.f32 %v2249, %v2354
      %v2387 = vmul.f32 %v2251, %v2355
      %v2388 = vmul.f32 %v2322, %v2356
      %v2389 = vmul.f32 %v2324, %v2357
      %v2390 = vmul.f32 %v2253, %v2358
      %v2391 = vmul.f32 %v2255, %v2359
      %v2392 = vmul.f32 %v2326, %v2360
      %v2393 = vmul.f32 %v2328, %v2361
      %v2394 = vmul.f32 %v2362, 0.044715
      %v2395 = vmul.f32 %v2363, 0.044715
      %v2396 = vmul.f32 %v2364, 0.044715
      %v2397 = vmul.f32 %v2365, 0.044715
      %v2398 = vmul.f32 %v2366, 0.044715
      %v2399 = vmul.f32 %v2367, 0.044715
      %v2400 = vmul.f32 %v2368, 0.044715
      %v2401 = vmul.f32 %v2369, 0.044715
      %v2402 = vmul.f32 %v2370, 0.044715
      %v2403 = vmul.f32 %v2371, 0.044715
      %v2404 = vmul.f32 %v2372, 0.044715
      %v2405 = vmul.f32 %v2373, 0.044715
      %v2406 = vmul.f32 %v2374, 0.044715
      %v2407 = vmul.f32 %v2375, 0.044715
      %v2408 = vmul.f32 %v2376, 0.044715
      %v2409 = vmul.f32 %v2377, 0.044715
      %v2410 = vmul.f32 %v2378, 0.044715
      %v2411 = vmul.f32 %v2379, 0.044715
      %v2412 = vmul.f32 %v2380, 0.044715
      %v2413 = vmul.f32 %v2381, 0.044715
      %v2414 = vmul.f32 %v2382, 0.044715
      %v2415 = vmul.f32 %v2383, 0.044715
      %v2416 = vmul.f32 %v2384, 0.044715
      %v2417 = vmul.f32 %v2385, 0.044715
      %v2418 = vmul.f32 %v2386, 0.044715
      %v2419 = vmul.f32 %v2387, 0.044715
      %v2420 = vmul.f32 %v2388, 0.044715
      %v2421 = vmul.f32 %v2389, 0.044715
      %v2422 = vmul.f32 %v2390, 0.044715
      %v2423 = vmul.f32 %v2391, 0.044715
      %v2424 = vmul.f32 %v2392, 0.044715
      %v2425 = vmul.f32 %v2393, 0.044715
      %v2426 = vadd.f32 %v2219, %v2394
      %v2427 = vadd.f32 %v2221, %v2395
      %v2428 = vadd.f32 %v2292, %v2396
      %v2429 = vadd.f32 %v2294, %v2397
      %v2430 = vadd.f32 %v2223, %v2398
      %v2431 = vadd.f32 %v2225, %v2399
      %v2432 = vadd.f32 %v2296, %v2400
      %v2433 = vadd.f32 %v2298, %v2401
      %v2434 = vadd.f32 %v2229, %v2402
      %v2435 = vadd.f32 %v2231, %v2403
      %v2436 = vadd.f32 %v2302, %v2404
      %v2437 = vadd.f32 %v2304, %v2405
      %v2438 = vadd.f32 %v2233, %v2406
      %v2439 = vadd.f32 %v2235, %v2407
      %v2440 = vadd.f32 %v2306, %v2408
      %v2441 = vadd.f32 %v2308, %v2409
      %v2442 = vadd.f32 %v2239, %v2410
      %v2443 = vadd.f32 %v2241, %v2411
      %v2444 = vadd.f32 %v2312, %v2412
      %v2445 = vadd.f32 %v2314, %v2413
      %v2446 = vadd.f32 %v2243, %v2414
      %v2447 = vadd.f32 %v2245, %v2415
      %v2448 = vadd.f32 %v2316, %v2416
      %v2449 = vadd.f32 %v2318, %v2417
      %v2450 = vadd.f32 %v2249, %v2418
      %v2451 = vadd.f32 %v2251, %v2419
      %v2452 = vadd.f32 %v2322, %v2420
      %v2453 = vadd.f32 %v2324, %v2421
      %v2454 = vadd.f32 %v2253, %v2422
      %v2455 = vadd.f32 %v2255, %v2423
      %v2456 = vadd.f32 %v2326, %v2424
      %v2457 = vadd.f32 %v2328, %v2425
      %v2458 = vmul.f32 %v2426, 0.7978846
      %v2459 = vmul.f32 %v2427, 0.7978846
      %v2460 = vmul.f32 %v2428, 0.7978846
      %v2461 = vmul.f32 %v2429, 0.7978846
      %v2462 = vmul.f32 %v2430, 0.7978846
      %v2463 = vmul.f32 %v2431, 0.7978846
      %v2464 = vmul.f32 %v2432, 0.7978846
      %v2465 = vmul.f32 %v2433, 0.7978846
      %v2466 = vmul.f32 %v2434, 0.7978846
      %v2467 = vmul.f32 %v2435, 0.7978846
      %v2468 = vmul.f32 %v2436, 0.7978846
      %v2469 = vmul.f32 %v2437, 0.7978846
      %v2470 = vmul.f32 %v2438, 0.7978846
      %v2471 = vmul.f32 %v2439, 0.7978846
      %v2472 = vmul.f32 %v2440, 0.7978846
      %v2473 = vmul.f32 %v2441, 0.7978846
      %v2474 = vmul.f32 %v2442, 0.7978846
      %v2475 = vmul.f32 %v2443, 0.7978846
      %v2476 = vmul.f32 %v2444, 0.7978846
      %v2477 = vmul.f32 %v2445, 0.7978846
      %v2478 = vmul.f32 %v2446, 0.7978846
      %v2479 = vmul.f32 %v2447, 0.7978846
      %v2480 = vmul.f32 %v2448, 0.7978846
      %v2481 = vmul.f32 %v2449, 0.7978846
      %v2482 = vmul.f32 %v2450, 0.7978846
      %v2483 = vmul.f32 %v2451, 0.7978846
      %v2484 = vmul.f32 %v2452, 0.7978846
      %v2485 = vmul.f32 %v2453, 0.7978846
      %v2486 = vmul.f32 %v2454, 0.7978846
      %v2487 = vmul.f32 %v2455, 0.7978846
      %v2488 = vmul.f32 %v2456, 0.7978846
      %v2489 = vmul.f32 %v2457, 0.7978846
      %v2490 = vtanh.pop %v2458
      %v2491 = vtanh.pop %v2459
      %v2492 = vtanh.pop %v2460
      %v2493 = vtanh.pop %v2461
      %v2494 = vtanh.pop %v2462
      %v2495 = vtanh.pop %v2463
      %v2496 = vtanh.pop %v2464
      %v2497 = vtanh.pop %v2465
      %v2498 = vtanh.pop %v2466
      %v2499 = vtanh.pop %v2467
      %v2500 = vtanh.pop %v2468
      %v2501 = vtanh.pop %v2469
      %v2502 = vtanh.pop %v2470
      %v2503 = vtanh.pop %v2471
      %v2504 = vtanh.pop %v2472
      %v2505 = vtanh.pop %v2473
      %v2506 = vtanh.pop %v2474
      %v2507 = vtanh.pop %v2475
      %v2508 = vtanh.pop %v2476
      %v2509 = vtanh.pop %v2477
      %v2510 = vtanh.pop %v2478
      %v2511 = vtanh.pop %v2479
      %v2512 = vtanh.pop %v2480
      %v2513 = vtanh.pop %v2481
      %v2514 = vtanh.pop %v2482
      %v2515 = vtanh.pop %v2483
      %v2516 = vtanh.pop %v2484
      %v2517 = vtanh.pop %v2485
      %v2518 = vtanh.pop %v2486
      %v2519 = vtanh.pop %v2487
      %v2520 = vtanh.pop %v2488
      %v2521 = vtanh.pop %v2489
      %v2522 = vadd.f32 %v2490, 1.0
      %v2523 = vadd.f32 %v2491, 1.0
      %v2524 = vadd.f32 %v2492, 1.0
      %v2525 = vadd.f32 %v2493, 1.0
      %v2526 = vadd.f32 %v2494, 1.0
      %v2527 = vadd.f32 %v2495, 1.0
      %v2528 = vadd.f32 %v2496, 1.0
      %v2529 = vadd.f32 %v2497, 1.0
      %v2530 = vadd.f32 %v2498, 1.0
      %v2531 = vadd.f32 %v2499, 1.0
      %v2532 = vadd.f32 %v2500, 1.0
      %v2533 = vadd.f32 %v2501, 1.0
      %v2534 = vadd.f32 %v2502, 1.0
      %v2535 = vadd.f32 %v2503, 1.0
      %v2536 = vadd.f32 %v2504, 1.0
      %v2537 = vadd.f32 %v2505, 1.0
      %v2538 = vadd.f32 %v2506, 1.0
      %v2539 = vadd.f32 %v2507, 1.0
      %v2540 = vadd.f32 %v2508, 1.0
      %v2541 = vadd.f32 %v2509, 1.0
      %v2542 = vadd.f32 %v2510, 1.0
      %v2543 = vadd.f32 %v2511, 1.0
      %v2544 = vadd.f32 %v2512, 1.0
      %v2545 = vadd.f32 %v2513, 1.0
      %v2546 = vadd.f32 %v2514, 1.0
      %v2547 = vadd.f32 %v2515, 1.0
      %v2548 = vadd.f32 %v2516, 1.0
      %v2549 = vadd.f32 %v2517, 1.0
      %v2550 = vadd.f32 %v2518, 1.0
      %v2551 = vadd.f32 %v2519, 1.0
      %v2552 = vadd.f32 %v2520, 1.0
      %v2553 = vadd.f32 %v2521, 1.0
      %v2554 = vmul.f32 %v2522, 0.5
      %v2555 = vmul.f32 %v2523, 0.5
      %v2556 = vmul.f32 %v2524, 0.5
      %v2557 = vmul.f32 %v2525, 0.5
      %v2558 = vmul.f32 %v2526, 0.5
      %v2559 = vmul.f32 %v2527, 0.5
      %v2560 = vmul.f32 %v2528, 0.5
      %v2561 = vmul.f32 %v2529, 0.5
      %v2562 = vmul.f32 %v2530, 0.5
      %v2563 = vmul.f32 %v2531, 0.5
      %v2564 = vmul.f32 %v2532, 0.5
      %v2565 = vmul.f32 %v2533, 0.5
      %v2566 = vmul.f32 %v2534, 0.5
      %v2567 = vmul.f32 %v2535, 0.5
      %v2568 = vmul.f32 %v2536, 0.5
      %v2569 = vmul.f32 %v2537, 0.5
      %v2570 = vmul.f32 %v2538, 0.5
      %v2571 = vmul.f32 %v2539, 0.5
      %v2572 = vmul.f32 %v2540, 0.5
      %v2573 = vmul.f32 %v2541, 0.5
      %v2574 = vmul.f32 %v2542, 0.5
      %v2575 = vmul.f32 %v2543, 0.5
      %v2576 = vmul.f32 %v2544, 0.5
      %v2577 = vmul.f32 %v2545, 0.5
      %v2578 = vmul.f32 %v2546, 0.5
      %v2579 = vmul.f32 %v2547, 0.5
      %v2580 = vmul.f32 %v2548, 0.5
      %v2581 = vmul.f32 %v2549, 0.5
      %v2582 = vmul.f32 %v2550, 0.5
      %v2583 = vmul.f32 %v2551, 0.5
      %v2584 = vmul.f32 %v2552, 0.5
      %v2585 = vmul.f32 %v2553, 0.5
      %v2586 = vmul.f32 %v2219, %v2554
      %v2587 = vmul.f32 %v2221, %v2555
      %v2588 = vmul.f32 %v2292, %v2556
      %v2589 = vmul.f32 %v2294, %v2557
      %v2590 = vmul.f32 %v2223, %v2558
      %v2591 = vmul.f32 %v2225, %v2559
      %v2592 = vmul.f32 %v2296, %v2560
      %v2593 = vmul.f32 %v2298, %v2561
      %v2594 = vmul.f32 %v2229, %v2562
      %v2595 = vmul.f32 %v2231, %v2563
      %v2596 = vmul.f32 %v2302, %v2564
      %v2597 = vmul.f32 %v2304, %v2565
      %v2598 = vmul.f32 %v2233, %v2566
      %v2599 = vmul.f32 %v2235, %v2567
      %v2600 = vmul.f32 %v2306, %v2568
      %v2601 = vmul.f32 %v2308, %v2569
      %v2602 = vmul.f32 %v2239, %v2570
      %v2603 = vmul.f32 %v2241, %v2571
      %v2604 = vmul.f32 %v2312, %v2572
      %v2605 = vmul.f32 %v2314, %v2573
      %v2606 = vmul.f32 %v2243, %v2574
      %v2607 = vmul.f32 %v2245, %v2575
      %v2608 = vmul.f32 %v2316, %v2576
      %v2609 = vmul.f32 %v2318, %v2577
      %v2610 = vmul.f32 %v2249, %v2578
      %v2611 = vmul.f32 %v2251, %v2579
      %v2612 = vmul.f32 %v2322, %v2580
      %v2613 = vmul.f32 %v2324, %v2581
      %v2614 = vmul.f32 %v2253, %v2582
      %v2615 = vmul.f32 %v2255, %v2583
      %v2616 = vmul.f32 %v2326, %v2584
      %v2617 = vmul.f32 %v2328, %v2585
      %v2618 = vpack.c.bf16 %v2590, %v2586
      %v2619 = vpack.c.bf16 %v2591, %v2587
      %v2620 = vpack.c.bf16 %v2592, %v2588
      %v2621 = vpack.c.bf16 %v2593, %v2589
      %v2622 = vpack.c.bf16 %v2598, %v2594
      %v2623 = vpack.c.bf16 %v2599, %v2595
      %v2624 = vpack.c.bf16 %v2600, %v2596
      %v2625 = vpack.c.bf16 %v2601, %v2597
      %v2626 = vpack.c.bf16 %v2606, %v2602
      %v2627 = vpack.c.bf16 %v2607, %v2603
      %v2628 = vpack.c.bf16 %v2608, %v2604
      %v2629 = vpack.c.bf16 %v2609, %v2605
      %v2630 = vpack.c.bf16 %v2614, %v2610
      %v2631 = vpack.c.bf16 %v2615, %v2611
      %v2632 = vpack.c.bf16 %v2616, %v2612
      %v2633 = vpack.c.bf16 %v2617, %v2613
      %v2634 = vld [vmem:[%s7] sm:$0xf]
      %v2635 = vld [vmem:[%s7 + $0x4] sm:$0xf]
      %v2636 = vld [vmem:[%s7 + $0x8] sm:$0xf]
      %v2637 = vld [vmem:[%s7 + $0xc] sm:$0xf]
      %v2638 = vld [vmem:[%s7 + $0x10] sm:$0xf]
      %v2639 = vld [vmem:[%s7 + $0x14] sm:$0xf]
      %v2640 = vld [vmem:[%s7 + $0x18] sm:$0xf]
      %v2641 = vld [vmem:[%s7 + $0x1c] sm:$0xf]
      %v2642 = vld [vmem:[%s7 + $0x20] sm:$0xf]
      %v2643 = vld [vmem:[%s7 + $0x24] sm:$0xf]
      %v2644 = vld [vmem:[%s7 + $0x28] sm:$0xf]
      %v2645 = vld [vmem:[%s7 + $0x2c] sm:$0xf]
      %v2646 = vld [vmem:[%s7 + $0x30] sm:$0xf]
      %v2647 = vld [vmem:[%s7 + $0x34] sm:$0xf]
      %v2648 = vld [vmem:[%s7 + $0x38] sm:$0xf]
      %v2649 = vld [vmem:[%s7 + $0x3c] sm:$0xf]
      %v2650 = vld [vmem:[%s7 + $0x40] sm:$0xf]
      %v2651 = vld [vmem:[%s7 + $0x44] sm:$0xf]
      %v2652 = vld [vmem:[%s7 + $0x48] sm:$0xf]
      %v2653 = vld [vmem:[%s7 + $0x4c] sm:$0xf]
      %v2654 = vld [vmem:[%s7 + $0x50] sm:$0xf]
      %v2655 = vld [vmem:[%s7 + $0x54] sm:$0xf]
      %v2656 = vld [vmem:[%s7 + $0x58] sm:$0xf]
      %v2657 = vld [vmem:[%s7 + $0x5c] sm:$0xf]
      %v2658 = vld [vmem:[%s7 + $0x60] sm:$0xf]
      %v2659 = vld [vmem:[%s7 + $0x64] sm:$0xf]
      %v2660 = vld [vmem:[%s7 + $0x68] sm:$0xf]
      %v2661 = vld [vmem:[%s7 + $0x6c] sm:$0xf]
      %v2662 = vld [vmem:[%s7 + $0x70] sm:$0xf]
      %v2663 = vld [vmem:[%s7 + $0x74] sm:$0xf]
      %v2664 = vld [vmem:[%s7 + $0x78] sm:$0xf]
      %v2665 = vld [vmem:[%s7 + $0x7c] sm:$0xf]
      %v2666 = vld [vmem:[%s7 + $0x80] sm:$0xf]
      %v2667 = vld [vmem:[%s7 + $0x84] sm:$0xf]
      %v2668 = vld [vmem:[%s7 + $0x88] sm:$0xf]
      %v2669 = vld [vmem:[%s7 + $0x8c] sm:$0xf]
      %v2670 = vld [vmem:[%s7 + $0x90] sm:$0xf]
      %v2671 = vld [vmem:[%s7 + $0x94] sm:$0xf]
      %v2672 = vld [vmem:[%s7 + $0x98] sm:$0xf]
      %v2673 = vld [vmem:[%s7 + $0x9c] sm:$0xf]
      %v2674 = vld [vmem:[%s7 + $0xa0] sm:$0xf]
      %v2675 = vld [vmem:[%s7 + $0xa4] sm:$0xf]
      %v2676 = vld [vmem:[%s7 + $0xa8] sm:$0xf]
      %v2677 = vld [vmem:[%s7 + $0xac] sm:$0xf]
      %v2678 = vld [vmem:[%s7 + $0xb0] sm:$0xf]
      %v2679 = vld [vmem:[%s7 + $0xb4] sm:$0xf]
      %v2680 = vld [vmem:[%s7 + $0xb8] sm:$0xf]
      %v2681 = vld [vmem:[%s7 + $0xbc] sm:$0xf]
      %v2682 = vld [vmem:[%s7 + $0xc0] sm:$0xf]
      %v2683 = vld [vmem:[%s7 + $0xc4] sm:$0xf]
      %v2684 = vld [vmem:[%s7 + $0xc8] sm:$0xf]
      %v2685 = vld [vmem:[%s7 + $0xcc] sm:$0xf]
      %v2686 = vld [vmem:[%s7 + $0xd0] sm:$0xf]
      %v2687 = vld [vmem:[%s7 + $0xd4] sm:$0xf]
      %v2688 = vld [vmem:[%s7 + $0xd8] sm:$0xf]
      %v2689 = vld [vmem:[%s7 + $0xdc] sm:$0xf]
      %v2690 = vld [vmem:[%s7 + $0xe0] sm:$0xf]
      %v2691 = vld [vmem:[%s7 + $0xe4] sm:$0xf]
      %v2692 = vld [vmem:[%s7 + $0xe8] sm:$0xf]
      %v2693 = vld [vmem:[%s7 + $0xec] sm:$0xf]
      %v2694 = vld [vmem:[%s7 + $0xf0] sm:$0xf]
      %v2695 = vld [vmem:[%s7 + $0xf4] sm:$0xf]
      %v2696 = vld [vmem:[%s7 + $0xf8] sm:$0xf]
      %v2697 = vld [vmem:[%s7 + $0xfc] sm:$0xf]
      %v2698 = vld [vmem:[%s8] sm:$0x1]
      %v2700 = vlaneseq
      %v2701 = vshrl.u32 %v2700, 7
      %v2702 = vsub.s32 0, %v2701
      %v2703 = vrot.slane %v2698, %v2702
      %v2769 = vunpack.c.l.b16 %v2634
      %v2770 = vunpack.c.l.b16 %v2635
      %v2771 = vunpack.c.l.b16 %v2636
      %v2772 = vunpack.c.l.b16 %v2637
      %v2773 = vunpack.c.l.b16 %v2638
      %v2774 = vunpack.c.l.b16 %v2639
      %v2775 = vunpack.c.l.b16 %v2640
      %v2776 = vunpack.c.l.b16 %v2641
      %v2777 = vunpack.c.l.b16 %v2642
      %v2778 = vunpack.c.l.b16 %v2643
      %v2779 = vunpack.c.l.b16 %v2644
      %v2780 = vunpack.c.l.b16 %v2645
      %v2781 = vunpack.c.l.b16 %v2646
      %v2782 = vunpack.c.l.b16 %v2647
      %v2783 = vunpack.c.l.b16 %v2648
      %v2784 = vunpack.c.l.b16 %v2649
      %v2785 = vunpack.c.l.b16 %v2650
      %v2786 = vunpack.c.l.b16 %v2651
      %v2787 = vunpack.c.l.b16 %v2652
      %v2788 = vunpack.c.l.b16 %v2653
      %v2789 = vunpack.c.l.b16 %v2654
      %v2790 = vunpack.c.l.b16 %v2655
      %v2791 = vunpack.c.l.b16 %v2656
      %v2792 = vunpack.c.l.b16 %v2657
      %v2793 = vunpack.c.l.b16 %v2658
      %v2794 = vunpack.c.l.b16 %v2659
      %v2795 = vunpack.c.l.b16 %v2660
      %v2796 = vunpack.c.l.b16 %v2661
      %v2797 = vunpack.c.l.b16 %v2662
      %v2798 = vunpack.c.l.b16 %v2663
      %v2799 = vunpack.c.l.b16 %v2664
      %v2800 = vunpack.c.l.b16 %v2665
      %v2801 = vunpack.c.l.b16 %v2666
      %v2802 = vunpack.c.l.b16 %v2667
      %v2803 = vunpack.c.l.b16 %v2668
      %v2804 = vunpack.c.l.b16 %v2669
      %v2805 = vunpack.c.l.b16 %v2670
      %v2806 = vunpack.c.l.b16 %v2671
      %v2807 = vunpack.c.l.b16 %v2672
      %v2808 = vunpack.c.l.b16 %v2673
      %v2809 = vunpack.c.l.b16 %v2674
      %v2810 = vunpack.c.l.b16 %v2675
      %v2811 = vunpack.c.l.b16 %v2676
      %v2812 = vunpack.c.l.b16 %v2677
      %v2813 = vunpack.c.l.b16 %v2678
      %v2814 = vunpack.c.l.b16 %v2679
      %v2815 = vunpack.c.l.b16 %v2680
      %v2816 = vunpack.c.l.b16 %v2681
      %v2817 = vunpack.c.l.b16 %v2682
      %v2818 = vunpack.c.l.b16 %v2683
      %v2819 = vunpack.c.l.b16 %v2684
      %v2820 = vunpack.c.l.b16 %v2685
      %v2821 = vunpack.c.l.b16 %v2686
      %v2822 = vunpack.c.l.b16 %v2687
      %v2823 = vunpack.c.l.b16 %v2688
      %v2824 = vunpack.c.l.b16 %v2689
      %v2825 = vunpack.c.l.b16 %v2690
      %v2826 = vunpack.c.l.b16 %v2691
      %v2827 = vunpack.c.l.b16 %v2692
      %v2828 = vunpack.c.l.b16 %v2693
      %v2829 = vunpack.c.l.b16 %v2694
      %v2830 = vunpack.c.l.b16 %v2695
      %v2831 = vunpack.c.l.b16 %v2696
      %v2832 = vunpack.c.l.b16 %v2697
      %v2833 = vpack.c.b16 %v2770, %v2769
      %v2834 = vpack.c.b16 %v2772, %v2771
      %v2835 = vpack.c.b16 %v2774, %v2773
      %v2836 = vpack.c.b16 %v2776, %v2775
      %v2837 = vpack.c.b16 %v2778, %v2777
      %v2838 = vpack.c.b16 %v2780, %v2779
      %v2839 = vpack.c.b16 %v2782, %v2781
      %v2840 = vpack.c.b16 %v2784, %v2783
      %v2841 = vpack.c.b16 %v2786, %v2785
      %v2842 = vpack.c.b16 %v2788, %v2787
      %v2843 = vpack.c.b16 %v2790, %v2789
      %v2844 = vpack.c.b16 %v2792, %v2791
      %v2845 = vpack.c.b16 %v2794, %v2793
      %v2846 = vpack.c.b16 %v2796, %v2795
      %v2847 = vpack.c.b16 %v2798, %v2797
      %v2848 = vpack.c.b16 %v2800, %v2799
      %v2849 = vpack.c.b16 %v2802, %v2801
      %v2850 = vpack.c.b16 %v2804, %v2803
      %v2851 = vpack.c.b16 %v2806, %v2805
      %v2852 = vpack.c.b16 %v2808, %v2807
      %v2853 = vpack.c.b16 %v2810, %v2809
      %v2854 = vpack.c.b16 %v2812, %v2811
      %v2855 = vpack.c.b16 %v2814, %v2813
      %v2856 = vpack.c.b16 %v2816, %v2815
      %v2857 = vpack.c.b16 %v2818, %v2817
      %v2858 = vpack.c.b16 %v2820, %v2819
      %v2859 = vpack.c.b16 %v2822, %v2821
      %v2860 = vpack.c.b16 %v2824, %v2823
      %v2861 = vpack.c.b16 %v2826, %v2825
      %v2862 = vpack.c.b16 %v2828, %v2827
      %v2863 = vpack.c.b16 %v2830, %v2829
      %v2864 = vpack.c.b16 %v2832, %v2831
      %2897 = vmatprep.subr.bf16.mxu0 0
      %2898 = vmatpush1.bf16.msra.mxu0 %v2840
      %2899 = vmatprep.subr.bf16.mxu0 0
      %2900 = vmatpush1.bf16.msra.mxu0 %v2839
      %2901 = vmatprep.subr.bf16.mxu0 0
      %2902 = vmatpush1.bf16.msra.mxu0 %v2838
      %2903 = vmatprep.subr.bf16.mxu0 0
      %2904 = vmatpush1.bf16.msra.mxu0 %v2837
      %2905 = vmatprep.subr.bf16.mxu0 0
      %2906 = vmatpush1.bf16.msra.mxu0 %v2836
      %2907 = vmatprep.subr.bf16.mxu0 0
      %2908 = vmatpush1.bf16.msra.mxu0 %v2835
      %2909 = vmatprep.subr.bf16.mxu0 0
      %2910 = vmatpush1.bf16.msra.mxu0 %v2834
      %2911 = vmatprep.subr.bf16.mxu0 0
      %2912 = vmatpush1.bf16.msra.mxu0 %v2833
      %2913 = vmatprep.subr.bf16.mxu0 0
      %2914 = vmatpush2.bf16.msra.mxu0 %v2848
      %2915 = vmatprep.subr.bf16.mxu0 0
      %2916 = vmatpush2.bf16.msra.mxu0 %v2847
      %2917 = vmatprep.subr.bf16.mxu0 0
      %2918 = vmatpush2.bf16.msra.mxu0 %v2846
      %2919 = vmatprep.subr.bf16.mxu0 0
      %2920 = vmatpush2.bf16.msra.mxu0 %v2845
      %2921 = vmatprep.subr.bf16.mxu0 0
      %2922 = vmatpush2.bf16.msra.mxu0 %v2844
      %2923 = vmatprep.subr.bf16.mxu0 0
      %2924 = vmatpush2.bf16.msra.mxu0 %v2843
      %2925 = vmatprep.subr.bf16.mxu0 0
      %2926 = vmatpush2.bf16.msra.mxu0 %v2842
      %2927 = vmatprep.subr.bf16.mxu0 0
      %2928 = vmatpush2.bf16.msra.mxu0 %v2841
      %2929 = vmatprep.mubr.bf16.mxu0 %v2619
      %2930 = vmatmul.mubr.bf16.gmra.mxu0 %v2618
      %v2931 = vpop.f32.mrf.mxu0
      %v2932 = vadd.f32 %v2703, %v2931
      %v2933 = vpop.f32.mrf.mxu0
      %v2934 = vpop.f32.mrf.mxu0
      %v2935 = vadd.f32 %v2703, %v2934
      %v2936 = vpop.f32.mrf.mxu0
      %2937 = vmatprep.mubr.bf16.mxu0 %v2623
      %2938 = vmatmul.mubr.bf16.gmra.mxu0 %v2622
      %v2939 = vpop.f32.mrf.mxu0
      %v2940 = vadd.f32 %v2703, %v2939
      %v2941 = vpop.f32.mrf.mxu0
      %v2942 = vpop.f32.mrf.mxu0
      %v2943 = vadd.f32 %v2703, %v2942
      %v2944 = vpop.f32.mrf.mxu0
      %2945 = vmatprep.mubr.bf16.mxu0 %v2627
      %2946 = vmatmul.mubr.bf16.gmra.mxu0 %v2626
      %v2947 = vpop.f32.mrf.mxu0
      %v2948 = vadd.f32 %v2703, %v2947
      %v2949 = vpop.f32.mrf.mxu0
      %v2950 = vpop.f32.mrf.mxu0
      %v2951 = vadd.f32 %v2703, %v2950
      %v2952 = vpop.f32.mrf.mxu0
      %2953 = vmatprep.mubr.bf16.mxu0 %v2631
      %2954 = vmatmul.mubr.bf16.gmra.mxu0 %v2630
      %v2955 = vpop.f32.mrf.mxu0
      %v2956 = vadd.f32 %v2703, %v2955
      %v2957 = vpop.f32.mrf.mxu0
      %v2958 = vpop.f32.mrf.mxu0
      %v2959 = vadd.f32 %v2703, %v2958
      %v2960 = vpop.f32.mrf.mxu0
      %2961 = vdwg.mxu0
      %2962 = vmatprep.subr.bf16.mxu0 0
      %2963 = vmatpush1.bf16.msra.mxu0 %v2856
      %2964 = vmatprep.subr.bf16.mxu0 0
      %2965 = vmatpush1.bf16.msra.mxu0 %v2855
      %2966 = vmatprep.subr.bf16.mxu0 0
      %2967 = vmatpush1.bf16.msra.mxu0 %v2854
      %2968 = vmatprep.subr.bf16.mxu0 0
      %2969 = vmatpush1.bf16.msra.mxu0 %v2853
      %2970 = vmatprep.subr.bf16.mxu0 0
      %2971 = vmatpush1.bf16.msra.mxu0 %v2852
      %2972 = vmatprep.subr.bf16.mxu0 0
      %2973 = vmatpush1.bf16.msra.mxu0 %v2851
      %2974 = vmatprep.subr.bf16.mxu0 0
      %2975 = vmatpush1.bf16.msra.mxu0 %v2850
      %2976 = vmatprep.subr.bf16.mxu0 0
      %2977 = vmatpush1.bf16.msra.mxu0 %v2849
      %2978 = vmatprep.subr.bf16.mxu0 0
      %2979 = vmatpush2.bf16.msra.mxu0 %v2864
      %2980 = vmatprep.subr.bf16.mxu0 0
      %2981 = vmatpush2.bf16.msra.mxu0 %v2863
      %2982 = vmatprep.subr.bf16.mxu0 0
      %2983 = vmatpush2.bf16.msra.mxu0 %v2862
      %2984 = vmatprep.subr.bf16.mxu0 0
      %2985 = vmatpush2.bf16.msra.mxu0 %v2861
      %2986 = vmatprep.subr.bf16.mxu0 0
      %2987 = vmatpush2.bf16.msra.mxu0 %v2860
      %2988 = vmatprep.subr.bf16.mxu0 0
      %2989 = vmatpush2.bf16.msra.mxu0 %v2859
      %2990 = vmatprep.subr.bf16.mxu0 0
      %2991 = vmatpush2.bf16.msra.mxu0 %v2858
      %2992 = vmatprep.subr.bf16.mxu0 0
      %2993 = vmatpush2.bf16.msra.mxu0 %v2857
      %2994 = vmatprep.mubr.bf16.mxu0 %v2621
      %2995 = vmatmul.mubr.bf16.gmra.mxu0 %v2620
      %v2996 = vpop.f32.mrf.mxu0
      %v2997 = vadd.f32 %v2932, %v2996
      %v2998 = vpop.f32.mrf.mxu0
      %v2999 = vpop.f32.mrf.mxu0
      %v3000 = vadd.f32 %v2935, %v2999
      %v3001 = vpop.f32.mrf.mxu0
      %3002 = vmatprep.mubr.bf16.mxu0 %v2625
      %3003 = vmatmul.mubr.bf16.gmra.mxu0 %v2624
      %v3004 = vpop.f32.mrf.mxu0
      %v3005 = vadd.f32 %v2940, %v3004
      %v3006 = vpop.f32.mrf.mxu0
      %v3007 = vpop.f32.mrf.mxu0
      %v3008 = vadd.f32 %v2943, %v3007
      %v3009 = vpop.f32.mrf.mxu0
      %3010 = vmatprep.mubr.bf16.mxu0 %v2629
      %3011 = vmatmul.mubr.bf16.gmra.mxu0 %v2628
      %v3012 = vpop.f32.mrf.mxu0
      %v3013 = vadd.f32 %v2948, %v3012
      %v3014 = vpop.f32.mrf.mxu0
      %v3015 = vpop.f32.mrf.mxu0
      %v3016 = vadd.f32 %v2951, %v3015
      %v3017 = vpop.f32.mrf.mxu0
      %3018 = vmatprep.mubr.bf16.mxu0 %v2633
      %3019 = vmatmul.mubr.bf16.gmra.mxu0 %v2632
      %v3020 = vpop.f32.mrf.mxu0
      %v3021 = vadd.f32 %v2956, %v3020
      %v3022 = vpop.f32.mrf.mxu0
      %v3023 = vpop.f32.mrf.mxu0
      %v3024 = vadd.f32 %v2959, %v3023
      %v3025 = vpop.f32.mrf.mxu0
      %3026 = vdwg.mxu0
      %v3027 = vld [vmem:[%s354] sm:$0xff]
      %v3028 = vld [vmem:[%s354 + $0x8] sm:$0xff]
      %v3029 = vld [vmem:[%s354 + $0x10] sm:$0xff]
      %v3030 = vld [vmem:[%s354 + $0x18] sm:$0xff]
      %v3031 = vld [vmem:[%s354 + $0x20] sm:$0xff]
      %v3032 = vld [vmem:[%s354 + $0x28] sm:$0xff]
      %v3033 = vld [vmem:[%s354 + $0x30] sm:$0xff]
      %v3034 = vld [vmem:[%s354 + $0x38] sm:$0xff]
      %v3035 = vld [vmem:[%s9] sm:$0x1]
      %v3037 = vlaneseq
      %v3038 = vshrl.u32 %v3037, 7
      %v3039 = vsub.s32 0, %v3038
      %v3040 = vrot.slane %v3035, %v3039
      %v3042 = vmul.f32 %v3040, %v2997
      %v3043 = vmul.f32 %v3040, %v3000
      %v3044 = vmul.f32 %v3040, %v3005
      %v3045 = vmul.f32 %v3040, %v3008
      %v3046 = vmul.f32 %v3040, %v3013
      %v3047 = vmul.f32 %v3040, %v3016
      %v3048 = vmul.f32 %v3040, %v3021
      %v3049 = vmul.f32 %v3040, %v3024
      %v3050 = vadd.f32 %v3027, %v3042
      %v3051 = vadd.f32 %v3028, %v3043
      %v3052 = vadd.f32 %v3029, %v3044
      %v3053 = vadd.f32 %v3030, %v3045
      %v3054 = vadd.f32 %v3031, %v3046
      %v3055 = vadd.f32 %v3032, %v3047
      %v3056 = vadd.f32 %v3033, %v3048
      %v3057 = vadd.f32 %v3034, %v3049
      %3058 = vst [vmem:[%s359] sm:$0xff] %v3050
      %3059 = vst [vmem:[%s359 + $0x8] sm:$0xff] %v3051
      %3060 = vst [vmem:[%s359 + $0x10] sm:$0xff] %v3052
      %3061 = vst [vmem:[%s359 + $0x18] sm:$0xff] %v3053
      %3062 = vst [vmem:[%s359 + $0x20] sm:$0xff] %v3054
      %3063 = vst [vmem:[%s359 + $0x28] sm:$0xff] %v3055
      %3064 = vst [vmem:[%s359 + $0x30] sm:$0xff] %v3056
      %3065 = vst [vmem:[%s359 + $0x38] sm:$0xff] %v3057
      %p3066 = scmp.lt.s32.totalorder %s21, 1
      %s3067 = scalar_select %p3066, %s21, 1
      %s3068 = smul.addr %s3067, 8
      %s3069 = smul.addr %s3068, 8
      %s3070 = scalar_lea.vmem %s10, %s3069
      // Predicated region
      $region61: #{convnext_forward.5} parent=59 // pred_check
        %p3071 = pneg %p254
      $region62: #{convnext_forward.5} parent=59 // pred_check_branch
        %3073 = sbr.rel (%p3071) target = $region64
      $region63: #{convnext_forward.5} parent=59 // pred_region
        _
      $region64: #{convnext_forward.5} parent=59 // pred_fallthru
        _
    $region60: #{convnext_forward.5} parent=5 // pred_fallthru
      _
    %p3074 = scmp.le.s32.totalorder 2, %s16
    // Predicated region
    $region65: #{convnext_forward.5} parent=5 // pred_check
      %p3075 = pneg %p3074
    $region66: #{convnext_forward.5} parent=5 // pred_check_branch
      %3077 = sbr.rel (%p3075) target = $region68
    $region67: #{convnext_forward.5} parent=5 // pred_region
      %s3078 = ssub.s32 %s16, 2
      // Predicated region
      $region69: #{convnext_forward.5} parent=67 // pred_check
        %p3079 = pneg %p260
      $region70: #{convnext_forward.5} parent=67 // pred_check_branch
        %3081 = sbr.rel (%p3079) target = $region72
      $region71: #{convnext_forward.5} parent=67 // pred_region
        %p3082 = scmp.lt.s32.totalorder %s22, 1
        %s3083 = scalar_select %p3082, %s22, 1
        %s3084 = smul.addr %s3083, 8
        %s3085 = smul.addr %s3084, 8
        %s3086 = scalar_lea.vmem %s10, %s3085
      $region72: #{convnext_forward.5} parent=67 // pred_fallthru
        _
    $region68: #{convnext_forward.5} parent=5 // pred_fallthru
      _
  $region6: #{convnext_forward.5} parent=0 // loop_footer
    %s20 = sadd.s32 1, %s16
  $region7: #{convnext_forward.5} parent=0 // loop_footer_branch
    %15 = sbr.rel target = $region3
  $region8: #{convnext_forward.5} parent=0 // loop_exit
    _

</llo_original>
